<compile_context>
chip_gen: v7x
topology: tpu7x:2x2x1
jax: 0.10.0
libtpu: 0.0.40
codegen_flags: <defaults>
</compile_context>

<pallas_src>
import functools

import jax
import jax.numpy as jnp
from jax import lax
from jax.experimental import pallas as pl
from jax.experimental.pallas import tpu as pltpu


def _srcnn_fused_kernel(x_ref, w1_ref, b1_ref, w2_ref, b2_ref,
                        w3_ref, b3_ref, mask_ref, o_ref,
                        act1_ref, act2_ref, p_ref,
                        *, H, W, Cin, C1, Cout, K1, K2, K3, PAD):
    """Fused SRCNN forward for one batch element.

    x_ref    : (1, Cin, LB)              pre-padded, flattened strided input
    w*_ref   : (Cout_l, K_l*K_l*Cin_l)   weights, columns ordered (kh, kw, cin)
    b*_ref   : (Cout_l, 1)
    mask_ref : (1, H*WB) f32             1.0 on image columns, 0.0 on pad cols
    o_ref    : (1, Cout, H*WB)           lane-dense strided output slab
    act*_ref : (C1, LB) f32 VMEM         zero-bordered strided activations
    p_ref    : (Kmax, H*WB) f32 VMEM     shared im2col patch matrix
    """
    WB = W + 2 * PAD            # shared row stride of every padded activation
    HWB = H * WB                # lane width of every activation / output slab
    OFF = PAD * WB + PAD        # flat offset of pixel (0, 0) inside a buffer

    # Zero the activation buffers: their borders implement 'same' padding for
    # the conv that reads them (interiors are fully overwritten below).
    act1_ref[...] = jnp.zeros_like(act1_ref)
    act2_ref[...] = jnp.zeros_like(act2_ref)

    mask = mask_ref[...]                                # (1, HWB)

    def im2col(read, KS, cin):
        """Build the (KS*KS*cin, HWB) patch matrix into p_ref.

        Because activations are stored flat with row stride WB, every tap is a
        contiguous lane slice of the source (a lane shift, no window reshape).
        """
        q = PAD - KS // 2
        for kh in range(KS):
            for kw in range(KS):
                r = (kh * KS + kw) * cin
                s = (q + kh) * WB + (q + kw)
                p_ref[r:r + cin, :] = read(s)
        return p_ref[0:KS * KS * cin, :]

    # --- conv1 (9x9, Cin -> C1) + ReLU: taps read the pre-padded input ------
    patches = im2col(lambda s: x_ref[0, :, s:s + HWB], K1, Cin)
    y = jnp.dot(w1_ref[...], patches, preferred_element_type=jnp.float32)
    y = jnp.maximum(y + b1_ref[...], 0.0) * mask        # zero the pad columns
    act1_ref[:, OFF:OFF + HWB] = y

    # --- conv2 (5x5, C1 -> C1) + ReLU ---------------------------------------
    patches = im2col(lambda s: act1_ref[:, s:s + HWB], K2, C1)
    y = jnp.dot(w2_ref[...], patches, preferred_element_type=jnp.float32)
    y = jnp.maximum(y + b2_ref[...], 0.0) * mask
    act2_ref[:, OFF:OFF + HWB] = y

    # --- conv3 (5x5, C1 -> Cout), no ReLU; lane-dense output store ----------
    patches = im2col(lambda s: act2_ref[:, s:s + HWB], K3, C1)
    y = jnp.dot(w3_ref[...], patches, preferred_element_type=jnp.float32)
    y = y + b3_ref[...]                   # pad columns sliced off in wrapper
    o_ref[...] = y.reshape(1, Cout, HWB).astype(o_ref.dtype)


def _wmat(w_hwio):
    """(KH, KW, Cin, Cout) -> (Cout, KH*KW*Cin), columns ordered (kh, kw, cin)."""
    KH, KW, ci, co = w_hwio.shape
    return jnp.transpose(w_hwio, (3, 0, 1, 2)).reshape(co, KH * KW * ci)


def srcnn_forward(x_nchw, params):
    """SRCNN forward. x_nchw: (N, C, H, W), like the PyTorch module."""
    N, Cin, H, W = x_nchw.shape
    w1, b1 = params["w1"], params["b1"]   # weights stored HWIO
    w2, b2 = params["w2"], params["b2"]
    w3, b3 = params["w3"], params["b3"]
    K1, K2, K3 = w1.shape[0], w2.shape[0], w3.shape[0]
    C1, Cout = w1.shape[3], w3.shape[3]

    PAD = max(K1, K2, K3) // 2            # universal halo (conv1's 4)
    WB = W + 2 * PAD                      # shared padded row stride
    HWB = H * WB
    LB = (H + 2 * PAD + 1) * WB           # +1 row so the widest tap slice is in-bounds
    Kmax = max(K1 * K1 * Cin, K2 * K2 * C1, K3 * K3 * C1)

    # Pre-pad the input once into the zero-bordered strided layout and flatten
    # the (row, col) axes (layout plumbing only; done in HBM by XLA).
    x_pad = jnp.pad(x_nchw.astype(jnp.float32),
                    ((0, 0), (0, 0), (PAD, PAD + 1), (PAD, PAD)))
    x_flat = x_pad.reshape(N, Cin, LB)

    w1m, w2m, w3m = _wmat(w1), _wmat(w2), _wmat(w3)
    b1c = b1.reshape(C1, 1)
    b2c = b2.reshape(C1, 1)
    b3c = b3.reshape(Cout, 1)

    # 1.0 on real image columns, 0.0 on the per-row padding columns.
    col = jnp.arange(HWB, dtype=jnp.int32) % WB
    mask = (col < W).astype(jnp.float32).reshape(1, HWB)

    kernel = functools.partial(_srcnn_fused_kernel, H=H, W=W, Cin=Cin, C1=C1,
                               Cout=Cout, K1=K1, K2=K2, K3=K3, PAD=PAD)

    out_flat = pl.pallas_call(
        kernel,
        out_shape=jax.ShapeDtypeStruct((N, Cout, HWB), jnp.float32),
        grid_spec=pltpu.PrefetchScalarGridSpec(
            num_scalar_prefetch=0,
            grid=(N,),
            in_specs=[
                pl.BlockSpec((1, Cin, LB), lambda n: (n, 0, 0)),
                pl.BlockSpec((C1, K1 * K1 * Cin), lambda n: (0, 0)),
                pl.BlockSpec((C1, 1), lambda n: (0, 0)),
                pl.BlockSpec((C1, K2 * K2 * C1), lambda n: (0, 0)),
                pl.BlockSpec((C1, 1), lambda n: (0, 0)),
                pl.BlockSpec((Cout, K3 * K3 * C1), lambda n: (0, 0)),
                pl.BlockSpec((Cout, 1), lambda n: (0, 0)),
                pl.BlockSpec((1, HWB), lambda n: (0, 0)),
            ],
            out_specs=pl.BlockSpec((1, Cout, HWB), lambda n: (n, 0, 0)),
            scratch_shapes=[
                pltpu.VMEM((C1, LB), jnp.float32),     # padded conv1 output
                pltpu.VMEM((C1, LB), jnp.float32),     # padded conv2 output
                pltpu.VMEM((Kmax, HWB), jnp.float32),  # shared im2col matrix
            ],
        ),
        compiler_params=pltpu.CompilerParams(
            dimension_semantics=("parallel",)),
    )(x_flat, w1m, b1c, w2m, b2c, w3m, b3c, mask)

    # Strip the per-row padding columns: (N, Cout, H*WB) -> (N, Cout, H, W).
    out = out_flat.reshape(N, Cout, H, WB)[:, :, :, :W]
    return out.astype(x_nchw.dtype)


def init_params(key, num_channels=1, inner_channel=8, dtype=jnp.float32):
    """PyTorch Conv2d default init: U(-1/sqrt(fan_in), 1/sqrt(fan_in))."""
    ks = jax.random.split(key, 6)

    def uinit(k, shape, fan_in):
        bound = 1.0 / jnp.sqrt(fan_in)
        return jax.random.uniform(k, shape, dtype, -bound, bound)

    # Weights stored as HWIO.
    w1 = uinit(ks[0], (9, 9, num_channels, inner_channel), num_channels * 81)
    b1 = uinit(ks[1], (inner_channel,), num_channels * 81)
    w2 = uinit(ks[2], (5, 5, inner_channel, inner_channel), inner_channel * 25)
    b2 = uinit(ks[3], (inner_channel,), inner_channel * 25)
    w3 = uinit(ks[4], (5, 5, inner_channel, num_channels), inner_channel * 25)
    b3 = uinit(ks[5], (num_channels,), inner_channel * 25)
    return dict(w1=w1, b1=b1, w2=w2, b2=b2, w3=w3, b3=b3)


def _ref_forward(x_nchw, params):
    """Pure-JAX reference (XLA conv) for correctness checking."""
    def conv(x, w, b, relu):
        y = lax.conv_general_dilated(
            x, w, window_strides=(1, 1), padding="SAME",
            dimension_numbers=("NCHW", "HWIO", "NCHW"))
        y = y + b.reshape(1, -1, 1, 1)
        return jnp.maximum(y, 0.0) if relu else y

    x = conv(x_nchw, params["w1"], params["b1"], True)
    x = conv(x, params["w2"], params["b2"], True)
    x = conv(x, params["w3"], params["b3"], False)
    return x


if __name__ == "__main__":
    key = jax.random.PRNGKey(0)
    k_x, k_p = jax.random.split(key)

    N, C, H, W = 2, 1, 16, 16           # num_channels = 1 (module default)
    inner_channel = 8                    # FLAGS.inner_channel

    x = jax.random.normal(k_x, (N, C, H, W), jnp.float32)
    params = init_params(k_p, num_channels=C, inner_channel=inner_channel)

    fwd = jax.jit(srcnn_forward)
    out = jax.block_until_ready(fwd(x, params))
    assert out.shape == (N, C, H, W)

    ref = jax.block_until_ready(_ref_forward(x, params))
    assert jnp.allclose(out, ref, atol=1e-4, rtol=1e-4), "mismatch vs XLA conv"

    print("KERNEL_OK")
</pallas_src>

<mosaic_0001>
module attributes {stable_mosaic.version = 11 : i64} {
  func.func @_srcnn_fused_kernel(%arg0: i32, %arg1: memref<1x1x600xf32, #tpu.memory_space<vmem>>, %arg2: memref<8x81xf32, #tpu.memory_space<vmem>>, %arg3: memref<8x1xf32, #tpu.memory_space<vmem>>, %arg4: memref<8x200xf32, #tpu.memory_space<vmem>>, %arg5: memref<8x1xf32, #tpu.memory_space<vmem>>, %arg6: memref<1x200xf32, #tpu.memory_space<vmem>>, %arg7: memref<1x1xf32, #tpu.memory_space<vmem>>, %arg8: memref<1x384xf32, #tpu.memory_space<vmem>>, %arg9: memref<1x1x384xf32, #tpu.memory_space<vmem>>, %arg10: memref<8x600xf32, #tpu.memory_space<vmem>>, %arg11: memref<8x600xf32, #tpu.memory_space<vmem>>, %arg12: memref<200x384xf32, #tpu.memory_space<vmem>>) attributes {dimension_semantics = [#tpu.dimension_semantics<parallel>], iteration_bounds = array<i64: 2>, scalar_prefetch = 0 : i64, scratch_operands = 3 : i64, tpu.core_type = #tpu.core_type<tc>, window_params = [{transform_indices = @transform_0, window_bounds = array<i64: 1, 1, 600>}, {pipeline_mode = #tpu.pipeline_mode<synchronous>, transform_indices = @transform_1, window_bounds = array<i64: 8, 81>}, {pipeline_mode = #tpu.pipeline_mode<synchronous>, transform_indices = @transform_2, window_bounds = array<i64: 8, 1>}, {pipeline_mode = #tpu.pipeline_mode<synchronous>, transform_indices = @transform_3, window_bounds = array<i64: 8, 200>}, {pipeline_mode = #tpu.pipeline_mode<synchronous>, transform_indices = @transform_4, window_bounds = array<i64: 8, 1>}, {pipeline_mode = #tpu.pipeline_mode<synchronous>, transform_indices = @transform_5, window_bounds = array<i64: 1, 200>}, {pipeline_mode = #tpu.pipeline_mode<synchronous>, transform_indices = @transform_6, window_bounds = array<i64: 1, 1>}, {pipeline_mode = #tpu.pipeline_mode<synchronous>, transform_indices = @transform_7, window_bounds = array<i64: 1, 384>}, {transform_indices = @transform_8, window_bounds = array<i64: 1, 1, 384>}]} {
    %cst = arith.constant 0.000000e+00 : f32
    %0 = vector.broadcast %cst : f32 to vector<8x600xf32>
    %c0 = arith.constant 0 : index
    %c0_0 = arith.constant 0 : index
    %1 = vector.load %arg10[%c0, %c0_0] : memref<8x600xf32, #tpu.memory_space<vmem>>, vector<8x600xf32>
    tpu.vector_store %arg10[%c0, %c0_0], %0 {strides = array<i32>} : memref<8x600xf32, #tpu.memory_space<vmem>>, vector<8x600xf32>,
    %cst_1 = arith.constant 0.000000e+00 : f32
    %2 = vector.broadcast %cst_1 : f32 to vector<8x600xf32>
    %c0_2 = arith.constant 0 : index
    %c0_3 = arith.constant 0 : index
    %3 = vector.load %arg11[%c0_2, %c0_3] : memref<8x600xf32, #tpu.memory_space<vmem>>, vector<8x600xf32>
    tpu.vector_store %arg11[%c0_2, %c0_3], %2 {strides = array<i32>} : memref<8x600xf32, #tpu.memory_space<vmem>>, vector<8x600xf32>,
    %c0_4 = arith.constant 0 : index
    %c0_5 = arith.constant 0 : index
    %4 = vector.load %arg8[%c0_4, %c0_5] : memref<1x384xf32, #tpu.memory_space<vmem>>, vector<1x384xf32>
    %c0_6 = arith.constant 0 : index
    %c0_7 = arith.constant 0 : index
    %c0_8 = arith.constant 0 : index
    %5 = vector.load %arg1[%c0_6, %c0_7, %c0_8] : memref<1x1x600xf32, #tpu.memory_space<vmem>>, vector<1x1x384xf32>
    %6 = vector.shape_cast %5 : vector<1x1x384xf32> to vector<1x384xf32>
    %c0_9 = arith.constant 0 : index
    %c0_10 = arith.constant 0 : index
    %7 = vector.load %arg12[%c0_9, %c0_10] : memref<200x384xf32, #tpu.memory_space<vmem>>, vector<1x384xf32>
    tpu.vector_store %arg12[%c0_9, %c0_10], %6 {strides = array<i32>} : memref<200x384xf32, #tpu.memory_space<vmem>>, vector<1x384xf32>,
    %c0_11 = arith.constant 0 : index
    %c0_12 = arith.constant 0 : index
    %c1 = arith.constant 1 : index
    %8 = vector.load %arg1[%c0_11, %c0_12, %c1] : memref<1x1x600xf32, #tpu.memory_space<vmem>>, vector<1x1x384xf32>
    %9 = vector.shape_cast %8 : vector<1x1x384xf32> to vector<1x384xf32>
    %c1_13 = arith.constant 1 : index
    %c0_14 = arith.constant 0 : index
    %10 = vector.load %arg12[%c1_13, %c0_14] : memref<200x384xf32, #tpu.memory_space<vmem>>, vector<1x384xf32>
    tpu.vector_store %arg12[%c1_13, %c0_14], %9 {strides = array<i32>} : memref<200x384xf32, #tpu.memory_space<vmem>>, vector<1x384xf32>,
    %c0_15 = arith.constant 0 : index
    %c0_16 = arith.constant 0 : index
    %c2 = arith.constant 2 : index
    %11 = vector.load %arg1[%c0_15, %c0_16, %c2] : memref<1x1x600xf32, #tpu.memory_space<vmem>>, vector<1x1x384xf32>
    %12 = vector.shape_cast %11 : vector<1x1x384xf32> to vector<1x384xf32>
    %c2_17 = arith.constant 2 : index
    %c0_18 = arith.constant 0 : index
    %13 = vector.load %arg12[%c2_17, %c0_18] : memref<200x384xf32, #tpu.memory_space<vmem>>, vector<1x384xf32>
    tpu.vector_store %arg12[%c2_17, %c0_18], %12 {strides = array<i32>} : memref<200x384xf32, #tpu.memory_space<vmem>>, vector<1x384xf32>,
    %c0_19 = arith.constant 0 : index
    %c0_20 = arith.constant 0 : index
    %c3 = arith.constant 3 : index
    %14 = vector.load %arg1[%c0_19, %c0_20, %c3] : memref<1x1x600xf32, #tpu.memory_space<vmem>>, vector<1x1x384xf32>
    %15 = vector.shape_cast %14 : vector<1x1x384xf32> to vector<1x384xf32>
    %c3_21 = arith.constant 3 : index
    %c0_22 = arith.constant 0 : index
    %16 = vector.load %arg12[%c3_21, %c0_22] : memref<200x384xf32, #tpu.memory_space<vmem>>, vector<1x384xf32>
    tpu.vector_store %arg12[%c3_21, %c0_22], %15 {strides = array<i32>} : memref<200x384xf32, #tpu.memory_space<vmem>>, vector<1x384xf32>,
    %c0_23 = arith.constant 0 : index
    %c0_24 = arith.constant 0 : index
    %c4 = arith.constant 4 : index
    %17 = vector.load %arg1[%c0_23, %c0_24, %c4] : memref<1x1x600xf32, #tpu.memory_space<vmem>>, vector<1x1x384xf32>
    %18 = vector.shape_cast %17 : vector<1x1x384xf32> to vector<1x384xf32>
    %c4_25 = arith.constant 4 : index
    %c0_26 = arith.constant 0 : index
    %19 = vector.load %arg12[%c4_25, %c0_26] : memref<200x384xf32, #tpu.memory_space<vmem>>, vector<1x384xf32>
    tpu.vector_store %arg12[%c4_25, %c0_26], %18 {strides = array<i32>} : memref<200x384xf32, #tpu.memory_space<vmem>>, vector<1x384xf32>,
    %c0_27 = arith.constant 0 : index
    %c0_28 = arith.constant 0 : index
    %c5 = arith.constant 5 : index
    %20 = vector.load %arg1[%c0_27, %c0_28, %c5] : memref<1x1x600xf32, #tpu.memory_space<vmem>>, vector<1x1x384xf32>
    %21 = vector.shape_cast %20 : vector<1x1x384xf32> to vector<1x384xf32>
    %c5_29 = arith.constant 5 : index
    %c0_30 = arith.constant 0 : index
    %22 = vector.load %arg12[%c5_29, %c0_30] : memref<200x384xf32, #tpu.memory_space<vmem>>, vector<1x384xf32>
    tpu.vector_store %arg12[%c5_29, %c0_30], %21 {strides = array<i32>} : memref<200x384xf32, #tpu.memory_space<vmem>>, vector<1x384xf32>,
    %c0_31 = arith.constant 0 : index
    %c0_32 = arith.constant 0 : index
    %c6 = arith.constant 6 : index
    %23 = vector.load %arg1[%c0_31, %c0_32, %c6] : memref<1x1x600xf32, #tpu.memory_space<vmem>>, vector<1x1x384xf32>
    %24 = vector.shape_cast %23 : vector<1x1x384xf32> to vector<1x384xf32>
    %c6_33 = arith.constant 6 : index
    %c0_34 = arith.constant 0 : index
    %25 = vector.load %arg12[%c6_33, %c0_34] : memref<200x384xf32, #tpu.memory_space<vmem>>, vector<1x384xf32>
    tpu.vector_store %arg12[%c6_33, %c0_34], %24 {strides = array<i32>} : memref<200x384xf32, #tpu.memory_space<vmem>>, vector<1x384xf32>,
    %c0_35 = arith.constant 0 : index
    %c0_36 = arith.constant 0 : index
    %c7 = arith.constant 7 : index
    %26 = vector.load %arg1[%c0_35, %c0_36, %c7] : memref<1x1x600xf32, #tpu.memory_space<vmem>>, vector<1x1x384xf32>
    %27 = vector.shape_cast %26 : vector<1x1x384xf32> to vector<1x384xf32>
    %c7_37 = arith.constant 7 : index
    %c0_38 = arith.constant 0 : index
    %28 = vector.load %arg12[%c7_37, %c0_38] : memref<200x384xf32, #tpu.memory_space<vmem>>, vector<1x384xf32>
    tpu.vector_store %arg12[%c7_37, %c0_38], %27 {strides = array<i32>} : memref<200x384xf32, #tpu.memory_space<vmem>>, vector<1x384xf32>,
    %c0_39 = arith.constant 0 : index
    %c0_40 = arith.constant 0 : index
    %c8 = arith.constant 8 : index
    %29 = vector.load %arg1[%c0_39, %c0_40, %c8] : memref<1x1x600xf32, #tpu.memory_space<vmem>>, vector<1x1x384xf32>
    %30 = vector.shape_cast %29 : vector<1x1x384xf32> to vector<1x384xf32>
    %c8_41 = arith.constant 8 : index
    %c0_42 = arith.constant 0 : index
    %31 = vector.load %arg12[%c8_41, %c0_42] : memref<200x384xf32, #tpu.memory_space<vmem>>, vector<1x384xf32>
    tpu.vector_store %arg12[%c8_41, %c0_42], %30 {strides = array<i32>} : memref<200x384xf32, #tpu.memory_space<vmem>>, vector<1x384xf32>,
    %c0_43 = arith.constant 0 : index
    %c0_44 = arith.constant 0 : index
    %c24 = arith.constant 24 : index
    %32 = vector.load %arg1[%c0_43, %c0_44, %c24] : memref<1x1x600xf32, #tpu.memory_space<vmem>>, vector<1x1x384xf32>
    %33 = vector.shape_cast %32 : vector<1x1x384xf32> to vector<1x384xf32>
    %c9 = arith.constant 9 : index
    %c0_45 = arith.constant 0 : index
    %34 = vector.load %arg12[%c9, %c0_45] : memref<200x384xf32, #tpu.memory_space<vmem>>, vector<1x384xf32>
    tpu.vector_store %arg12[%c9, %c0_45], %33 {strides = array<i32>} : memref<200x384xf32, #tpu.memory_space<vmem>>, vector<1x384xf32>,
    %c0_46 = arith.constant 0 : index
    %c0_47 = arith.constant 0 : index
    %c25 = arith.constant 25 : index
    %35 = vector.load %arg1[%c0_46, %c0_47, %c25] : memref<1x1x600xf32, #tpu.memory_space<vmem>>, vector<1x1x384xf32>
    %36 = vector.shape_cast %35 : vector<1x1x384xf32> to vector<1x384xf32>
    %c10 = arith.constant 10 : index
    %c0_48 = arith.constant 0 : index
    %37 = vector.load %arg12[%c10, %c0_48] : memref<200x384xf32, #tpu.memory_space<vmem>>, vector<1x384xf32>
    tpu.vector_store %arg12[%c10, %c0_48], %36 {strides = array<i32>} : memref<200x384xf32, #tpu.memory_space<vmem>>, vector<1x384xf32>,
    %c0_49 = arith.constant 0 : index
    %c0_50 = arith.constant 0 : index
    %c26 = arith.constant 26 : index
    %38 = vector.load %arg1[%c0_49, %c0_50, %c26] : memref<1x1x600xf32, #tpu.memory_space<vmem>>, vector<1x1x384xf32>
    %39 = vector.shape_cast %38 : vector<1x1x384xf32> to vector<1x384xf32>
    %c11 = arith.constant 11 : index
    %c0_51 = arith.constant 0 : index
    %40 = vector.load %arg12[%c11, %c0_51] : memref<200x384xf32, #tpu.memory_space<vmem>>, vector<1x384xf32>
    tpu.vector_store %arg12[%c11, %c0_51], %39 {strides = array<i32>} : memref<200x384xf32, #tpu.memory_space<vmem>>, vector<1x384xf32>,
    %c0_52 = arith.constant 0 : index
    %c0_53 = arith.constant 0 : index
    %c27 = arith.constant 27 : index
    %41 = vector.load %arg1[%c0_52, %c0_53, %c27] : memref<1x1x600xf32, #tpu.memory_space<vmem>>, vector<1x1x384xf32>
    %42 = vector.shape_cast %41 : vector<1x1x384xf32> to vector<1x384xf32>
    %c12 = arith.constant 12 : index
    %c0_54 = arith.constant 0 : index
    %43 = vector.load %arg12[%c12, %c0_54] : memref<200x384xf32, #tpu.memory_space<vmem>>, vector<1x384xf32>
    tpu.vector_store %arg12[%c12, %c0_54], %42 {strides = array<i32>} : memref<200x384xf32, #tpu.memory_space<vmem>>, vector<1x384xf32>,
    %c0_55 = arith.constant 0 : index
    %c0_56 = arith.constant 0 : index
    %c28 = arith.constant 28 : index
    %44 = vector.load %arg1[%c0_55, %c0_56, %c28] : memref<1x1x600xf32, #tpu.memory_space<vmem>>, vector<1x1x384xf32>
    %45 = vector.shape_cast %44 : vector<1x1x384xf32> to vector<1x384xf32>
    %c13 = arith.constant 13 : index
    %c0_57 = arith.constant 0 : index
    %46 = vector.load %arg12[%c13, %c0_57] : memref<200x384xf32, #tpu.memory_space<vmem>>, vector<1x384xf32>
    tpu.vector_store %arg12[%c13, %c0_57], %45 {strides = array<i32>} : memref<200x384xf32, #tpu.memory_space<vmem>>, vector<1x384xf32>,
    %c0_58 = arith.constant 0 : index
    %c0_59 = arith.constant 0 : index
    %c29 = arith.constant 29 : index
    %47 = vector.load %arg1[%c0_58, %c0_59, %c29] : memref<1x1x600xf32, #tpu.memory_space<vmem>>, vector<1x1x384xf32>
    %48 = vector.shape_cast %47 : vector<1x1x384xf32> to vector<1x384xf32>
    %c14 = arith.constant 14 : index
    %c0_60 = arith.constant 0 : index
    %49 = vector.load %arg12[%c14, %c0_60] : memref<200x384xf32, #tpu.memory_space<vmem>>, vector<1x384xf32>
    tpu.vector_store %arg12[%c14, %c0_60], %48 {strides = array<i32>} : memref<200x384xf32, #tpu.memory_space<vmem>>, vector<1x384xf32>,
    %c0_61 = arith.constant 0 : index
    %c0_62 = arith.constant 0 : index
    %c30 = arith.constant 30 : index
    %50 = vector.load %arg1[%c0_61, %c0_62, %c30] : memref<1x1x600xf32, #tpu.memory_space<vmem>>, vector<1x1x384xf32>
    %51 = vector.shape_cast %50 : vector<1x1x384xf32> to vector<1x384xf32>
    %c15 = arith.constant 15 : index
    %c0_63 = arith.constant 0 : index
    %52 = vector.load %arg12[%c15, %c0_63] : memref<200x384xf32, #tpu.memory_space<vmem>>, vector<1x384xf32>
    tpu.vector_store %arg12[%c15, %c0_63], %51 {strides = array<i32>} : memref<200x384xf32, #tpu.memory_space<vmem>>, vector<1x384xf32>,
    %c0_64 = arith.constant 0 : index
    %c0_65 = arith.constant 0 : index
    %c31 = arith.constant 31 : index
    %53 = vector.load %arg1[%c0_64, %c0_65, %c31] : memref<1x1x600xf32, #tpu.memory_space<vmem>>, vector<1x1x384xf32>
    %54 = vector.shape_cast %53 : vector<1x1x384xf32> to vector<1x384xf32>
    %c16 = arith.constant 16 : index
    %c0_66 = arith.constant 0 : index
    %55 = vector.load %arg12[%c16, %c0_66] : memref<200x384xf32, #tpu.memory_space<vmem>>, vector<1x384xf32>
    tpu.vector_store %arg12[%c16, %c0_66], %54 {strides = array<i32>} : memref<200x384xf32, #tpu.memory_space<vmem>>, vector<1x384xf32>,
    %c0_67 = arith.constant 0 : index
    %c0_68 = arith.constant 0 : index
    %c32 = arith.constant 32 : index
    %56 = vector.load %arg1[%c0_67, %c0_68, %c32] : memref<1x1x600xf32, #tpu.memory_space<vmem>>, vector<1x1x384xf32>
    %57 = vector.shape_cast %56 : vector<1x1x384xf32> to vector<1x384xf32>
    %c17 = arith.constant 17 : index
    %c0_69 = arith.constant 0 : index
    %58 = vector.load %arg12[%c17, %c0_69] : memref<200x384xf32, #tpu.memory_space<vmem>>, vector<1x384xf32>
    tpu.vector_store %arg12[%c17, %c0_69], %57 {strides = array<i32>} : memref<200x384xf32, #tpu.memory_space<vmem>>, vector<1x384xf32>,
    %c0_70 = arith.constant 0 : index
    %c0_71 = arith.constant 0 : index
    %c48 = arith.constant 48 : index
    %59 = vector.load %arg1[%c0_70, %c0_71, %c48] : memref<1x1x600xf32, #tpu.memory_space<vmem>>, vector<1x1x384xf32>
    %60 = vector.shape_cast %59 : vector<1x1x384xf32> to vector<1x384xf32>
    %c18 = arith.constant 18 : index
    %c0_72 = arith.constant 0 : index
    %61 = vector.load %arg12[%c18, %c0_72] : memref<200x384xf32, #tpu.memory_space<vmem>>, vector<1x384xf32>
    tpu.vector_store %arg12[%c18, %c0_72], %60 {strides = array<i32>} : memref<200x384xf32, #tpu.memory_space<vmem>>, vector<1x384xf32>,
    %c0_73 = arith.constant 0 : index
    %c0_74 = arith.constant 0 : index
    %c49 = arith.constant 49 : index
    %62 = vector.load %arg1[%c0_73, %c0_74, %c49] : memref<1x1x600xf32, #tpu.memory_space<vmem>>, vector<1x1x384xf32>
    %63 = vector.shape_cast %62 : vector<1x1x384xf32> to vector<1x384xf32>
    %c19 = arith.constant 19 : index
    %c0_75 = arith.constant 0 : index
    %64 = vector.load %arg12[%c19, %c0_75] : memref<200x384xf32, #tpu.memory_space<vmem>>, vector<1x384xf32>
    tpu.vector_store %arg12[%c19, %c0_75], %63 {strides = array<i32>} : memref<200x384xf32, #tpu.memory_space<vmem>>, vector<1x384xf32>,
    %c0_76 = arith.constant 0 : index
    %c0_77 = arith.constant 0 : index
    %c50 = arith.constant 50 : index
    %65 = vector.load %arg1[%c0_76, %c0_77, %c50] : memref<1x1x600xf32, #tpu.memory_space<vmem>>, vector<1x1x384xf32>
    %66 = vector.shape_cast %65 : vector<1x1x384xf32> to vector<1x384xf32>
    %c20 = arith.constant 20 : index
    %c0_78 = arith.constant 0 : index
    %67 = vector.load %arg12[%c20, %c0_78] : memref<200x384xf32, #tpu.memory_space<vmem>>, vector<1x384xf32>
    tpu.vector_store %arg12[%c20, %c0_78], %66 {strides = array<i32>} : memref<200x384xf32, #tpu.memory_space<vmem>>, vector<1x384xf32>,
    %c0_79 = arith.constant 0 : index
    %c0_80 = arith.constant 0 : index
    %c51 = arith.constant 51 : index
    %68 = vector.load %arg1[%c0_79, %c0_80, %c51] : memref<1x1x600xf32, #tpu.memory_space<vmem>>, vector<1x1x384xf32>
    %69 = vector.shape_cast %68 : vector<1x1x384xf32> to vector<1x384xf32>
    %c21 = arith.constant 21 : index
    %c0_81 = arith.constant 0 : index
    %70 = vector.load %arg12[%c21, %c0_81] : memref<200x384xf32, #tpu.memory_space<vmem>>, vector<1x384xf32>
    tpu.vector_store %arg12[%c21, %c0_81], %69 {strides = array<i32>} : memref<200x384xf32, #tpu.memory_space<vmem>>, vector<1x384xf32>,
    %c0_82 = arith.constant 0 : index
    %c0_83 = arith.constant 0 : index
    %c52 = arith.constant 52 : index
    %71 = vector.load %arg1[%c0_82, %c0_83, %c52] : memref<1x1x600xf32, #tpu.memory_space<vmem>>, vector<1x1x384xf32>
    %72 = vector.shape_cast %71 : vector<1x1x384xf32> to vector<1x384xf32>
    %c22 = arith.constant 22 : index
    %c0_84 = arith.constant 0 : index
    %73 = vector.load %arg12[%c22, %c0_84] : memref<200x384xf32, #tpu.memory_space<vmem>>, vector<1x384xf32>
    tpu.vector_store %arg12[%c22, %c0_84], %72 {strides = array<i32>} : memref<200x384xf32, #tpu.memory_space<vmem>>, vector<1x384xf32>,
    %c0_85 = arith.constant 0 : index
    %c0_86 = arith.constant 0 : index
    %c53 = arith.constant 53 : index
    %74 = vector.load %arg1[%c0_85, %c0_86, %c53] : memref<1x1x600xf32, #tpu.memory_space<vmem>>, vector<1x1x384xf32>
    %75 = vector.shape_cast %74 : vector<1x1x384xf32> to vector<1x384xf32>
    %c23 = arith.constant 23 : index
    %c0_87 = arith.constant 0 : index
    %76 = vector.load %arg12[%c23, %c0_87] : memref<200x384xf32, #tpu.memory_space<vmem>>, vector<1x384xf32>
    tpu.vector_store %arg12[%c23, %c0_87], %75 {strides = array<i32>} : memref<200x384xf32, #tpu.memory_space<vmem>>, vector<1x384xf32>,
    %c0_88 = arith.constant 0 : index
    %c0_89 = arith.constant 0 : index
    %c54 = arith.constant 54 : index
    %77 = vector.load %arg1[%c0_88, %c0_89, %c54] : memref<1x1x600xf32, #tpu.memory_space<vmem>>, vector<1x1x384xf32>
    %78 = vector.shape_cast %77 : vector<1x1x384xf32> to vector<1x384xf32>
    %c24_90 = arith.constant 24 : index
    %c0_91 = arith.constant 0 : index
    %79 = vector.load %arg12[%c24_90, %c0_91] : memref<200x384xf32, #tpu.memory_space<vmem>>, vector<1x384xf32>
    tpu.vector_store %arg12[%c24_90, %c0_91], %78 {strides = array<i32>} : memref<200x384xf32, #tpu.memory_space<vmem>>, vector<1x384xf32>,
    %c0_92 = arith.constant 0 : index
    %c0_93 = arith.constant 0 : index
    %c55 = arith.constant 55 : index
    %80 = vector.load %arg1[%c0_92, %c0_93, %c55] : memref<1x1x600xf32, #tpu.memory_space<vmem>>, vector<1x1x384xf32>
    %81 = vector.shape_cast %80 : vector<1x1x384xf32> to vector<1x384xf32>
    %c25_94 = arith.constant 25 : index
    %c0_95 = arith.constant 0 : index
    %82 = vector.load %arg12[%c25_94, %c0_95] : memref<200x384xf32, #tpu.memory_space<vmem>>, vector<1x384xf32>
    tpu.vector_store %arg12[%c25_94, %c0_95], %81 {strides = array<i32>} : memref<200x384xf32, #tpu.memory_space<vmem>>, vector<1x384xf32>,
    %c0_96 = arith.constant 0 : index
    %c0_97 = arith.constant 0 : index
    %c56 = arith.constant 56 : index
    %83 = vector.load %arg1[%c0_96, %c0_97, %c56] : memref<1x1x600xf32, #tpu.memory_space<vmem>>, vector<1x1x384xf32>
    %84 = vector.shape_cast %83 : vector<1x1x384xf32> to vector<1x384xf32>
    %c26_98 = arith.constant 26 : index
    %c0_99 = arith.constant 0 : index
    %85 = vector.load %arg12[%c26_98, %c0_99] : memref<200x384xf32, #tpu.memory_space<vmem>>, vector<1x384xf32>
    tpu.vector_store %arg12[%c26_98, %c0_99], %84 {strides = array<i32>} : memref<200x384xf32, #tpu.memory_space<vmem>>, vector<1x384xf32>,
    %c0_100 = arith.constant 0 : index
    %c0_101 = arith.constant 0 : index
    %c72 = arith.constant 72 : index
    %86 = vector.load %arg1[%c0_100, %c0_101, %c72] : memref<1x1x600xf32, #tpu.memory_space<vmem>>, vector<1x1x384xf32>
    %87 = vector.shape_cast %86 : vector<1x1x384xf32> to vector<1x384xf32>
    %c27_102 = arith.constant 27 : index
    %c0_103 = arith.constant 0 : index
    %88 = vector.load %arg12[%c27_102, %c0_103] : memref<200x384xf32, #tpu.memory_space<vmem>>, vector<1x384xf32>
    tpu.vector_store %arg12[%c27_102, %c0_103], %87 {strides = array<i32>} : memref<200x384xf32, #tpu.memory_space<vmem>>, vector<1x384xf32>,
    %c0_104 = arith.constant 0 : index
    %c0_105 = arith.constant 0 : index
    %c73 = arith.constant 73 : index
    %89 = vector.load %arg1[%c0_104, %c0_105, %c73] : memref<1x1x600xf32, #tpu.memory_space<vmem>>, vector<1x1x384xf32>
    %90 = vector.shape_cast %89 : vector<1x1x384xf32> to vector<1x384xf32>
    %c28_106 = arith.constant 28 : index
    %c0_107 = arith.constant 0 : index
    %91 = vector.load %arg12[%c28_106, %c0_107] : memref<200x384xf32, #tpu.memory_space<vmem>>, vector<1x384xf32>
    tpu.vector_store %arg12[%c28_106, %c0_107], %90 {strides = array<i32>} : memref<200x384xf32, #tpu.memory_space<vmem>>, vector<1x384xf32>,
    %c0_108 = arith.constant 0 : index
    %c0_109 = arith.constant 0 : index
    %c74 = arith.constant 74 : index
    %92 = vector.load %arg1[%c0_108, %c0_109, %c74] : memref<1x1x600xf32, #tpu.memory_space<vmem>>, vector<1x1x384xf32>
    %93 = vector.shape_cast %92 : vector<1x1x384xf32> to vector<1x384xf32>
    %c29_110 = arith.constant 29 : index
    %c0_111 = arith.constant 0 : index
    %94 = vector.load %arg12[%c29_110, %c0_111] : memref<200x384xf32, #tpu.memory_space<vmem>>, vector<1x384xf32>
    tpu.vector_store %arg12[%c29_110, %c0_111], %93 {strides = array<i32>} : memref<200x384xf32, #tpu.memory_space<vmem>>, vector<1x384xf32>,
    %c0_112 = arith.constant 0 : index
    %c0_113 = arith.constant 0 : index
    %c75 = arith.constant 75 : index
    %95 = vector.load %arg1[%c0_112, %c0_113, %c75] : memref<1x1x600xf32, #tpu.memory_space<vmem>>, vector<1x1x384xf32>
    %96 = vector.shape_cast %95 : vector<1x1x384xf32> to vector<1x384xf32>
    %c30_114 = arith.constant 30 : index
    %c0_115 = arith.constant 0 : index
    %97 = vector.load %arg12[%c30_114, %c0_115] : memref<200x384xf32, #tpu.memory_space<vmem>>, vector<1x384xf32>
    tpu.vector_store %arg12[%c30_114, %c0_115], %96 {strides = array<i32>} : memref<200x384xf32, #tpu.memory_space<vmem>>, vector<1x384xf32>,
    %c0_116 = arith.constant 0 : index
    %c0_117 = arith.constant 0 : index
    %c76 = arith.constant 76 : index
    %98 = vector.load %arg1[%c0_116, %c0_117, %c76] : memref<1x1x600xf32, #tpu.memory_space<vmem>>, vector<1x1x384xf32>
    %99 = vector.shape_cast %98 : vector<1x1x384xf32> to vector<1x384xf32>
    %c31_118 = arith.constant 31 : index
    %c0_119 = arith.constant 0 : index
    %100 = vector.load %arg12[%c31_118, %c0_119] : memref<200x384xf32, #tpu.memory_space<vmem>>, vector<1x384xf32>
    tpu.vector_store %arg12[%c31_118, %c0_119], %99 {strides = array<i32>} : memref<200x384xf32, #tpu.memory_space<vmem>>, vector<1x384xf32>,
    %c0_120 = arith.constant 0 : index
    %c0_121 = arith.constant 0 : index
    %c77 = arith.constant 77 : index
    %101 = vector.load %arg1[%c0_120, %c0_121, %c77] : memref<1x1x600xf32, #tpu.memory_space<vmem>>, vector<1x1x384xf32>
    %102 = vector.shape_cast %101 : vector<1x1x384xf32> to vector<1x384xf32>
    %c32_122 = arith.constant 32 : index
    %c0_123 = arith.constant 0 : index
    %103 = vector.load %arg12[%c32_122, %c0_123] : memref<200x384xf32, #tpu.memory_space<vmem>>, vector<1x384xf32>
    tpu.vector_store %arg12[%c32_122, %c0_123], %102 {strides = array<i32>} : memref<200x384xf32, #tpu.memory_space<vmem>>, vector<1x384xf32>,
    %c0_124 = arith.constant 0 : index
    %c0_125 = arith.constant 0 : index
    %c78 = arith.constant 78 : index
    %104 = vector.load %arg1[%c0_124, %c0_125, %c78] : memref<1x1x600xf32, #tpu.memory_space<vmem>>, vector<1x1x384xf32>
    %105 = vector.shape_cast %104 : vector<1x1x384xf32> to vector<1x384xf32>
    %c33 = arith.constant 33 : index
    %c0_126 = arith.constant 0 : index
    %106 = vector.load %arg12[%c33, %c0_126] : memref<200x384xf32, #tpu.memory_space<vmem>>, vector<1x384xf32>
    tpu.vector_store %arg12[%c33, %c0_126], %105 {strides = array<i32>} : memref<200x384xf32, #tpu.memory_space<vmem>>, vector<1x384xf32>,
    %c0_127 = arith.constant 0 : index
    %c0_128 = arith.constant 0 : index
    %c79 = arith.constant 79 : index
    %107 = vector.load %arg1[%c0_127, %c0_128, %c79] : memref<1x1x600xf32, #tpu.memory_space<vmem>>, vector<1x1x384xf32>
    %108 = vector.shape_cast %107 : vector<1x1x384xf32> to vector<1x384xf32>
    %c34 = arith.constant 34 : index
    %c0_129 = arith.constant 0 : index
    %109 = vector.load %arg12[%c34, %c0_129] : memref<200x384xf32, #tpu.memory_space<vmem>>, vector<1x384xf32>
    tpu.vector_store %arg12[%c34, %c0_129], %108 {strides = array<i32>} : memref<200x384xf32, #tpu.memory_space<vmem>>, vector<1x384xf32>,
    %c0_130 = arith.constant 0 : index
    %c0_131 = arith.constant 0 : index
    %c80 = arith.constant 80 : index
    %110 = vector.load %arg1[%c0_130, %c0_131, %c80] : memref<1x1x600xf32, #tpu.memory_space<vmem>>, vector<1x1x384xf32>
    %111 = vector.shape_cast %110 : vector<1x1x384xf32> to vector<1x384xf32>
    %c35 = arith.constant 35 : index
    %c0_132 = arith.constant 0 : index
    %112 = vector.load %arg12[%c35, %c0_132] : memref<200x384xf32, #tpu.memory_space<vmem>>, vector<1x384xf32>
    tpu.vector_store %arg12[%c35, %c0_132], %111 {strides = array<i32>} : memref<200x384xf32, #tpu.memory_space<vmem>>, vector<1x384xf32>,
    %c0_133 = arith.constant 0 : index
    %c0_134 = arith.constant 0 : index
    %c96 = arith.constant 96 : index
    %113 = vector.load %arg1[%c0_133, %c0_134, %c96] : memref<1x1x600xf32, #tpu.memory_space<vmem>>, vector<1x1x384xf32>
    %114 = vector.shape_cast %113 : vector<1x1x384xf32> to vector<1x384xf32>
    %c36 = arith.constant 36 : index
    %c0_135 = arith.constant 0 : index
    %115 = vector.load %arg12[%c36, %c0_135] : memref<200x384xf32, #tpu.memory_space<vmem>>, vector<1x384xf32>
    tpu.vector_store %arg12[%c36, %c0_135], %114 {strides = array<i32>} : memref<200x384xf32, #tpu.memory_space<vmem>>, vector<1x384xf32>,
    %c0_136 = arith.constant 0 : index
    %c0_137 = arith.constant 0 : index
    %c97 = arith.constant 97 : index
    %116 = vector.load %arg1[%c0_136, %c0_137, %c97] : memref<1x1x600xf32, #tpu.memory_space<vmem>>, vector<1x1x384xf32>
    %117 = vector.shape_cast %116 : vector<1x1x384xf32> to vector<1x384xf32>
    %c37 = arith.constant 37 : index
    %c0_138 = arith.constant 0 : index
    %118 = vector.load %arg12[%c37, %c0_138] : memref<200x384xf32, #tpu.memory_space<vmem>>, vector<1x384xf32>
    tpu.vector_store %arg12[%c37, %c0_138], %117 {strides = array<i32>} : memref<200x384xf32, #tpu.memory_space<vmem>>, vector<1x384xf32>,
    %c0_139 = arith.constant 0 : index
    %c0_140 = arith.constant 0 : index
    %c98 = arith.constant 98 : index
    %119 = vector.load %arg1[%c0_139, %c0_140, %c98] : memref<1x1x600xf32, #tpu.memory_space<vmem>>, vector<1x1x384xf32>
    %120 = vector.shape_cast %119 : vector<1x1x384xf32> to vector<1x384xf32>
    %c38 = arith.constant 38 : index
    %c0_141 = arith.constant 0 : index
    %121 = vector.load %arg12[%c38, %c0_141] : memref<200x384xf32, #tpu.memory_space<vmem>>, vector<1x384xf32>
    tpu.vector_store %arg12[%c38, %c0_141], %120 {strides = array<i32>} : memref<200x384xf32, #tpu.memory_space<vmem>>, vector<1x384xf32>,
    %c0_142 = arith.constant 0 : index
    %c0_143 = arith.constant 0 : index
    %c99 = arith.constant 99 : index
    %122 = vector.load %arg1[%c0_142, %c0_143, %c99] : memref<1x1x600xf32, #tpu.memory_space<vmem>>, vector<1x1x384xf32>
    %123 = vector.shape_cast %122 : vector<1x1x384xf32> to vector<1x384xf32>
    %c39 = arith.constant 39 : index
    %c0_144 = arith.constant 0 : index
    %124 = vector.load %arg12[%c39, %c0_144] : memref<200x384xf32, #tpu.memory_space<vmem>>, vector<1x384xf32>
    tpu.vector_store %arg12[%c39, %c0_144], %123 {strides = array<i32>} : memref<200x384xf32, #tpu.memory_space<vmem>>, vector<1x384xf32>,
    %c0_145 = arith.constant 0 : index
    %c0_146 = arith.constant 0 : index
    %c100 = arith.constant 100 : index
    %125 = vector.load %arg1[%c0_145, %c0_146, %c100] : memref<1x1x600xf32, #tpu.memory_space<vmem>>, vector<1x1x384xf32>
    %126 = vector.shape_cast %125 : vector<1x1x384xf32> to vector<1x384xf32>
    %c40 = arith.constant 40 : index
    %c0_147 = arith.constant 0 : index
    %127 = vector.load %arg12[%c40, %c0_147] : memref<200x384xf32, #tpu.memory_space<vmem>>, vector<1x384xf32>
    tpu.vector_store %arg12[%c40, %c0_147], %126 {strides = array<i32>} : memref<200x384xf32, #tpu.memory_space<vmem>>, vector<1x384xf32>,
    %c0_148 = arith.constant 0 : index
    %c0_149 = arith.constant 0 : index
    %c101 = arith.constant 101 : index
    %128 = vector.load %arg1[%c0_148, %c0_149, %c101] : memref<1x1x600xf32, #tpu.memory_space<vmem>>, vector<1x1x384xf32>
    %129 = vector.shape_cast %128 : vector<1x1x384xf32> to vector<1x384xf32>
    %c41 = arith.constant 41 : index
    %c0_150 = arith.constant 0 : index
    %130 = vector.load %arg12[%c41, %c0_150] : memref<200x384xf32, #tpu.memory_space<vmem>>, vector<1x384xf32>
    tpu.vector_store %arg12[%c41, %c0_150], %129 {strides = array<i32>} : memref<200x384xf32, #tpu.memory_space<vmem>>, vector<1x384xf32>,
    %c0_151 = arith.constant 0 : index
    %c0_152 = arith.constant 0 : index
    %c102 = arith.constant 102 : index
    %131 = vector.load %arg1[%c0_151, %c0_152, %c102] : memref<1x1x600xf32, #tpu.memory_space<vmem>>, vector<1x1x384xf32>
    %132 = vector.shape_cast %131 : vector<1x1x384xf32> to vector<1x384xf32>
    %c42 = arith.constant 42 : index
    %c0_153 = arith.constant 0 : index
    %133 = vector.load %arg12[%c42, %c0_153] : memref<200x384xf32, #tpu.memory_space<vmem>>, vector<1x384xf32>
    tpu.vector_store %arg12[%c42, %c0_153], %132 {strides = array<i32>} : memref<200x384xf32, #tpu.memory_space<vmem>>, vector<1x384xf32>,
    %c0_154 = arith.constant 0 : index
    %c0_155 = arith.constant 0 : index
    %c103 = arith.constant 103 : index
    %134 = vector.load %arg1[%c0_154, %c0_155, %c103] : memref<1x1x600xf32, #tpu.memory_space<vmem>>, vector<1x1x384xf32>
    %135 = vector.shape_cast %134 : vector<1x1x384xf32> to vector<1x384xf32>
    %c43 = arith.constant 43 : index
    %c0_156 = arith.constant 0 : index
    %136 = vector.load %arg12[%c43, %c0_156] : memref<200x384xf32, #tpu.memory_space<vmem>>, vector<1x384xf32>
    tpu.vector_store %arg12[%c43, %c0_156], %135 {strides = array<i32>} : memref<200x384xf32, #tpu.memory_space<vmem>>, vector<1x384xf32>,
    %c0_157 = arith.constant 0 : index
    %c0_158 = arith.constant 0 : index
    %c104 = arith.constant 104 : index
    %137 = vector.load %arg1[%c0_157, %c0_158, %c104] : memref<1x1x600xf32, #tpu.memory_space<vmem>>, vector<1x1x384xf32>
    %138 = vector.shape_cast %137 : vector<1x1x384xf32> to vector<1x384xf32>
    %c44 = arith.constant 44 : index
    %c0_159 = arith.constant 0 : index
    %139 = vector.load %arg12[%c44, %c0_159] : memref<200x384xf32, #tpu.memory_space<vmem>>, vector<1x384xf32>
    tpu.vector_store %arg12[%c44, %c0_159], %138 {strides = array<i32>} : memref<200x384xf32, #tpu.memory_space<vmem>>, vector<1x384xf32>,
    %c0_160 = arith.constant 0 : index
    %c0_161 = arith.constant 0 : index
    %c120 = arith.constant 120 : index
    %140 = vector.load %arg1[%c0_160, %c0_161, %c120] : memref<1x1x600xf32, #tpu.memory_space<vmem>>, vector<1x1x384xf32>
    %141 = vector.shape_cast %140 : vector<1x1x384xf32> to vector<1x384xf32>
    %c45 = arith.constant 45 : index
    %c0_162 = arith.constant 0 : index
    %142 = vector.load %arg12[%c45, %c0_162] : memref<200x384xf32, #tpu.memory_space<vmem>>, vector<1x384xf32>
    tpu.vector_store %arg12[%c45, %c0_162], %141 {strides = array<i32>} : memref<200x384xf32, #tpu.memory_space<vmem>>, vector<1x384xf32>,
    %c0_163 = arith.constant 0 : index
    %c0_164 = arith.constant 0 : index
    %c121 = arith.constant 121 : index
    %143 = vector.load %arg1[%c0_163, %c0_164, %c121] : memref<1x1x600xf32, #tpu.memory_space<vmem>>, vector<1x1x384xf32>
    %144 = vector.shape_cast %143 : vector<1x1x384xf32> to vector<1x384xf32>
    %c46 = arith.constant 46 : index
    %c0_165 = arith.constant 0 : index
    %145 = vector.load %arg12[%c46, %c0_165] : memref<200x384xf32, #tpu.memory_space<vmem>>, vector<1x384xf32>
    tpu.vector_store %arg12[%c46, %c0_165], %144 {strides = array<i32>} : memref<200x384xf32, #tpu.memory_space<vmem>>, vector<1x384xf32>,
    %c0_166 = arith.constant 0 : index
    %c0_167 = arith.constant 0 : index
    %c122 = arith.constant 122 : index
    %146 = vector.load %arg1[%c0_166, %c0_167, %c122] : memref<1x1x600xf32, #tpu.memory_space<vmem>>, vector<1x1x384xf32>
    %147 = vector.shape_cast %146 : vector<1x1x384xf32> to vector<1x384xf32>
    %c47 = arith.constant 47 : index
    %c0_168 = arith.constant 0 : index
    %148 = vector.load %arg12[%c47, %c0_168] : memref<200x384xf32, #tpu.memory_space<vmem>>, vector<1x384xf32>
    tpu.vector_store %arg12[%c47, %c0_168], %147 {strides = array<i32>} : memref<200x384xf32, #tpu.memory_space<vmem>>, vector<1x384xf32>,
    %c0_169 = arith.constant 0 : index
    %c0_170 = arith.constant 0 : index
    %c123 = arith.constant 123 : index
    %149 = vector.load %arg1[%c0_169, %c0_170, %c123] : memref<1x1x600xf32, #tpu.memory_space<vmem>>, vector<1x1x384xf32>
    %150 = vector.shape_cast %149 : vector<1x1x384xf32> to vector<1x384xf32>
    %c48_171 = arith.constant 48 : index
    %c0_172 = arith.constant 0 : index
    %151 = vector.load %arg12[%c48_171, %c0_172] : memref<200x384xf32, #tpu.memory_space<vmem>>, vector<1x384xf32>
    tpu.vector_store %arg12[%c48_171, %c0_172], %150 {strides = array<i32>} : memref<200x384xf32, #tpu.memory_space<vmem>>, vector<1x384xf32>,
    %c0_173 = arith.constant 0 : index
    %c0_174 = arith.constant 0 : index
    %c124 = arith.constant 124 : index
    %152 = vector.load %arg1[%c0_173, %c0_174, %c124] : memref<1x1x600xf32, #tpu.memory_space<vmem>>, vector<1x1x384xf32>
    %153 = vector.shape_cast %152 : vector<1x1x384xf32> to vector<1x384xf32>
    %c49_175 = arith.constant 49 : index
    %c0_176 = arith.constant 0 : index
    %154 = vector.load %arg12[%c49_175, %c0_176] : memref<200x384xf32, #tpu.memory_space<vmem>>, vector<1x384xf32>
    tpu.vector_store %arg12[%c49_175, %c0_176], %153 {strides = array<i32>} : memref<200x384xf32, #tpu.memory_space<vmem>>, vector<1x384xf32>,
    %c0_177 = arith.constant 0 : index
    %c0_178 = arith.constant 0 : index
    %c125 = arith.constant 125 : index
    %155 = vector.load %arg1[%c0_177, %c0_178, %c125] : memref<1x1x600xf32, #tpu.memory_space<vmem>>, vector<1x1x384xf32>
    %156 = vector.shape_cast %155 : vector<1x1x384xf32> to vector<1x384xf32>
    %c50_179 = arith.constant 50 : index
    %c0_180 = arith.constant 0 : index
    %157 = vector.load %arg12[%c50_179, %c0_180] : memref<200x384xf32, #tpu.memory_space<vmem>>, vector<1x384xf32>
    tpu.vector_store %arg12[%c50_179, %c0_180], %156 {strides = array<i32>} : memref<200x384xf32, #tpu.memory_space<vmem>>, vector<1x384xf32>,
    %c0_181 = arith.constant 0 : index
    %c0_182 = arith.constant 0 : index
    %c126 = arith.constant 126 : index
    %158 = vector.load %arg1[%c0_181, %c0_182, %c126] : memref<1x1x600xf32, #tpu.memory_space<vmem>>, vector<1x1x384xf32>
    %159 = vector.shape_cast %158 : vector<1x1x384xf32> to vector<1x384xf32>
    %c51_183 = arith.constant 51 : index
    %c0_184 = arith.constant 0 : index
    %160 = vector.load %arg12[%c51_183, %c0_184] : memref<200x384xf32, #tpu.memory_space<vmem>>, vector<1x384xf32>
    tpu.vector_store %arg12[%c51_183, %c0_184], %159 {strides = array<i32>} : memref<200x384xf32, #tpu.memory_space<vmem>>, vector<1x384xf32>,
    %c0_185 = arith.constant 0 : index
    %c0_186 = arith.constant 0 : index
    %c127 = arith.constant 127 : index
    %161 = vector.load %arg1[%c0_185, %c0_186, %c127] : memref<1x1x600xf32, #tpu.memory_space<vmem>>, vector<1x1x384xf32>
    %162 = vector.shape_cast %161 : vector<1x1x384xf32> to vector<1x384xf32>
    %c52_187 = arith.constant 52 : index
    %c0_188 = arith.constant 0 : index
    %163 = vector.load %arg12[%c52_187, %c0_188] : memref<200x384xf32, #tpu.memory_space<vmem>>, vector<1x384xf32>
    tpu.vector_store %arg12[%c52_187, %c0_188], %162 {strides = array<i32>} : memref<200x384xf32, #tpu.memory_space<vmem>>, vector<1x384xf32>,
    %c0_189 = arith.constant 0 : index
    %c0_190 = arith.constant 0 : index
    %c128 = arith.constant 128 : index
    %164 = vector.load %arg1[%c0_189, %c0_190, %c128] : memref<1x1x600xf32, #tpu.memory_space<vmem>>, vector<1x1x384xf32>
    %165 = vector.shape_cast %164 : vector<1x1x384xf32> to vector<1x384xf32>
    %c53_191 = arith.constant 53 : index
    %c0_192 = arith.constant 0 : index
    %166 = vector.load %arg12[%c53_191, %c0_192] : memref<200x384xf32, #tpu.memory_space<vmem>>, vector<1x384xf32>
    tpu.vector_store %arg12[%c53_191, %c0_192], %165 {strides = array<i32>} : memref<200x384xf32, #tpu.memory_space<vmem>>, vector<1x384xf32>,
    %c0_193 = arith.constant 0 : index
    %c0_194 = arith.constant 0 : index
    %c144 = arith.constant 144 : index
    %167 = vector.load %arg1[%c0_193, %c0_194, %c144] : memref<1x1x600xf32, #tpu.memory_space<vmem>>, vector<1x1x384xf32>
    %168 = vector.shape_cast %167 : vector<1x1x384xf32> to vector<1x384xf32>
    %c54_195 = arith.constant 54 : index
    %c0_196 = arith.constant 0 : index
    %169 = vector.load %arg12[%c54_195, %c0_196] : memref<200x384xf32, #tpu.memory_space<vmem>>, vector<1x384xf32>
    tpu.vector_store %arg12[%c54_195, %c0_196], %168 {strides = array<i32>} : memref<200x384xf32, #tpu.memory_space<vmem>>, vector<1x384xf32>,
    %c0_197 = arith.constant 0 : index
    %c0_198 = arith.constant 0 : index
    %c145 = arith.constant 145 : index
    %170 = vector.load %arg1[%c0_197, %c0_198, %c145] : memref<1x1x600xf32, #tpu.memory_space<vmem>>, vector<1x1x384xf32>
    %171 = vector.shape_cast %170 : vector<1x1x384xf32> to vector<1x384xf32>
    %c55_199 = arith.constant 55 : index
    %c0_200 = arith.constant 0 : index
    %172 = vector.load %arg12[%c55_199, %c0_200] : memref<200x384xf32, #tpu.memory_space<vmem>>, vector<1x384xf32>
    tpu.vector_store %arg12[%c55_199, %c0_200], %171 {strides = array<i32>} : memref<200x384xf32, #tpu.memory_space<vmem>>, vector<1x384xf32>,
    %c0_201 = arith.constant 0 : index
    %c0_202 = arith.constant 0 : index
    %c146 = arith.constant 146 : index
    %173 = vector.load %arg1[%c0_201, %c0_202, %c146] : memref<1x1x600xf32, #tpu.memory_space<vmem>>, vector<1x1x384xf32>
    %174 = vector.shape_cast %173 : vector<1x1x384xf32> to vector<1x384xf32>
    %c56_203 = arith.constant 56 : index
    %c0_204 = arith.constant 0 : index
    %175 = vector.load %arg12[%c56_203, %c0_204] : memref<200x384xf32, #tpu.memory_space<vmem>>, vector<1x384xf32>
    tpu.vector_store %arg12[%c56_203, %c0_204], %174 {strides = array<i32>} : memref<200x384xf32, #tpu.memory_space<vmem>>, vector<1x384xf32>,
    %c0_205 = arith.constant 0 : index
    %c0_206 = arith.constant 0 : index
    %c147 = arith.constant 147 : index
    %176 = vector.load %arg1[%c0_205, %c0_206, %c147] : memref<1x1x600xf32, #tpu.memory_space<vmem>>, vector<1x1x384xf32>
    %177 = vector.shape_cast %176 : vector<1x1x384xf32> to vector<1x384xf32>
    %c57 = arith.constant 57 : index
    %c0_207 = arith.constant 0 : index
    %178 = vector.load %arg12[%c57, %c0_207] : memref<200x384xf32, #tpu.memory_space<vmem>>, vector<1x384xf32>
    tpu.vector_store %arg12[%c57, %c0_207], %177 {strides = array<i32>} : memref<200x384xf32, #tpu.memory_space<vmem>>, vector<1x384xf32>,
    %c0_208 = arith.constant 0 : index
    %c0_209 = arith.constant 0 : index
    %c148 = arith.constant 148 : index
    %179 = vector.load %arg1[%c0_208, %c0_209, %c148] : memref<1x1x600xf32, #tpu.memory_space<vmem>>, vector<1x1x384xf32>
    %180 = vector.shape_cast %179 : vector<1x1x384xf32> to vector<1x384xf32>
    %c58 = arith.constant 58 : index
    %c0_210 = arith.constant 0 : index
    %181 = vector.load %arg12[%c58, %c0_210] : memref<200x384xf32, #tpu.memory_space<vmem>>, vector<1x384xf32>
    tpu.vector_store %arg12[%c58, %c0_210], %180 {strides = array<i32>} : memref<200x384xf32, #tpu.memory_space<vmem>>, vector<1x384xf32>,
    %c0_211 = arith.constant 0 : index
    %c0_212 = arith.constant 0 : index
    %c149 = arith.constant 149 : index
    %182 = vector.load %arg1[%c0_211, %c0_212, %c149] : memref<1x1x600xf32, #tpu.memory_space<vmem>>, vector<1x1x384xf32>
    %183 = vector.shape_cast %182 : vector<1x1x384xf32> to vector<1x384xf32>
    %c59 = arith.constant 59 : index
    %c0_213 = arith.constant 0 : index
    %184 = vector.load %arg12[%c59, %c0_213] : memref<200x384xf32, #tpu.memory_space<vmem>>, vector<1x384xf32>
    tpu.vector_store %arg12[%c59, %c0_213], %183 {strides = array<i32>} : memref<200x384xf32, #tpu.memory_space<vmem>>, vector<1x384xf32>,
    %c0_214 = arith.constant 0 : index
    %c0_215 = arith.constant 0 : index
    %c150 = arith.constant 150 : index
    %185 = vector.load %arg1[%c0_214, %c0_215, %c150] : memref<1x1x600xf32, #tpu.memory_space<vmem>>, vector<1x1x384xf32>
    %186 = vector.shape_cast %185 : vector<1x1x384xf32> to vector<1x384xf32>
    %c60 = arith.constant 60 : index
    %c0_216 = arith.constant 0 : index
    %187 = vector.load %arg12[%c60, %c0_216] : memref<200x384xf32, #tpu.memory_space<vmem>>, vector<1x384xf32>
    tpu.vector_store %arg12[%c60, %c0_216], %186 {strides = array<i32>} : memref<200x384xf32, #tpu.memory_space<vmem>>, vector<1x384xf32>,
    %c0_217 = arith.constant 0 : index
    %c0_218 = arith.constant 0 : index
    %c151 = arith.constant 151 : index
    %188 = vector.load %arg1[%c0_217, %c0_218, %c151] : memref<1x1x600xf32, #tpu.memory_space<vmem>>, vector<1x1x384xf32>
    %189 = vector.shape_cast %188 : vector<1x1x384xf32> to vector<1x384xf32>
    %c61 = arith.constant 61 : index
    %c0_219 = arith.constant 0 : index
    %190 = vector.load %arg12[%c61, %c0_219] : memref<200x384xf32, #tpu.memory_space<vmem>>, vector<1x384xf32>
    tpu.vector_store %arg12[%c61, %c0_219], %189 {strides = array<i32>} : memref<200x384xf32, #tpu.memory_space<vmem>>, vector<1x384xf32>,
    %c0_220 = arith.constant 0 : index
    %c0_221 = arith.constant 0 : index
    %c152 = arith.constant 152 : index
    %191 = vector.load %arg1[%c0_220, %c0_221, %c152] : memref<1x1x600xf32, #tpu.memory_space<vmem>>, vector<1x1x384xf32>
    %192 = vector.shape_cast %191 : vector<1x1x384xf32> to vector<1x384xf32>
    %c62 = arith.constant 62 : index
    %c0_222 = arith.constant 0 : index
    %193 = vector.load %arg12[%c62, %c0_222] : memref<200x384xf32, #tpu.memory_space<vmem>>, vector<1x384xf32>
    tpu.vector_store %arg12[%c62, %c0_222], %192 {strides = array<i32>} : memref<200x384xf32, #tpu.memory_space<vmem>>, vector<1x384xf32>,
    %c0_223 = arith.constant 0 : index
    %c0_224 = arith.constant 0 : index
    %c168 = arith.constant 168 : index
    %194 = vector.load %arg1[%c0_223, %c0_224, %c168] : memref<1x1x600xf32, #tpu.memory_space<vmem>>, vector<1x1x384xf32>
    %195 = vector.shape_cast %194 : vector<1x1x384xf32> to vector<1x384xf32>
    %c63 = arith.constant 63 : index
    %c0_225 = arith.constant 0 : index
    %196 = vector.load %arg12[%c63, %c0_225] : memref<200x384xf32, #tpu.memory_space<vmem>>, vector<1x384xf32>
    tpu.vector_store %arg12[%c63, %c0_225], %195 {strides = array<i32>} : memref<200x384xf32, #tpu.memory_space<vmem>>, vector<1x384xf32>,
    %c0_226 = arith.constant 0 : index
    %c0_227 = arith.constant 0 : index
    %c169 = arith.constant 169 : index
    %197 = vector.load %arg1[%c0_226, %c0_227, %c169] : memref<1x1x600xf32, #tpu.memory_space<vmem>>, vector<1x1x384xf32>
    %198 = vector.shape_cast %197 : vector<1x1x384xf32> to vector<1x384xf32>
    %c64 = arith.constant 64 : index
    %c0_228 = arith.constant 0 : index
    %199 = vector.load %arg12[%c64, %c0_228] : memref<200x384xf32, #tpu.memory_space<vmem>>, vector<1x384xf32>
    tpu.vector_store %arg12[%c64, %c0_228], %198 {strides = array<i32>} : memref<200x384xf32, #tpu.memory_space<vmem>>, vector<1x384xf32>,
    %c0_229 = arith.constant 0 : index
    %c0_230 = arith.constant 0 : index
    %c170 = arith.constant 170 : index
    %200 = vector.load %arg1[%c0_229, %c0_230, %c170] : memref<1x1x600xf32, #tpu.memory_space<vmem>>, vector<1x1x384xf32>
    %201 = vector.shape_cast %200 : vector<1x1x384xf32> to vector<1x384xf32>
    %c65 = arith.constant 65 : index
    %c0_231 = arith.constant 0 : index
    %202 = vector.load %arg12[%c65, %c0_231] : memref<200x384xf32, #tpu.memory_space<vmem>>, vector<1x384xf32>
    tpu.vector_store %arg12[%c65, %c0_231], %201 {strides = array<i32>} : memref<200x384xf32, #tpu.memory_space<vmem>>, vector<1x384xf32>,
    %c0_232 = arith.constant 0 : index
    %c0_233 = arith.constant 0 : index
    %c171 = arith.constant 171 : index
    %203 = vector.load %arg1[%c0_232, %c0_233, %c171] : memref<1x1x600xf32, #tpu.memory_space<vmem>>, vector<1x1x384xf32>
    %204 = vector.shape_cast %203 : vector<1x1x384xf32> to vector<1x384xf32>
    %c66 = arith.constant 66 : index
    %c0_234 = arith.constant 0 : index
    %205 = vector.load %arg12[%c66, %c0_234] : memref<200x384xf32, #tpu.memory_space<vmem>>, vector<1x384xf32>
    tpu.vector_store %arg12[%c66, %c0_234], %204 {strides = array<i32>} : memref<200x384xf32, #tpu.memory_space<vmem>>, vector<1x384xf32>,
    %c0_235 = arith.constant 0 : index
    %c0_236 = arith.constant 0 : index
    %c172 = arith.constant 172 : index
    %206 = vector.load %arg1[%c0_235, %c0_236, %c172] : memref<1x1x600xf32, #tpu.memory_space<vmem>>, vector<1x1x384xf32>
    %207 = vector.shape_cast %206 : vector<1x1x384xf32> to vector<1x384xf32>
    %c67 = arith.constant 67 : index
    %c0_237 = arith.constant 0 : index
    %208 = vector.load %arg12[%c67, %c0_237] : memref<200x384xf32, #tpu.memory_space<vmem>>, vector<1x384xf32>
    tpu.vector_store %arg12[%c67, %c0_237], %207 {strides = array<i32>} : memref<200x384xf32, #tpu.memory_space<vmem>>, vector<1x384xf32>,
    %c0_238 = arith.constant 0 : index
    %c0_239 = arith.constant 0 : index
    %c173 = arith.constant 173 : index
    %209 = vector.load %arg1[%c0_238, %c0_239, %c173] : memref<1x1x600xf32, #tpu.memory_space<vmem>>, vector<1x1x384xf32>
    %210 = vector.shape_cast %209 : vector<1x1x384xf32> to vector<1x384xf32>
    %c68 = arith.constant 68 : index
    %c0_240 = arith.constant 0 : index
    %211 = vector.load %arg12[%c68, %c0_240] : memref<200x384xf32, #tpu.memory_space<vmem>>, vector<1x384xf32>
    tpu.vector_store %arg12[%c68, %c0_240], %210 {strides = array<i32>} : memref<200x384xf32, #tpu.memory_space<vmem>>, vector<1x384xf32>,
    %c0_241 = arith.constant 0 : index
    %c0_242 = arith.constant 0 : index
    %c174 = arith.constant 174 : index
    %212 = vector.load %arg1[%c0_241, %c0_242, %c174] : memref<1x1x600xf32, #tpu.memory_space<vmem>>, vector<1x1x384xf32>
    %213 = vector.shape_cast %212 : vector<1x1x384xf32> to vector<1x384xf32>
    %c69 = arith.constant 69 : index
    %c0_243 = arith.constant 0 : index
    %214 = vector.load %arg12[%c69, %c0_243] : memref<200x384xf32, #tpu.memory_space<vmem>>, vector<1x384xf32>
    tpu.vector_store %arg12[%c69, %c0_243], %213 {strides = array<i32>} : memref<200x384xf32, #tpu.memory_space<vmem>>, vector<1x384xf32>,
    %c0_244 = arith.constant 0 : index
    %c0_245 = arith.constant 0 : index
    %c175 = arith.constant 175 : index
    %215 = vector.load %arg1[%c0_244, %c0_245, %c175] : memref<1x1x600xf32, #tpu.memory_space<vmem>>, vector<1x1x384xf32>
    %216 = vector.shape_cast %215 : vector<1x1x384xf32> to vector<1x384xf32>
    %c70 = arith.constant 70 : index
    %c0_246 = arith.constant 0 : index
    %217 = vector.load %arg12[%c70, %c0_246] : memref<200x384xf32, #tpu.memory_space<vmem>>, vector<1x384xf32>
    tpu.vector_store %arg12[%c70, %c0_246], %216 {strides = array<i32>} : memref<200x384xf32, #tpu.memory_space<vmem>>, vector<1x384xf32>,
    %c0_247 = arith.constant 0 : index
    %c0_248 = arith.constant 0 : index
    %c176 = arith.constant 176 : index
    %218 = vector.load %arg1[%c0_247, %c0_248, %c176] : memref<1x1x600xf32, #tpu.memory_space<vmem>>, vector<1x1x384xf32>
    %219 = vector.shape_cast %218 : vector<1x1x384xf32> to vector<1x384xf32>
    %c71 = arith.constant 71 : index
    %c0_249 = arith.constant 0 : index
    %220 = vector.load %arg12[%c71, %c0_249] : memref<200x384xf32, #tpu.memory_space<vmem>>, vector<1x384xf32>
    tpu.vector_store %arg12[%c71, %c0_249], %219 {strides = array<i32>} : memref<200x384xf32, #tpu.memory_space<vmem>>, vector<1x384xf32>,
    %c0_250 = arith.constant 0 : index
    %c0_251 = arith.constant 0 : index
    %c192 = arith.constant 192 : index
    %221 = vector.load %arg1[%c0_250, %c0_251, %c192] : memref<1x1x600xf32, #tpu.memory_space<vmem>>, vector<1x1x384xf32>
    %222 = vector.shape_cast %221 : vector<1x1x384xf32> to vector<1x384xf32>
    %c72_252 = arith.constant 72 : index
    %c0_253 = arith.constant 0 : index
    %223 = vector.load %arg12[%c72_252, %c0_253] : memref<200x384xf32, #tpu.memory_space<vmem>>, vector<1x384xf32>
    tpu.vector_store %arg12[%c72_252, %c0_253], %222 {strides = array<i32>} : memref<200x384xf32, #tpu.memory_space<vmem>>, vector<1x384xf32>,
    %c0_254 = arith.constant 0 : index
    %c0_255 = arith.constant 0 : index
    %c193 = arith.constant 193 : index
    %224 = vector.load %arg1[%c0_254, %c0_255, %c193] : memref<1x1x600xf32, #tpu.memory_space<vmem>>, vector<1x1x384xf32>
    %225 = vector.shape_cast %224 : vector<1x1x384xf32> to vector<1x384xf32>
    %c73_256 = arith.constant 73 : index
    %c0_257 = arith.constant 0 : index
    %226 = vector.load %arg12[%c73_256, %c0_257] : memref<200x384xf32, #tpu.memory_space<vmem>>, vector<1x384xf32>
    tpu.vector_store %arg12[%c73_256, %c0_257], %225 {strides = array<i32>} : memref<200x384xf32, #tpu.memory_space<vmem>>, vector<1x384xf32>,
    %c0_258 = arith.constant 0 : index
    %c0_259 = arith.constant 0 : index
    %c194 = arith.constant 194 : index
    %227 = vector.load %arg1[%c0_258, %c0_259, %c194] : memref<1x1x600xf32, #tpu.memory_space<vmem>>, vector<1x1x384xf32>
    %228 = vector.shape_cast %227 : vector<1x1x384xf32> to vector<1x384xf32>
    %c74_260 = arith.constant 74 : index
    %c0_261 = arith.constant 0 : index
    %229 = vector.load %arg12[%c74_260, %c0_261] : memref<200x384xf32, #tpu.memory_space<vmem>>, vector<1x384xf32>
    tpu.vector_store %arg12[%c74_260, %c0_261], %228 {strides = array<i32>} : memref<200x384xf32, #tpu.memory_space<vmem>>, vector<1x384xf32>,
    %c0_262 = arith.constant 0 : index
    %c0_263 = arith.constant 0 : index
    %c195 = arith.constant 195 : index
    %230 = vector.load %arg1[%c0_262, %c0_263, %c195] : memref<1x1x600xf32, #tpu.memory_space<vmem>>, vector<1x1x384xf32>
    %231 = vector.shape_cast %230 : vector<1x1x384xf32> to vector<1x384xf32>
    %c75_264 = arith.constant 75 : index
    %c0_265 = arith.constant 0 : index
    %232 = vector.load %arg12[%c75_264, %c0_265] : memref<200x384xf32, #tpu.memory_space<vmem>>, vector<1x384xf32>
    tpu.vector_store %arg12[%c75_264, %c0_265], %231 {strides = array<i32>} : memref<200x384xf32, #tpu.memory_space<vmem>>, vector<1x384xf32>,
    %c0_266 = arith.constant 0 : index
    %c0_267 = arith.constant 0 : index
    %c196 = arith.constant 196 : index
    %233 = vector.load %arg1[%c0_266, %c0_267, %c196] : memref<1x1x600xf32, #tpu.memory_space<vmem>>, vector<1x1x384xf32>
    %234 = vector.shape_cast %233 : vector<1x1x384xf32> to vector<1x384xf32>
    %c76_268 = arith.constant 76 : index
    %c0_269 = arith.constant 0 : index
    %235 = vector.load %arg12[%c76_268, %c0_269] : memref<200x384xf32, #tpu.memory_space<vmem>>, vector<1x384xf32>
    tpu.vector_store %arg12[%c76_268, %c0_269], %234 {strides = array<i32>} : memref<200x384xf32, #tpu.memory_space<vmem>>, vector<1x384xf32>,
    %c0_270 = arith.constant 0 : index
    %c0_271 = arith.constant 0 : index
    %c197 = arith.constant 197 : index
    %236 = vector.load %arg1[%c0_270, %c0_271, %c197] : memref<1x1x600xf32, #tpu.memory_space<vmem>>, vector<1x1x384xf32>
    %237 = vector.shape_cast %236 : vector<1x1x384xf32> to vector<1x384xf32>
    %c77_272 = arith.constant 77 : index
    %c0_273 = arith.constant 0 : index
    %238 = vector.load %arg12[%c77_272, %c0_273] : memref<200x384xf32, #tpu.memory_space<vmem>>, vector<1x384xf32>
    tpu.vector_store %arg12[%c77_272, %c0_273], %237 {strides = array<i32>} : memref<200x384xf32, #tpu.memory_space<vmem>>, vector<1x384xf32>,
    %c0_274 = arith.constant 0 : index
    %c0_275 = arith.constant 0 : index
    %c198 = arith.constant 198 : index
    %239 = vector.load %arg1[%c0_274, %c0_275, %c198] : memref<1x1x600xf32, #tpu.memory_space<vmem>>, vector<1x1x384xf32>
    %240 = vector.shape_cast %239 : vector<1x1x384xf32> to vector<1x384xf32>
    %c78_276 = arith.constant 78 : index
    %c0_277 = arith.constant 0 : index
    %241 = vector.load %arg12[%c78_276, %c0_277] : memref<200x384xf32, #tpu.memory_space<vmem>>, vector<1x384xf32>
    tpu.vector_store %arg12[%c78_276, %c0_277], %240 {strides = array<i32>} : memref<200x384xf32, #tpu.memory_space<vmem>>, vector<1x384xf32>,
    %c0_278 = arith.constant 0 : index
    %c0_279 = arith.constant 0 : index
    %c199 = arith.constant 199 : index
    %242 = vector.load %arg1[%c0_278, %c0_279, %c199] : memref<1x1x600xf32, #tpu.memory_space<vmem>>, vector<1x1x384xf32>
    %243 = vector.shape_cast %242 : vector<1x1x384xf32> to vector<1x384xf32>
    %c79_280 = arith.constant 79 : index
    %c0_281 = arith.constant 0 : index
    %244 = vector.load %arg12[%c79_280, %c0_281] : memref<200x384xf32, #tpu.memory_space<vmem>>, vector<1x384xf32>
    tpu.vector_store %arg12[%c79_280, %c0_281], %243 {strides = array<i32>} : memref<200x384xf32, #tpu.memory_space<vmem>>, vector<1x384xf32>,
    %c0_282 = arith.constant 0 : index
    %c0_283 = arith.constant 0 : index
    %c200 = arith.constant 200 : index
    %245 = vector.load %arg1[%c0_282, %c0_283, %c200] : memref<1x1x600xf32, #tpu.memory_space<vmem>>, vector<1x1x384xf32>
    %246 = vector.shape_cast %245 : vector<1x1x384xf32> to vector<1x384xf32>
    %c80_284 = arith.constant 80 : index
    %c0_285 = arith.constant 0 : index
    %247 = vector.load %arg12[%c80_284, %c0_285] : memref<200x384xf32, #tpu.memory_space<vmem>>, vector<1x384xf32>
    tpu.vector_store %arg12[%c80_284, %c0_285], %246 {strides = array<i32>} : memref<200x384xf32, #tpu.memory_space<vmem>>, vector<1x384xf32>,
    %c0_286 = arith.constant 0 : index
    %c0_287 = arith.constant 0 : index
    %248 = vector.load %arg12[%c0_286, %c0_287] : memref<200x384xf32, #tpu.memory_space<vmem>>, vector<81x384xf32>
    %c0_288 = arith.constant 0 : index
    %c0_289 = arith.constant 0 : index
    %249 = vector.load %arg2[%c0_288, %c0_289] : memref<8x81xf32, #tpu.memory_space<vmem>>, vector<8x81xf32>
    %cst_290 = arith.constant dense<0.000000e+00> : vector<8x384xf32>
    %250 = tpu.matmul %249, %248, %cst_290 {dimension_numbers = #tpu.dot_dimension_numbers<[1], [0], [0], [1], [0, 0, 1, 1], [], []>} : vector<8x81xf32>, vector<81x384xf32>, vector<8x384xf32> -> vector<8x384xf32>
    %c0_291 = arith.constant 0 : index
    %c0_292 = arith.constant 0 : index
    %251 = vector.load %arg3[%c0_291, %c0_292] : memref<8x1xf32, #tpu.memory_space<vmem>>, vector<8x1xf32>
    %252 = vector.broadcast %251 : vector<8x1xf32> to vector<8x384xf32>
    %253 = arith.addf %250, %252 : vector<8x384xf32>
    %cst_293 = arith.constant 0.000000e+00 : f32
    %254 = vector.broadcast %cst_293 : f32 to vector<8x384xf32>
    %255 = arith.maximumf %253, %254 : vector<8x384xf32>
    %256 = vector.broadcast %4 : vector<1x384xf32> to vector<8x384xf32>
    %257 = arith.mulf %255, %256 : vector<8x384xf32>
    %c0_294 = arith.constant 0 : index
    %c100_295 = arith.constant 100 : index
    %258 = vector.load %arg10[%c0_294, %c100_295] : memref<8x600xf32, #tpu.memory_space<vmem>>, vector<8x384xf32>
    tpu.vector_store %arg10[%c0_294, %c100_295], %257 {strides = array<i32>} : memref<8x600xf32, #tpu.memory_space<vmem>>, vector<8x384xf32>,
    %c0_296 = arith.constant 0 : index
    %c50_297 = arith.constant 50 : index
    %259 = vector.load %arg10[%c0_296, %c50_297] : memref<8x600xf32, #tpu.memory_space<vmem>>, vector<8x384xf32>
    %c0_298 = arith.constant 0 : index
    %c0_299 = arith.constant 0 : index
    %260 = vector.load %arg12[%c0_298, %c0_299] : memref<200x384xf32, #tpu.memory_space<vmem>>, vector<8x384xf32>
    tpu.vector_store %arg12[%c0_298, %c0_299], %259 {strides = array<i32>} : memref<200x384xf32, #tpu.memory_space<vmem>>, vector<8x384xf32>,
    %c0_300 = arith.constant 0 : index
    %c51_301 = arith.constant 51 : index
    %261 = vector.load %arg10[%c0_300, %c51_301] : memref<8x600xf32, #tpu.memory_space<vmem>>, vector<8x384xf32>
    %c8_302 = arith.constant 8 : index
    %c0_303 = arith.constant 0 : index
    %262 = vector.load %arg12[%c8_302, %c0_303] : memref<200x384xf32, #tpu.memory_space<vmem>>, vector<8x384xf32>
    tpu.vector_store %arg12[%c8_302, %c0_303], %261 {strides = array<i32>} : memref<200x384xf32, #tpu.memory_space<vmem>>, vector<8x384xf32>,
    %c0_304 = arith.constant 0 : index
    %c52_305 = arith.constant 52 : index
    %263 = vector.load %arg10[%c0_304, %c52_305] : memref<8x600xf32, #tpu.memory_space<vmem>>, vector<8x384xf32>
    %c16_306 = arith.constant 16 : index
    %c0_307 = arith.constant 0 : index
    %264 = vector.load %arg12[%c16_306, %c0_307] : memref<200x384xf32, #tpu.memory_space<vmem>>, vector<8x384xf32>
    tpu.vector_store %arg12[%c16_306, %c0_307], %263 {strides = array<i32>} : memref<200x384xf32, #tpu.memory_space<vmem>>, vector<8x384xf32>,
    %c0_308 = arith.constant 0 : index
    %c53_309 = arith.constant 53 : index
    %265 = vector.load %arg10[%c0_308, %c53_309] : memref<8x600xf32, #tpu.memory_space<vmem>>, vector<8x384xf32>
    %c24_310 = arith.constant 24 : index
    %c0_311 = arith.constant 0 : index
    %266 = vector.load %arg12[%c24_310, %c0_311] : memref<200x384xf32, #tpu.memory_space<vmem>>, vector<8x384xf32>
    tpu.vector_store %arg12[%c24_310, %c0_311], %265 {strides = array<i32>} : memref<200x384xf32, #tpu.memory_space<vmem>>, vector<8x384xf32>,
    %c0_312 = arith.constant 0 : index
    %c54_313 = arith.constant 54 : index
    %267 = vector.load %arg10[%c0_312, %c54_313] : memref<8x600xf32, #tpu.memory_space<vmem>>, vector<8x384xf32>
    %c32_314 = arith.constant 32 : index
    %c0_315 = arith.constant 0 : index
    %268 = vector.load %arg12[%c32_314, %c0_315] : memref<200x384xf32, #tpu.memory_space<vmem>>, vector<8x384xf32>
    tpu.vector_store %arg12[%c32_314, %c0_315], %267 {strides = array<i32>} : memref<200x384xf32, #tpu.memory_space<vmem>>, vector<8x384xf32>,
    %c0_316 = arith.constant 0 : index
    %c74_317 = arith.constant 74 : index
    %269 = vector.load %arg10[%c0_316, %c74_317] : memref<8x600xf32, #tpu.memory_space<vmem>>, vector<8x384xf32>
    %c40_318 = arith.constant 40 : index
    %c0_319 = arith.constant 0 : index
    %270 = vector.load %arg12[%c40_318, %c0_319] : memref<200x384xf32, #tpu.memory_space<vmem>>, vector<8x384xf32>
    tpu.vector_store %arg12[%c40_318, %c0_319], %269 {strides = array<i32>} : memref<200x384xf32, #tpu.memory_space<vmem>>, vector<8x384xf32>,
    %c0_320 = arith.constant 0 : index
    %c75_321 = arith.constant 75 : index
    %271 = vector.load %arg10[%c0_320, %c75_321] : memref<8x600xf32, #tpu.memory_space<vmem>>, vector<8x384xf32>
    %c48_322 = arith.constant 48 : index
    %c0_323 = arith.constant 0 : index
    %272 = vector.load %arg12[%c48_322, %c0_323] : memref<200x384xf32, #tpu.memory_space<vmem>>, vector<8x384xf32>
    tpu.vector_store %arg12[%c48_322, %c0_323], %271 {strides = array<i32>} : memref<200x384xf32, #tpu.memory_space<vmem>>, vector<8x384xf32>,
    %c0_324 = arith.constant 0 : index
    %c76_325 = arith.constant 76 : index
    %273 = vector.load %arg10[%c0_324, %c76_325] : memref<8x600xf32, #tpu.memory_space<vmem>>, vector<8x384xf32>
    %c56_326 = arith.constant 56 : index
    %c0_327 = arith.constant 0 : index
    %274 = vector.load %arg12[%c56_326, %c0_327] : memref<200x384xf32, #tpu.memory_space<vmem>>, vector<8x384xf32>
    tpu.vector_store %arg12[%c56_326, %c0_327], %273 {strides = array<i32>} : memref<200x384xf32, #tpu.memory_space<vmem>>, vector<8x384xf32>,
    %c0_328 = arith.constant 0 : index
    %c77_329 = arith.constant 77 : index
    %275 = vector.load %arg10[%c0_328, %c77_329] : memref<8x600xf32, #tpu.memory_space<vmem>>, vector<8x384xf32>
    %c64_330 = arith.constant 64 : index
    %c0_331 = arith.constant 0 : index
    %276 = vector.load %arg12[%c64_330, %c0_331] : memref<200x384xf32, #tpu.memory_space<vmem>>, vector<8x384xf32>
    tpu.vector_store %arg12[%c64_330, %c0_331], %275 {strides = array<i32>} : memref<200x384xf32, #tpu.memory_space<vmem>>, vector<8x384xf32>,
    %c0_332 = arith.constant 0 : index
    %c78_333 = arith.constant 78 : index
    %277 = vector.load %arg10[%c0_332, %c78_333] : memref<8x600xf32, #tpu.memory_space<vmem>>, vector<8x384xf32>
    %c72_334 = arith.constant 72 : index
    %c0_335 = arith.constant 0 : index
    %278 = vector.load %arg12[%c72_334, %c0_335] : memref<200x384xf32, #tpu.memory_space<vmem>>, vector<8x384xf32>
    tpu.vector_store %arg12[%c72_334, %c0_335], %277 {strides = array<i32>} : memref<200x384xf32, #tpu.memory_space<vmem>>, vector<8x384xf32>,
    %c0_336 = arith.constant 0 : index
    %c98_337 = arith.constant 98 : index
    %279 = vector.load %arg10[%c0_336, %c98_337] : memref<8x600xf32, #tpu.memory_space<vmem>>, vector<8x384xf32>
    %c80_338 = arith.constant 80 : index
    %c0_339 = arith.constant 0 : index
    %280 = vector.load %arg12[%c80_338, %c0_339] : memref<200x384xf32, #tpu.memory_space<vmem>>, vector<8x384xf32>
    tpu.vector_store %arg12[%c80_338, %c0_339], %279 {strides = array<i32>} : memref<200x384xf32, #tpu.memory_space<vmem>>, vector<8x384xf32>,
    %c0_340 = arith.constant 0 : index
    %c99_341 = arith.constant 99 : index
    %281 = vector.load %arg10[%c0_340, %c99_341] : memref<8x600xf32, #tpu.memory_space<vmem>>, vector<8x384xf32>
    %c88 = arith.constant 88 : index
    %c0_342 = arith.constant 0 : index
    %282 = vector.load %arg12[%c88, %c0_342] : memref<200x384xf32, #tpu.memory_space<vmem>>, vector<8x384xf32>
    tpu.vector_store %arg12[%c88, %c0_342], %281 {strides = array<i32>} : memref<200x384xf32, #tpu.memory_space<vmem>>, vector<8x384xf32>,
    %c0_343 = arith.constant 0 : index
    %c100_344 = arith.constant 100 : index
    %283 = vector.load %arg10[%c0_343, %c100_344] : memref<8x600xf32, #tpu.memory_space<vmem>>, vector<8x384xf32>
    %c96_345 = arith.constant 96 : index
    %c0_346 = arith.constant 0 : index
    %284 = vector.load %arg12[%c96_345, %c0_346] : memref<200x384xf32, #tpu.memory_space<vmem>>, vector<8x384xf32>
    tpu.vector_store %arg12[%c96_345, %c0_346], %283 {strides = array<i32>} : memref<200x384xf32, #tpu.memory_space<vmem>>, vector<8x384xf32>,
    %c0_347 = arith.constant 0 : index
    %c101_348 = arith.constant 101 : index
    %285 = vector.load %arg10[%c0_347, %c101_348] : memref<8x600xf32, #tpu.memory_space<vmem>>, vector<8x384xf32>
    %c104_349 = arith.constant 104 : index
    %c0_350 = arith.constant 0 : index
    %286 = vector.load %arg12[%c104_349, %c0_350] : memref<200x384xf32, #tpu.memory_space<vmem>>, vector<8x384xf32>
    tpu.vector_store %arg12[%c104_349, %c0_350], %285 {strides = array<i32>} : memref<200x384xf32, #tpu.memory_space<vmem>>, vector<8x384xf32>,
    %c0_351 = arith.constant 0 : index
    %c102_352 = arith.constant 102 : index
    %287 = vector.load %arg10[%c0_351, %c102_352] : memref<8x600xf32, #tpu.memory_space<vmem>>, vector<8x384xf32>
    %c112 = arith.constant 112 : index
    %c0_353 = arith.constant 0 : index
    %288 = vector.load %arg12[%c112, %c0_353] : memref<200x384xf32, #tpu.memory_space<vmem>>, vector<8x384xf32>
    tpu.vector_store %arg12[%c112, %c0_353], %287 {strides = array<i32>} : memref<200x384xf32, #tpu.memory_space<vmem>>, vector<8x384xf32>,
    %c0_354 = arith.constant 0 : index
    %c122_355 = arith.constant 122 : index
    %289 = vector.load %arg10[%c0_354, %c122_355] : memref<8x600xf32, #tpu.memory_space<vmem>>, vector<8x384xf32>
    %c120_356 = arith.constant 120 : index
    %c0_357 = arith.constant 0 : index
    %290 = vector.load %arg12[%c120_356, %c0_357] : memref<200x384xf32, #tpu.memory_space<vmem>>, vector<8x384xf32>
    tpu.vector_store %arg12[%c120_356, %c0_357], %289 {strides = array<i32>} : memref<200x384xf32, #tpu.memory_space<vmem>>, vector<8x384xf32>,
    %c0_358 = arith.constant 0 : index
    %c123_359 = arith.constant 123 : index
    %291 = vector.load %arg10[%c0_358, %c123_359] : memref<8x600xf32, #tpu.memory_space<vmem>>, vector<8x384xf32>
    %c128_360 = arith.constant 128 : index
    %c0_361 = arith.constant 0 : index
    %292 = vector.load %arg12[%c128_360, %c0_361] : memref<200x384xf32, #tpu.memory_space<vmem>>, vector<8x384xf32>
    tpu.vector_store %arg12[%c128_360, %c0_361], %291 {strides = array<i32>} : memref<200x384xf32, #tpu.memory_space<vmem>>, vector<8x384xf32>,
    %c0_362 = arith.constant 0 : index
    %c124_363 = arith.constant 124 : index
    %293 = vector.load %arg10[%c0_362, %c124_363] : memref<8x600xf32, #tpu.memory_space<vmem>>, vector<8x384xf32>
    %c136 = arith.constant 136 : index
    %c0_364 = arith.constant 0 : index
    %294 = vector.load %arg12[%c136, %c0_364] : memref<200x384xf32, #tpu.memory_space<vmem>>, vector<8x384xf32>
    tpu.vector_store %arg12[%c136, %c0_364], %293 {strides = array<i32>} : memref<200x384xf32, #tpu.memory_space<vmem>>, vector<8x384xf32>,
    %c0_365 = arith.constant 0 : index
    %c125_366 = arith.constant 125 : index
    %295 = vector.load %arg10[%c0_365, %c125_366] : memref<8x600xf32, #tpu.memory_space<vmem>>, vector<8x384xf32>
    %c144_367 = arith.constant 144 : index
    %c0_368 = arith.constant 0 : index
    %296 = vector.load %arg12[%c144_367, %c0_368] : memref<200x384xf32, #tpu.memory_space<vmem>>, vector<8x384xf32>
    tpu.vector_store %arg12[%c144_367, %c0_368], %295 {strides = array<i32>} : memref<200x384xf32, #tpu.memory_space<vmem>>, vector<8x384xf32>,
    %c0_369 = arith.constant 0 : index
    %c126_370 = arith.constant 126 : index
    %297 = vector.load %arg10[%c0_369, %c126_370] : memref<8x600xf32, #tpu.memory_space<vmem>>, vector<8x384xf32>
    %c152_371 = arith.constant 152 : index
    %c0_372 = arith.constant 0 : index
    %298 = vector.load %arg12[%c152_371, %c0_372] : memref<200x384xf32, #tpu.memory_space<vmem>>, vector<8x384xf32>
    tpu.vector_store %arg12[%c152_371, %c0_372], %297 {strides = array<i32>} : memref<200x384xf32, #tpu.memory_space<vmem>>, vector<8x384xf32>,
    %c0_373 = arith.constant 0 : index
    %c146_374 = arith.constant 146 : index
    %299 = vector.load %arg10[%c0_373, %c146_374] : memref<8x600xf32, #tpu.memory_space<vmem>>, vector<8x384xf32>
    %c160 = arith.constant 160 : index
    %c0_375 = arith.constant 0 : index
    %300 = vector.load %arg12[%c160, %c0_375] : memref<200x384xf32, #tpu.memory_space<vmem>>, vector<8x384xf32>
    tpu.vector_store %arg12[%c160, %c0_375], %299 {strides = array<i32>} : memref<200x384xf32, #tpu.memory_space<vmem>>, vector<8x384xf32>,
    %c0_376 = arith.constant 0 : index
    %c147_377 = arith.constant 147 : index
    %301 = vector.load %arg10[%c0_376, %c147_377] : memref<8x600xf32, #tpu.memory_space<vmem>>, vector<8x384xf32>
    %c168_378 = arith.constant 168 : index
    %c0_379 = arith.constant 0 : index
    %302 = vector.load %arg12[%c168_378, %c0_379] : memref<200x384xf32, #tpu.memory_space<vmem>>, vector<8x384xf32>
    tpu.vector_store %arg12[%c168_378, %c0_379], %301 {strides = array<i32>} : memref<200x384xf32, #tpu.memory_space<vmem>>, vector<8x384xf32>,
    %c0_380 = arith.constant 0 : index
    %c148_381 = arith.constant 148 : index
    %303 = vector.load %arg10[%c0_380, %c148_381] : memref<8x600xf32, #tpu.memory_space<vmem>>, vector<8x384xf32>
    %c176_382 = arith.constant 176 : index
    %c0_383 = arith.constant 0 : index
    %304 = vector.load %arg12[%c176_382, %c0_383] : memref<200x384xf32, #tpu.memory_space<vmem>>, vector<8x384xf32>
    tpu.vector_store %arg12[%c176_382, %c0_383], %303 {strides = array<i32>} : memref<200x384xf32, #tpu.memory_space<vmem>>, vector<8x384xf32>,
    %c0_384 = arith.constant 0 : index
    %c149_385 = arith.constant 149 : index
    %305 = vector.load %arg10[%c0_384, %c149_385] : memref<8x600xf32, #tpu.memory_space<vmem>>, vector<8x384xf32>
    %c184 = arith.constant 184 : index
    %c0_386 = arith.constant 0 : index
    %306 = vector.load %arg12[%c184, %c0_386] : memref<200x384xf32, #tpu.memory_space<vmem>>, vector<8x384xf32>
    tpu.vector_store %arg12[%c184, %c0_386], %305 {strides = array<i32>} : memref<200x384xf32, #tpu.memory_space<vmem>>, vector<8x384xf32>,
    %c0_387 = arith.constant 0 : index
    %c150_388 = arith.constant 150 : index
    %307 = vector.load %arg10[%c0_387, %c150_388] : memref<8x600xf32, #tpu.memory_space<vmem>>, vector<8x384xf32>
    %c192_389 = arith.constant 192 : index
    %c0_390 = arith.constant 0 : index
    %308 = vector.load %arg12[%c192_389, %c0_390] : memref<200x384xf32, #tpu.memory_space<vmem>>, vector<8x384xf32>
    tpu.vector_store %arg12[%c192_389, %c0_390], %307 {strides = array<i32>} : memref<200x384xf32, #tpu.memory_space<vmem>>, vector<8x384xf32>,
    %c0_391 = arith.constant 0 : index
    %c0_392 = arith.constant 0 : index
    %309 = vector.load %arg12[%c0_391, %c0_392] : memref<200x384xf32, #tpu.memory_space<vmem>>, vector<200x384xf32>
    %c0_393 = arith.constant 0 : index
    %c0_394 = arith.constant 0 : index
    %310 = vector.load %arg4[%c0_393, %c0_394] : memref<8x200xf32, #tpu.memory_space<vmem>>, vector<8x200xf32>
    %cst_395 = arith.constant dense<0.000000e+00> : vector<8x384xf32>
    %311 = tpu.matmul %310, %309, %cst_395 {dimension_numbers = #tpu.dot_dimension_numbers<[1], [0], [0], [1], [0, 0, 1, 1], [], []>} : vector<8x200xf32>, vector<200x384xf32>, vector<8x384xf32> -> vector<8x384xf32>
    %c0_396 = arith.constant 0 : index
    %c0_397 = arith.constant 0 : index
    %312 = vector.load %arg5[%c0_396, %c0_397] : memref<8x1xf32, #tpu.memory_space<vmem>>, vector<8x1xf32>
    %313 = vector.broadcast %312 : vector<8x1xf32> to vector<8x384xf32>
    %314 = arith.addf %311, %313 : vector<8x384xf32>
    %cst_398 = arith.constant 0.000000e+00 : f32
    %315 = vector.broadcast %cst_398 : f32 to vector<8x384xf32>
    %316 = arith.maximumf %314, %315 : vector<8x384xf32>
    %317 = vector.broadcast %4 : vector<1x384xf32> to vector<8x384xf32>
    %318 = arith.mulf %316, %317 : vector<8x384xf32>
    %c0_399 = arith.constant 0 : index
    %c100_400 = arith.constant 100 : index
    %319 = vector.load %arg11[%c0_399, %c100_400] : memref<8x600xf32, #tpu.memory_space<vmem>>, vector<8x384xf32>
    tpu.vector_store %arg11[%c0_399, %c100_400], %318 {strides = array<i32>} : memref<8x600xf32, #tpu.memory_space<vmem>>, vector<8x384xf32>,
    %c0_401 = arith.constant 0 : index
    %c50_402 = arith.constant 50 : index
    %320 = vector.load %arg11[%c0_401, %c50_402] : memref<8x600xf32, #tpu.memory_space<vmem>>, vector<8x384xf32>
    %c0_403 = arith.constant 0 : index
    %c0_404 = arith.constant 0 : index
    %321 = vector.load %arg12[%c0_403, %c0_404] : memref<200x384xf32, #tpu.memory_space<vmem>>, vector<8x384xf32>
    tpu.vector_store %arg12[%c0_403, %c0_404], %320 {strides = array<i32>} : memref<200x384xf32, #tpu.memory_space<vmem>>, vector<8x384xf32>,
    %c0_405 = arith.constant 0 : index
    %c51_406 = arith.constant 51 : index
    %322 = vector.load %arg11[%c0_405, %c51_406] : memref<8x600xf32, #tpu.memory_space<vmem>>, vector<8x384xf32>
    %c8_407 = arith.constant 8 : index
    %c0_408 = arith.constant 0 : index
    %323 = vector.load %arg12[%c8_407, %c0_408] : memref<200x384xf32, #tpu.memory_space<vmem>>, vector<8x384xf32>
    tpu.vector_store %arg12[%c8_407, %c0_408], %322 {strides = array<i32>} : memref<200x384xf32, #tpu.memory_space<vmem>>, vector<8x384xf32>,
    %c0_409 = arith.constant 0 : index
    %c52_410 = arith.constant 52 : index
    %324 = vector.load %arg11[%c0_409, %c52_410] : memref<8x600xf32, #tpu.memory_space<vmem>>, vector<8x384xf32>
    %c16_411 = arith.constant 16 : index
    %c0_412 = arith.constant 0 : index
    %325 = vector.load %arg12[%c16_411, %c0_412] : memref<200x384xf32, #tpu.memory_space<vmem>>, vector<8x384xf32>
    tpu.vector_store %arg12[%c16_411, %c0_412], %324 {strides = array<i32>} : memref<200x384xf32, #tpu.memory_space<vmem>>, vector<8x384xf32>,
    %c0_413 = arith.constant 0 : index
    %c53_414 = arith.constant 53 : index
    %326 = vector.load %arg11[%c0_413, %c53_414] : memref<8x600xf32, #tpu.memory_space<vmem>>, vector<8x384xf32>
    %c24_415 = arith.constant 24 : index
    %c0_416 = arith.constant 0 : index
    %327 = vector.load %arg12[%c24_415, %c0_416] : memref<200x384xf32, #tpu.memory_space<vmem>>, vector<8x384xf32>
    tpu.vector_store %arg12[%c24_415, %c0_416], %326 {strides = array<i32>} : memref<200x384xf32, #tpu.memory_space<vmem>>, vector<8x384xf32>,
    %c0_417 = arith.constant 0 : index
    %c54_418 = arith.constant 54 : index
    %328 = vector.load %arg11[%c0_417, %c54_418] : memref<8x600xf32, #tpu.memory_space<vmem>>, vector<8x384xf32>
    %c32_419 = arith.constant 32 : index
    %c0_420 = arith.constant 0 : index
    %329 = vector.load %arg12[%c32_419, %c0_420] : memref<200x384xf32, #tpu.memory_space<vmem>>, vector<8x384xf32>
    tpu.vector_store %arg12[%c32_419, %c0_420], %328 {strides = array<i32>} : memref<200x384xf32, #tpu.memory_space<vmem>>, vector<8x384xf32>,
    %c0_421 = arith.constant 0 : index
    %c74_422 = arith.constant 74 : index
    %330 = vector.load %arg11[%c0_421, %c74_422] : memref<8x600xf32, #tpu.memory_space<vmem>>, vector<8x384xf32>
    %c40_423 = arith.constant 40 : index
    %c0_424 = arith.constant 0 : index
    %331 = vector.load %arg12[%c40_423, %c0_424] : memref<200x384xf32, #tpu.memory_space<vmem>>, vector<8x384xf32>
    tpu.vector_store %arg12[%c40_423, %c0_424], %330 {strides = array<i32>} : memref<200x384xf32, #tpu.memory_space<vmem>>, vector<8x384xf32>,
    %c0_425 = arith.constant 0 : index
    %c75_426 = arith.constant 75 : index
    %332 = vector.load %arg11[%c0_425, %c75_426] : memref<8x600xf32, #tpu.memory_space<vmem>>, vector<8x384xf32>
    %c48_427 = arith.constant 48 : index
    %c0_428 = arith.constant 0 : index
    %333 = vector.load %arg12[%c48_427, %c0_428] : memref<200x384xf32, #tpu.memory_space<vmem>>, vector<8x384xf32>
    tpu.vector_store %arg12[%c48_427, %c0_428], %332 {strides = array<i32>} : memref<200x384xf32, #tpu.memory_space<vmem>>, vector<8x384xf32>,
    %c0_429 = arith.constant 0 : index
    %c76_430 = arith.constant 76 : index
    %334 = vector.load %arg11[%c0_429, %c76_430] : memref<8x600xf32, #tpu.memory_space<vmem>>, vector<8x384xf32>
    %c56_431 = arith.constant 56 : index
    %c0_432 = arith.constant 0 : index
    %335 = vector.load %arg12[%c56_431, %c0_432] : memref<200x384xf32, #tpu.memory_space<vmem>>, vector<8x384xf32>
    tpu.vector_store %arg12[%c56_431, %c0_432], %334 {strides = array<i32>} : memref<200x384xf32, #tpu.memory_space<vmem>>, vector<8x384xf32>,
    %c0_433 = arith.constant 0 : index
    %c77_434 = arith.constant 77 : index
    %336 = vector.load %arg11[%c0_433, %c77_434] : memref<8x600xf32, #tpu.memory_space<vmem>>, vector<8x384xf32>
    %c64_435 = arith.constant 64 : index
    %c0_436 = arith.constant 0 : index
    %337 = vector.load %arg12[%c64_435, %c0_436] : memref<200x384xf32, #tpu.memory_space<vmem>>, vector<8x384xf32>
    tpu.vector_store %arg12[%c64_435, %c0_436], %336 {strides = array<i32>} : memref<200x384xf32, #tpu.memory_space<vmem>>, vector<8x384xf32>,
    %c0_437 = arith.constant 0 : index
    %c78_438 = arith.constant 78 : index
    %338 = vector.load %arg11[%c0_437, %c78_438] : memref<8x600xf32, #tpu.memory_space<vmem>>, vector<8x384xf32>
    %c72_439 = arith.constant 72 : index
    %c0_440 = arith.constant 0 : index
    %339 = vector.load %arg12[%c72_439, %c0_440] : memref<200x384xf32, #tpu.memory_space<vmem>>, vector<8x384xf32>
    tpu.vector_store %arg12[%c72_439, %c0_440], %338 {strides = array<i32>} : memref<200x384xf32, #tpu.memory_space<vmem>>, vector<8x384xf32>,
    %c0_441 = arith.constant 0 : index
    %c98_442 = arith.constant 98 : index
    %340 = vector.load %arg11[%c0_441, %c98_442] : memref<8x600xf32, #tpu.memory_space<vmem>>, vector<8x384xf32>
    %c80_443 = arith.constant 80 : index
    %c0_444 = arith.constant 0 : index
    %341 = vector.load %arg12[%c80_443, %c0_444] : memref<200x384xf32, #tpu.memory_space<vmem>>, vector<8x384xf32>
    tpu.vector_store %arg12[%c80_443, %c0_444], %340 {strides = array<i32>} : memref<200x384xf32, #tpu.memory_space<vmem>>, vector<8x384xf32>,
    %c0_445 = arith.constant 0 : index
    %c99_446 = arith.constant 99 : index
    %342 = vector.load %arg11[%c0_445, %c99_446] : memref<8x600xf32, #tpu.memory_space<vmem>>, vector<8x384xf32>
    %c88_447 = arith.constant 88 : index
    %c0_448 = arith.constant 0 : index
    %343 = vector.load %arg12[%c88_447, %c0_448] : memref<200x384xf32, #tpu.memory_space<vmem>>, vector<8x384xf32>
    tpu.vector_store %arg12[%c88_447, %c0_448], %342 {strides = array<i32>} : memref<200x384xf32, #tpu.memory_space<vmem>>, vector<8x384xf32>,
    %c0_449 = arith.constant 0 : index
    %c100_450 = arith.constant 100 : index
    %344 = vector.load %arg11[%c0_449, %c100_450] : memref<8x600xf32, #tpu.memory_space<vmem>>, vector<8x384xf32>
    %c96_451 = arith.constant 96 : index
    %c0_452 = arith.constant 0 : index
    %345 = vector.load %arg12[%c96_451, %c0_452] : memref<200x384xf32, #tpu.memory_space<vmem>>, vector<8x384xf32>
    tpu.vector_store %arg12[%c96_451, %c0_452], %344 {strides = array<i32>} : memref<200x384xf32, #tpu.memory_space<vmem>>, vector<8x384xf32>,
    %c0_453 = arith.constant 0 : index
    %c101_454 = arith.constant 101 : index
    %346 = vector.load %arg11[%c0_453, %c101_454] : memref<8x600xf32, #tpu.memory_space<vmem>>, vector<8x384xf32>
    %c104_455 = arith.constant 104 : index
    %c0_456 = arith.constant 0 : index
    %347 = vector.load %arg12[%c104_455, %c0_456] : memref<200x384xf32, #tpu.memory_space<vmem>>, vector<8x384xf32>
    tpu.vector_store %arg12[%c104_455, %c0_456], %346 {strides = array<i32>} : memref<200x384xf32, #tpu.memory_space<vmem>>, vector<8x384xf32>,
    %c0_457 = arith.constant 0 : index
    %c102_458 = arith.constant 102 : index
    %348 = vector.load %arg11[%c0_457, %c102_458] : memref<8x600xf32, #tpu.memory_space<vmem>>, vector<8x384xf32>
    %c112_459 = arith.constant 112 : index
    %c0_460 = arith.constant 0 : index
    %349 = vector.load %arg12[%c112_459, %c0_460] : memref<200x384xf32, #tpu.memory_space<vmem>>, vector<8x384xf32>
    tpu.vector_store %arg12[%c112_459, %c0_460], %348 {strides = array<i32>} : memref<200x384xf32, #tpu.memory_space<vmem>>, vector<8x384xf32>,
    %c0_461 = arith.constant 0 : index
    %c122_462 = arith.constant 122 : index
    %350 = vector.load %arg11[%c0_461, %c122_462] : memref<8x600xf32, #tpu.memory_space<vmem>>, vector<8x384xf32>
    %c120_463 = arith.constant 120 : index
    %c0_464 = arith.constant 0 : index
    %351 = vector.load %arg12[%c120_463, %c0_464] : memref<200x384xf32, #tpu.memory_space<vmem>>, vector<8x384xf32>
    tpu.vector_store %arg12[%c120_463, %c0_464], %350 {strides = array<i32>} : memref<200x384xf32, #tpu.memory_space<vmem>>, vector<8x384xf32>,
    %c0_465 = arith.constant 0 : index
    %c123_466 = arith.constant 123 : index
    %352 = vector.load %arg11[%c0_465, %c123_466] : memref<8x600xf32, #tpu.memory_space<vmem>>, vector<8x384xf32>
    %c128_467 = arith.constant 128 : index
    %c0_468 = arith.constant 0 : index
    %353 = vector.load %arg12[%c128_467, %c0_468] : memref<200x384xf32, #tpu.memory_space<vmem>>, vector<8x384xf32>
    tpu.vector_store %arg12[%c128_467, %c0_468], %352 {strides = array<i32>} : memref<200x384xf32, #tpu.memory_space<vmem>>, vector<8x384xf32>,
    %c0_469 = arith.constant 0 : index
    %c124_470 = arith.constant 124 : index
    %354 = vector.load %arg11[%c0_469, %c124_470] : memref<8x600xf32, #tpu.memory_space<vmem>>, vector<8x384xf32>
    %c136_471 = arith.constant 136 : index
    %c0_472 = arith.constant 0 : index
    %355 = vector.load %arg12[%c136_471, %c0_472] : memref<200x384xf32, #tpu.memory_space<vmem>>, vector<8x384xf32>
    tpu.vector_store %arg12[%c136_471, %c0_472], %354 {strides = array<i32>} : memref<200x384xf32, #tpu.memory_space<vmem>>, vector<8x384xf32>,
    %c0_473 = arith.constant 0 : index
    %c125_474 = arith.constant 125 : index
    %356 = vector.load %arg11[%c0_473, %c125_474] : memref<8x600xf32, #tpu.memory_space<vmem>>, vector<8x384xf32>
    %c144_475 = arith.constant 144 : index
    %c0_476 = arith.constant 0 : index
    %357 = vector.load %arg12[%c144_475, %c0_476] : memref<200x384xf32, #tpu.memory_space<vmem>>, vector<8x384xf32>
    tpu.vector_store %arg12[%c144_475, %c0_476], %356 {strides = array<i32>} : memref<200x384xf32, #tpu.memory_space<vmem>>, vector<8x384xf32>,
    %c0_477 = arith.constant 0 : index
    %c126_478 = arith.constant 126 : index
    %358 = vector.load %arg11[%c0_477, %c126_478] : memref<8x600xf32, #tpu.memory_space<vmem>>, vector<8x384xf32>
    %c152_479 = arith.constant 152 : index
    %c0_480 = arith.constant 0 : index
    %359 = vector.load %arg12[%c152_479, %c0_480] : memref<200x384xf32, #tpu.memory_space<vmem>>, vector<8x384xf32>
    tpu.vector_store %arg12[%c152_479, %c0_480], %358 {strides = array<i32>} : memref<200x384xf32, #tpu.memory_space<vmem>>, vector<8x384xf32>,
    %c0_481 = arith.constant 0 : index
    %c146_482 = arith.constant 146 : index
    %360 = vector.load %arg11[%c0_481, %c146_482] : memref<8x600xf32, #tpu.memory_space<vmem>>, vector<8x384xf32>
    %c160_483 = arith.constant 160 : index
    %c0_484 = arith.constant 0 : index
    %361 = vector.load %arg12[%c160_483, %c0_484] : memref<200x384xf32, #tpu.memory_space<vmem>>, vector<8x384xf32>
    tpu.vector_store %arg12[%c160_483, %c0_484], %360 {strides = array<i32>} : memref<200x384xf32, #tpu.memory_space<vmem>>, vector<8x384xf32>,
    %c0_485 = arith.constant 0 : index
    %c147_486 = arith.constant 147 : index
    %362 = vector.load %arg11[%c0_485, %c147_486] : memref<8x600xf32, #tpu.memory_space<vmem>>, vector<8x384xf32>
    %c168_487 = arith.constant 168 : index
    %c0_488 = arith.constant 0 : index
    %363 = vector.load %arg12[%c168_487, %c0_488] : memref<200x384xf32, #tpu.memory_space<vmem>>, vector<8x384xf32>
    tpu.vector_store %arg12[%c168_487, %c0_488], %362 {strides = array<i32>} : memref<200x384xf32, #tpu.memory_space<vmem>>, vector<8x384xf32>,
    %c0_489 = arith.constant 0 : index
    %c148_490 = arith.constant 148 : index
    %364 = vector.load %arg11[%c0_489, %c148_490] : memref<8x600xf32, #tpu.memory_space<vmem>>, vector<8x384xf32>
    %c176_491 = arith.constant 176 : index
    %c0_492 = arith.constant 0 : index
    %365 = vector.load %arg12[%c176_491, %c0_492] : memref<200x384xf32, #tpu.memory_space<vmem>>, vector<8x384xf32>
    tpu.vector_store %arg12[%c176_491, %c0_492], %364 {strides = array<i32>} : memref<200x384xf32, #tpu.memory_space<vmem>>, vector<8x384xf32>,
    %c0_493 = arith.constant 0 : index
    %c149_494 = arith.constant 149 : index
    %366 = vector.load %arg11[%c0_493, %c149_494] : memref<8x600xf32, #tpu.memory_space<vmem>>, vector<8x384xf32>
    %c184_495 = arith.constant 184 : index
    %c0_496 = arith.constant 0 : index
    %367 = vector.load %arg12[%c184_495, %c0_496] : memref<200x384xf32, #tpu.memory_space<vmem>>, vector<8x384xf32>
    tpu.vector_store %arg12[%c184_495, %c0_496], %366 {strides = array<i32>} : memref<200x384xf32, #tpu.memory_space<vmem>>, vector<8x384xf32>,
    %c0_497 = arith.constant 0 : index
    %c150_498 = arith.constant 150 : index
    %368 = vector.load %arg11[%c0_497, %c150_498] : memref<8x600xf32, #tpu.memory_space<vmem>>, vector<8x384xf32>
    %c192_499 = arith.constant 192 : index
    %c0_500 = arith.constant 0 : index
    %369 = vector.load %arg12[%c192_499, %c0_500] : memref<200x384xf32, #tpu.memory_space<vmem>>, vector<8x384xf32>
    tpu.vector_store %arg12[%c192_499, %c0_500], %368 {strides = array<i32>} : memref<200x384xf32, #tpu.memory_space<vmem>>, vector<8x384xf32>,
    %c0_501 = arith.constant 0 : index
    %c0_502 = arith.constant 0 : index
    %370 = vector.load %arg12[%c0_501, %c0_502] : memref<200x384xf32, #tpu.memory_space<vmem>>, vector<200x384xf32>
    %c0_503 = arith.constant 0 : index
    %c0_504 = arith.constant 0 : index
    %371 = vector.load %arg6[%c0_503, %c0_504] : memref<1x200xf32, #tpu.memory_space<vmem>>, vector<1x200xf32>
    %cst_505 = arith.constant dense<0.000000e+00> : vector<1x384xf32>
    %372 = tpu.matmul %371, %370, %cst_505 {dimension_numbers = #tpu.dot_dimension_numbers<[1], [0], [0], [1], [0, 0, 1, 1], [], []>} : vector<1x200xf32>, vector<200x384xf32>, vector<1x384xf32> -> vector<1x384xf32>
    %c0_506 = arith.constant 0 : index
    %c0_507 = arith.constant 0 : index
    %373 = vector.load %arg7[%c0_506, %c0_507] : memref<1x1xf32, #tpu.memory_space<vmem>>, vector<1x1xf32>
    %374 = vector.broadcast %373 : vector<1x1xf32> to vector<1x384xf32>
    %375 = arith.addf %372, %374 : vector<1x384xf32>
    %376 = vector.shape_cast %375 : vector<1x384xf32> to vector<1x1x384xf32>
    %c0_508 = arith.constant 0 : index
    %c0_509 = arith.constant 0 : index
    %c0_510 = arith.constant 0 : index
    %377 = vector.load %arg9[%c0_508, %c0_509, %c0_510] : memref<1x1x384xf32, #tpu.memory_space<vmem>>, vector<1x1x384xf32>
    tpu.vector_store %arg9[%c0_508, %c0_509, %c0_510], %376 {strides = array<i32>} : memref<1x1x384xf32, #tpu.memory_space<vmem>>, vector<1x1x384xf32>,
    return
  }
  func.func @transform_0(%arg0: i32) -> (i32, i32, i32) {
    %c0_i32 = arith.constant 0 : i32
    %c0_i32_0 = arith.constant 0 : i32
    %c0_i32_1 = arith.constant 0 : i32
    return %arg0, %c0_i32, %c0_i32_0 : i32, i32, i32
  }
  func.func @transform_1(%arg0: i32) -> (i32, i32) {
    %c0_i32 = arith.constant 0 : i32
    %c0_i32_0 = arith.constant 0 : i32
    %c0_i32_1 = arith.constant 0 : i32
    return %c0_i32, %c0_i32_0 : i32, i32
  }
  func.func @transform_2(%arg0: i32) -> (i32, i32) {
    %c0_i32 = arith.constant 0 : i32
    %c0_i32_0 = arith.constant 0 : i32
    %c0_i32_1 = arith.constant 0 : i32
    return %c0_i32, %c0_i32_0 : i32, i32
  }
  func.func @transform_3(%arg0: i32) -> (i32, i32) {
    %c0_i32 = arith.constant 0 : i32
    %c0_i32_0 = arith.constant 0 : i32
    %c0_i32_1 = arith.constant 0 : i32
    return %c0_i32, %c0_i32_0 : i32, i32
  }
  func.func @transform_4(%arg0: i32) -> (i32, i32) {
    %c0_i32 = arith.constant 0 : i32
    %c0_i32_0 = arith.constant 0 : i32
    %c0_i32_1 = arith.constant 0 : i32
    return %c0_i32, %c0_i32_0 : i32, i32
  }
  func.func @transform_5(%arg0: i32) -> (i32, i32) {
    %c0_i32 = arith.constant 0 : i32
    %c0_i32_0 = arith.constant 0 : i32
    %c0_i32_1 = arith.constant 0 : i32
    return %c0_i32, %c0_i32_0 : i32, i32
  }
  func.func @transform_6(%arg0: i32) -> (i32, i32) {
    %c0_i32 = arith.constant 0 : i32
    %c0_i32_0 = arith.constant 0 : i32
    %c0_i32_1 = arith.constant 0 : i32
    return %c0_i32, %c0_i32_0 : i32, i32
  }
  func.func @transform_7(%arg0: i32) -> (i32, i32) {
    %c0_i32 = arith.constant 0 : i32
    %c0_i32_0 = arith.constant 0 : i32
    %c0_i32_1 = arith.constant 0 : i32
    return %c0_i32, %c0_i32_0 : i32, i32
  }
  func.func @transform_8(%arg0: i32) -> (i32, i32, i32) {
    %c0_i32 = arith.constant 0 : i32
    %c0_i32_0 = arith.constant 0 : i32
    %c0_i32_1 = arith.constant 0 : i32
    return %arg0, %c0_i32, %c0_i32_0 : i32, i32, i32
  }
}

</mosaic_0001>

<llo_original>
// kernel: srcnn_forward.1
$region0: #{srcnn_forward.1}
  #allocation0 [shape = 'u32[]', space=smem, size = 0x4, offset = 0x4, fixed_abs, tag = 'smem constant byte address 0x4 - core index']
  #allocation1 [shape = 'u32[144,128]{1,0:T(1,128)}', space=vmem, size = 0x12000, scoped, tag = 'internal scratch']
  #allocation2 [shape = 'f32[8,600]{1,0:T(8,128)}', space=vmem, size = 0x5000, scoped, tag = 'scratch operand']
  #allocation3 [shape = 'f32[8,600]{1,0:T(8,128)}', space=vmem, size = 0x5000, scoped, tag = 'scratch operand']
  #allocation4 [shape = 'f32[200,384]{1,0:T(8,128)}', space=vmem, size = 0x4b000, scoped, tag = 'scratch operand']
  #allocation5 [shape = 'f32[1,1]{1,0:T(1,128)S(1)}', space=vmem, size = 0x200, scoped, tag = 'scoped memory for srcnn_forward.1']
  %s0 = inlined_call_operand.vmem [shape: f32[2,1,600], index: 0, kind: input, shape index: {}]
  %s1 = inlined_call_operand.vmem [shape: f32[8,81], index: 1, kind: input, shape index: {}]
  %s2 = inlined_call_operand.vmem [shape: f32[8,1], index: 2, kind: input, shape index: {}]
  %s3 = inlined_call_operand.vmem [shape: f32[8,200], index: 3, kind: input, shape index: {}]
  %s4 = inlined_call_operand.vmem [shape: f32[8,1], index: 4, kind: input, shape index: {}]
  %s5 = inlined_call_operand.vmem [shape: f32[1,200], index: 5, kind: input, shape index: {}]
  %s6 = inlined_call_operand.<no memory space> [shape: f32[1,1], index: 6, kind: input, shape index: {}]
  %s7 = inlined_call_operand.vmem [shape: f32[1,384], index: 7, kind: input, shape index: {}]
  %s8 = inlined_call_operand.vmem [shape: f32[2,1,384], index: 8, kind: output, shape index: {}]
  %s9 = sld [smem:[#allocation0]]
  $region65: #{srcnn_forward.1} parent=0
    _
  %s11 = ssub.s32 1, %s9
  %s12 = scalar_select 0, %s11, %s9
  %v13 = vstv %s6
  %14 = vst [vmem:[#allocation5] sm:$0x1] %v13
  loop: start=0, step=1, limit=4
  $region2: #{srcnn_forward.1} parent=0 // loop_pre_header
    _
  $region3: #{srcnn_forward.1} parent=0 // loop_header
    %s16 = sphi 0, %s20
    %p17 = scmp.ge.s32.totalorder %s16, 4
    %s26 = sphi 0, %s28
    %s29 = sphi 0, %s26
    %s30 = sphi 0, %s29
    %s46 = sphi 0, %s30
    %s50 = sphi 0, %s50
    %s52 = sphi 0, %s50
    %s53 = sphi 0, %s52
    %s67 = sphi 0, %s53
    %s71 = sphi 0, %s71
    %s73 = sphi 0, %s71
    %s74 = sphi 0, %s73
    %s88 = sphi 0, %s74
    %s92 = sphi 0, %s92
    %s94 = sphi 0, %s92
    %s95 = sphi 0, %s94
    %s109 = sphi 0, %s95
    %s113 = sphi 0, %s113
    %s115 = sphi 0, %s113
    %s116 = sphi 0, %s115
    %s130 = sphi 0, %s116
    %s134 = sphi 0, %s134
    %s136 = sphi 0, %s134
    %s137 = sphi 0, %s136
    %s151 = sphi 0, %s137
    %s155 = sphi 0, %s155
    %s157 = sphi 0, %s155
    %s158 = sphi 0, %s157
    %s172 = sphi 0, %s158
    %s176 = sphi 0, %s176
    %s178 = sphi 0, %s176
    %s179 = sphi 0, %s178
    %s193 = sphi 0, %s179
    %s199 = sphi 0, %s201
    %s202 = sphi 0, %s199
    %s203 = sphi 0, %s202
    %s219 = sphi 0, %s203
  $region4: #{srcnn_forward.1} parent=0 // loop_header_branch
    %19 = sbr.rel (%p17) target = $region8
  $region5: #{srcnn_forward.1} parent=0 // loop_body
    %s21 = ssub.s32 %s16, 1
    %s22 = ssub.s32 %s16, 2
    %s23 = sadd.s32 %s16, 1
    %s24 = ssub.s32 %s16, %s23
    %p25 = scmp.eq.s32.totalorder %s24, 0
    %s27 = sadd.s32 %s26, 1
    %s28 = scalar_select %p25, %s26, %s27
    %p31 = pneg %p25
    %p32 = scmp.eq.s32.totalorder %s16, 1
    %p33 = por %p31, %p32
    %p34 = scmp.ne.s32.totalorder %s26, %s29
    %p35 = scmp.eq.s32.totalorder %s16, 0
    %p36 = por %p34, %p35
    %p37 = scmp.ne.s32.totalorder %s26, %s29
    %p38 = scmp.eq.s32.totalorder %s21, 1
    %p39 = por %p37, %p38
    %p40 = scmp.ne.s32.totalorder %s29, %s30
    %p41 = scmp.eq.s32.totalorder %s21, 0
    %p42 = por %p40, %p41
    %p43 = scmp.ne.s32.totalorder %s29, %s30
    %p44 = scmp.eq.s32.totalorder %s22, 1
    %p45 = por %p43, %p44
    %p47 = scmp.ne.s32.totalorder %s30, %s46
    %p48 = scmp.eq.s32.totalorder %s22, 0
    %p49 = por %p47, %p48
    %s51 = sadd.s32 %s50, 1
    %p54 = scmp.eq.s32.totalorder %s16, 1
    %p55 = scmp.ne.s32.totalorder %s50, %s52
    %p56 = scmp.eq.s32.totalorder %s16, 0
    %p57 = por %p55, %p56
    %p58 = scmp.ne.s32.totalorder %s50, %s52
    %p59 = scmp.eq.s32.totalorder %s21, 1
    %p60 = por %p58, %p59
    %p61 = scmp.ne.s32.totalorder %s52, %s53
    %p62 = scmp.eq.s32.totalorder %s21, 0
    %p63 = por %p61, %p62
    %p64 = scmp.ne.s32.totalorder %s52, %s53
    %p65 = scmp.eq.s32.totalorder %s22, 1
    %p66 = por %p64, %p65
    %p68 = scmp.ne.s32.totalorder %s53, %s67
    %p69 = scmp.eq.s32.totalorder %s22, 0
    %p70 = por %p68, %p69
    %s72 = sadd.s32 %s71, 1
    %p75 = scmp.eq.s32.totalorder %s16, 1
    %p76 = scmp.ne.s32.totalorder %s71, %s73
    %p77 = scmp.eq.s32.totalorder %s16, 0
    %p78 = por %p76, %p77
    %p79 = scmp.ne.s32.totalorder %s71, %s73
    %p80 = scmp.eq.s32.totalorder %s21, 1
    %p81 = por %p79, %p80
    %p82 = scmp.ne.s32.totalorder %s73, %s74
    %p83 = scmp.eq.s32.totalorder %s21, 0
    %p84 = por %p82, %p83
    %p85 = scmp.ne.s32.totalorder %s73, %s74
    %p86 = scmp.eq.s32.totalorder %s22, 1
    %p87 = por %p85, %p86
    %p89 = scmp.ne.s32.totalorder %s74, %s88
    %p90 = scmp.eq.s32.totalorder %s22, 0
    %p91 = por %p89, %p90
    %s93 = sadd.s32 %s92, 1
    %p96 = scmp.eq.s32.totalorder %s16, 1
    %p97 = scmp.ne.s32.totalorder %s92, %s94
    %p98 = scmp.eq.s32.totalorder %s16, 0
    %p99 = por %p97, %p98
    %p100 = scmp.ne.s32.totalorder %s92, %s94
    %p101 = scmp.eq.s32.totalorder %s21, 1
    %p102 = por %p100, %p101
    %p103 = scmp.ne.s32.totalorder %s94, %s95
    %p104 = scmp.eq.s32.totalorder %s21, 0
    %p105 = por %p103, %p104
    %p106 = scmp.ne.s32.totalorder %s94, %s95
    %p107 = scmp.eq.s32.totalorder %s22, 1
    %p108 = por %p106, %p107
    %p110 = scmp.ne.s32.totalorder %s95, %s109
    %p111 = scmp.eq.s32.totalorder %s22, 0
    %p112 = por %p110, %p111
    %s114 = sadd.s32 %s113, 1
    %p117 = scmp.eq.s32.totalorder %s16, 1
    %p118 = scmp.ne.s32.totalorder %s113, %s115
    %p119 = scmp.eq.s32.totalorder %s16, 0
    %p120 = por %p118, %p119
    %p121 = scmp.ne.s32.totalorder %s113, %s115
    %p122 = scmp.eq.s32.totalorder %s21, 1
    %p123 = por %p121, %p122
    %p124 = scmp.ne.s32.totalorder %s115, %s116
    %p125 = scmp.eq.s32.totalorder %s21, 0
    %p126 = por %p124, %p125
    %p127 = scmp.ne.s32.totalorder %s115, %s116
    %p128 = scmp.eq.s32.totalorder %s22, 1
    %p129 = por %p127, %p128
    %p131 = scmp.ne.s32.totalorder %s116, %s130
    %p132 = scmp.eq.s32.totalorder %s22, 0
    %p133 = por %p131, %p132
    %s135 = sadd.s32 %s134, 1
    %p138 = scmp.eq.s32.totalorder %s16, 1
    %p139 = scmp.ne.s32.totalorder %s134, %s136
    %p140 = scmp.eq.s32.totalorder %s16, 0
    %p141 = por %p139, %p140
    %p142 = scmp.ne.s32.totalorder %s134, %s136
    %p143 = scmp.eq.s32.totalorder %s21, 1
    %p144 = por %p142, %p143
    %p145 = scmp.ne.s32.totalorder %s136, %s137
    %p146 = scmp.eq.s32.totalorder %s21, 0
    %p147 = por %p145, %p146
    %p148 = scmp.ne.s32.totalorder %s136, %s137
    %p149 = scmp.eq.s32.totalorder %s22, 1
    %p150 = por %p148, %p149
    %p152 = scmp.ne.s32.totalorder %s137, %s151
    %p153 = scmp.eq.s32.totalorder %s22, 0
    %p154 = por %p152, %p153
    %s156 = sadd.s32 %s155, 1
    %p159 = scmp.eq.s32.totalorder %s16, 1
    %p160 = scmp.ne.s32.totalorder %s155, %s157
    %p161 = scmp.eq.s32.totalorder %s16, 0
    %p162 = por %p160, %p161
    %p163 = scmp.ne.s32.totalorder %s155, %s157
    %p164 = scmp.eq.s32.totalorder %s21, 1
    %p165 = por %p163, %p164
    %p166 = scmp.ne.s32.totalorder %s157, %s158
    %p167 = scmp.eq.s32.totalorder %s21, 0
    %p168 = por %p166, %p167
    %p169 = scmp.ne.s32.totalorder %s157, %s158
    %p170 = scmp.eq.s32.totalorder %s22, 1
    %p171 = por %p169, %p170
    %p173 = scmp.ne.s32.totalorder %s158, %s172
    %p174 = scmp.eq.s32.totalorder %s22, 0
    %p175 = por %p173, %p174
    %s177 = sadd.s32 %s176, 1
    %p180 = scmp.eq.s32.totalorder %s16, 1
    %p181 = scmp.ne.s32.totalorder %s176, %s178
    %p182 = scmp.eq.s32.totalorder %s16, 0
    %p183 = por %p181, %p182
    %p184 = scmp.ne.s32.totalorder %s176, %s178
    %p185 = scmp.eq.s32.totalorder %s21, 1
    %p186 = por %p184, %p185
    %p187 = scmp.ne.s32.totalorder %s178, %s179
    %p188 = scmp.eq.s32.totalorder %s21, 0
    %p189 = por %p187, %p188
    %p190 = scmp.ne.s32.totalorder %s178, %s179
    %p191 = scmp.eq.s32.totalorder %s22, 1
    %p192 = por %p190, %p191
    %p194 = scmp.ne.s32.totalorder %s179, %s193
    %p195 = scmp.eq.s32.totalorder %s22, 0
    %p196 = por %p194, %p195
    %s197 = ssub.s32 %s16, %s23
    %p198 = scmp.eq.s32.totalorder %s197, 0
    %s200 = sadd.s32 %s199, 1
    %s201 = scalar_select %p198, %s199, %s200
    %p204 = pneg %p198
    %p205 = scmp.eq.s32.totalorder %s16, 1
    %p206 = por %p204, %p205
    %p207 = scmp.ne.s32.totalorder %s199, %s202
    %p208 = scmp.eq.s32.totalorder %s16, 0
    %p209 = por %p207, %p208
    %p210 = scmp.ne.s32.totalorder %s199, %s202
    %p211 = scmp.eq.s32.totalorder %s21, 1
    %p212 = por %p210, %p211
    %p213 = scmp.ne.s32.totalorder %s202, %s203
    %p214 = scmp.eq.s32.totalorder %s21, 0
    %p215 = por %p213, %p214
    %p216 = scmp.ne.s32.totalorder %s202, %s203
    %p217 = scmp.eq.s32.totalorder %s22, 1
    %p218 = por %p216, %p217
    %p220 = scmp.ne.s32.totalorder %s203, %s219
    %p221 = scmp.eq.s32.totalorder %s22, 0
    %p222 = por %p220, %p221
    %p223 = scmp.le.s32.totalorder 1, %s16
    %p224 = scmp.lt.s32.totalorder %s16, 3
    %p225 = pnand %p223, %p224
    %p226 = pneg %p225
    // Predicated region
    $region9: #{srcnn_forward.1} parent=5 // pred_check
      _
    $region10: #{srcnn_forward.1} parent=5 // pred_check_branch
      %228 = sbr.rel (%p225) target = $region12
    $region11: #{srcnn_forward.1} parent=5 // pred_region
      %s229 = ssub.s32 %s16, 1
      // Predicated region
      $region13: #{srcnn_forward.1} parent=11 // pred_check
        %p230 = pneg %p63
      $region14: #{srcnn_forward.1} parent=11 // pred_check_branch
        %232 = sbr.rel (%p230) target = $region16
      $region15: #{srcnn_forward.1} parent=11 // pred_region
        _
      $region16: #{srcnn_forward.1} parent=11 // pred_fallthru
        _
      // Predicated region
      $region17: #{srcnn_forward.1} parent=11 // pred_check
        %p233 = pneg %p84
      $region18: #{srcnn_forward.1} parent=11 // pred_check_branch
        %235 = sbr.rel (%p233) target = $region20
      $region19: #{srcnn_forward.1} parent=11 // pred_region
        _
      $region20: #{srcnn_forward.1} parent=11 // pred_fallthru
        _
      // Predicated region
      $region21: #{srcnn_forward.1} parent=11 // pred_check
        %p236 = pneg %p105
      $region22: #{srcnn_forward.1} parent=11 // pred_check_branch
        %238 = sbr.rel (%p236) target = $region24
      $region23: #{srcnn_forward.1} parent=11 // pred_region
        _
      $region24: #{srcnn_forward.1} parent=11 // pred_fallthru
        _
      // Predicated region
      $region25: #{srcnn_forward.1} parent=11 // pred_check
        %p239 = pneg %p126
      $region26: #{srcnn_forward.1} parent=11 // pred_check_branch
        %241 = sbr.rel (%p239) target = $region28
      $region27: #{srcnn_forward.1} parent=11 // pred_region
        _
      $region28: #{srcnn_forward.1} parent=11 // pred_fallthru
        _
      // Predicated region
      $region29: #{srcnn_forward.1} parent=11 // pred_check
        %p242 = pneg %p147
      $region30: #{srcnn_forward.1} parent=11 // pred_check_branch
        %244 = sbr.rel (%p242) target = $region32
      $region31: #{srcnn_forward.1} parent=11 // pred_region
        _
      $region32: #{srcnn_forward.1} parent=11 // pred_fallthru
        _
      // Predicated region
      $region33: #{srcnn_forward.1} parent=11 // pred_check
        %p245 = pneg %p168
      $region34: #{srcnn_forward.1} parent=11 // pred_check_branch
        %247 = sbr.rel (%p245) target = $region36
      $region35: #{srcnn_forward.1} parent=11 // pred_region
        _
      $region36: #{srcnn_forward.1} parent=11 // pred_fallthru
        _
      // Predicated region
      $region37: #{srcnn_forward.1} parent=11 // pred_check
        %p248 = pneg %p189
      $region38: #{srcnn_forward.1} parent=11 // pred_check_branch
        %250 = sbr.rel (%p248) target = $region40
      $region39: #{srcnn_forward.1} parent=11 // pred_region
        _
      $region40: #{srcnn_forward.1} parent=11 // pred_fallthru
        _
    $region12: #{srcnn_forward.1} parent=5 // pred_fallthru
      _
    %p251 = scmp.lt.s32.totalorder %s16, 2
    // Predicated region
    $region41: #{srcnn_forward.1} parent=5 // pred_check
      %p252 = pneg %p251
    $region42: #{srcnn_forward.1} parent=5 // pred_check_branch
      %254 = sbr.rel (%p252) target = $region44
    $region43: #{srcnn_forward.1} parent=5 // pred_region
      // Predicated region
      $region45: #{srcnn_forward.1} parent=43 // pred_check
        %p255 = pneg %p36
      $region46: #{srcnn_forward.1} parent=43 // pred_check_branch
        %257 = sbr.rel (%p255) target = $region48
      $region47: #{srcnn_forward.1} parent=43 // pred_region
        %p258 = scmp.lt.s32.totalorder %s16, 1
        %s259 = scalar_select %p258, %s16, 1
        %s260 = smul.addr %s259, 5
        %s261 = scalar_lea.vmem %s0, %s260
      $region48: #{srcnn_forward.1} parent=43 // pred_fallthru
        _
    $region44: #{srcnn_forward.1} parent=5 // pred_fallthru
      _
    %p262 = scmp.le.s32.totalorder 1, %s16
    %p263 = scmp.lt.s32.totalorder %s16, 3
    %p264 = pnand %p262, %p263
    %p265 = pneg %p264
    // Predicated region
    $region49: #{srcnn_forward.1} parent=5 // pred_check
      _
    $region50: #{srcnn_forward.1} parent=5 // pred_check_branch
      %267 = sbr.rel (%p264) target = $region52
    $region51: #{srcnn_forward.1} parent=5 // pred_region
      %s268 = ssub.s32 %s16, 1
      %p269 = scmp.lt.s32.totalorder %s21, 1
      %s270 = scalar_select %p269, %s21, 1
      %s271 = smul.addr %s270, 5
      %s272 = scalar_lea.vmem %s0, %s271
      %p273 = pneg %p42
      %p274 = pneg %p39
      %p275 = pneg %p63
      %p276 = pneg %p60
      %p277 = pneg %p84
      %p278 = pneg %p81
      %p279 = pneg %p105
      %p280 = pneg %p102
      %p281 = pneg %p126
      %p282 = pneg %p123
      %p283 = pneg %p147
      %p284 = pneg %p144
      %p285 = pneg %p168
      %p286 = pneg %p165
      %p287 = pneg %p189
      %p288 = pneg %p186
      %p289 = pneg %p215
      %p290 = pneg %p212
      %p291 = scmp.lt.s32.totalorder %s21, 1
      %s292 = scalar_select %p291, %s21, 1
      %s293 = smul.addr %s292, 3
      %s294 = scalar_lea.vmem %s8, %s293
      %p295 = scmp.lt.s32.totalorder %s21, 1
      %s296 = scalar_select %p295, %s21, 1
      %s297 = smul.addr %s296, 5
      %s298 = scalar_lea.vmem %s0, %s297
      %p299 = scmp.lt.s32.totalorder %s21, 1
      %s300 = scalar_select %p299, %s21, 1
      %s301 = smul.addr %s300, 3
      %s302 = scalar_lea.vmem %s8, %s301
      %303 = vst [vmem:[#allocation2] sm:$0xff] 0.0
      %304 = vst [vmem:[#allocation2 + $0x8] sm:$0xff] 0.0
      %305 = vst [vmem:[#allocation2 + $0x10] sm:$0xff] 0.0
      %306 = vst [vmem:[#allocation2 + $0x18] sm:$0xff] 0.0
      %vm307 = vcmask 719872
      %308 = vst.msk [vmem:[#allocation2 + $0x20] sm:$0xff] %vm307, 0.0
      %309 = vst [vmem:[#allocation3] sm:$0xff] 0.0
      %310 = vst [vmem:[#allocation3 + $0x8] sm:$0xff] 0.0
      %311 = vst [vmem:[#allocation3 + $0x10] sm:$0xff] 0.0
      %312 = vst [vmem:[#allocation3 + $0x18] sm:$0xff] 0.0
      %313 = vst.msk [vmem:[#allocation3 + $0x20] sm:$0xff] %vm307, 0.0
      %v314 = vld [vmem:[%s7] sm:$0x7]
      %v315 = vld [vmem:[%s298] sm:$0x7]
      %v316 = vlaneseq
      %vm317 = vcmp.ge.s32.totalorder %v316, 0
      %vm318 = vcmp.lt.s32.totalorder %v316, 384
      %vm319 = vmand %vm317, %vm318
      %320 = vst.msk [vmem:[#allocation4] ss:$8 sm:$0x7] %vm319, %v315
      %321 = vst.msk [vmem:[#allocation4] ss:$8 sm:$0x0] %vm319, %v315
      %v322 = vld [vmem:[%s298] sm:$0xf]
      %324 = vrot.lane.b32.xlu0 %v322, 127
      %v325 = vpop.permute.xlu0 %324
      %v326 = vrot.slane %v325, 1
      %vm327 = vcmask 1039360
      %v328 = vsel %vm327, %v325, %v326
      %s330 = scalar_lea.vmem [#allocation4], 1
      %331 = vst.msk [vmem:[%s330] ss:$8 sm:$0x7] %vm319, %v328
      %332 = vst.msk [vmem:[%s330] ss:$8 sm:$0x0] %vm319, %v328
      %v333 = vld [vmem:[%s298] sm:$0xf]
      %335 = vrot.lane.b32.xlu0 %v333, 126
      %v336 = vpop.permute.xlu0 %335
      %v337 = vrot.slane %v336, 1
      %vm338 = vcmask 1031168
      %v339 = vsel %vm338, %v336, %v337
      %s341 = scalar_lea.vmem [#allocation4], 2
      %342 = vst.msk [vmem:[%s341] ss:$8 sm:$0x7] %vm319, %v339
      %343 = vst.msk [vmem:[%s341] ss:$8 sm:$0x0] %vm319, %v339
      %v344 = vld [vmem:[%s298] sm:$0xf]
      %346 = vrot.lane.b32.xlu0 %v344, 125
      %v347 = vpop.permute.xlu0 %346
      %v348 = vrot.slane %v347, 1
      %vm349 = vcmask 1022976
      %v350 = vsel %vm349, %v347, %v348
      %s352 = scalar_lea.vmem [#allocation4], 3
      %353 = vst.msk [vmem:[%s352] ss:$8 sm:$0x7] %vm319, %v350
      %354 = vst.msk [vmem:[%s352] ss:$8 sm:$0x0] %vm319, %v350
      %v355 = vld [vmem:[%s298] sm:$0xf]
      %357 = vrot.lane.b32.xlu0 %v355, 124
      %v358 = vpop.permute.xlu0 %357
      %v359 = vrot.slane %v358, 1
      %vm360 = vcmask 1014784
      %v361 = vsel %vm360, %v358, %v359
      %s363 = scalar_lea.vmem [#allocation4], 4
      %364 = vst.msk [vmem:[%s363] ss:$8 sm:$0x7] %vm319, %v361
      %365 = vst.msk [vmem:[%s363] ss:$8 sm:$0x0] %vm319, %v361
      %v366 = vld [vmem:[%s298] sm:$0xf]
      %368 = vrot.lane.b32.xlu0 %v366, 123
      %v369 = vpop.permute.xlu0 %368
      %v370 = vrot.slane %v369, 1
      %vm371 = vcmask 1006592
      %v372 = vsel %vm371, %v369, %v370
      %s374 = scalar_lea.vmem [#allocation4], 5
      %375 = vst.msk [vmem:[%s374] ss:$8 sm:$0x7] %vm319, %v372
      %376 = vst.msk [vmem:[%s374] ss:$8 sm:$0x0] %vm319, %v372
      %v377 = vld [vmem:[%s298] sm:$0xf]
      %379 = vrot.lane.b32.xlu0 %v377, 122
      %v380 = vpop.permute.xlu0 %379
      %v381 = vrot.slane %v380, 1
      %vm382 = vcmask 998400
      %v383 = vsel %vm382, %v380, %v381
      %s385 = scalar_lea.vmem [#allocation4], 6
      %386 = vst.msk [vmem:[%s385] ss:$8 sm:$0x7] %vm319, %v383
      %387 = vst.msk [vmem:[%s385] ss:$8 sm:$0x0] %vm319, %v383
      %v388 = vld [vmem:[%s298] sm:$0xf]
      %390 = vrot.lane.b32.xlu0 %v388, 121
      %v391 = vpop.permute.xlu0 %390
      %v392 = vrot.slane %v391, 1
      %vm393 = vcmask 990208
      %v394 = vsel %vm393, %v391, %v392
      %s396 = scalar_lea.vmem [#allocation4], 7
      %397 = vst.msk [vmem:[%s396] ss:$8 sm:$0x7] %vm319, %v394
      %398 = vst.msk [vmem:[%s396] ss:$8 sm:$0x0] %vm319, %v394
      %v399 = vld [vmem:[%s298] sm:$0xf]
      %401 = vrot.lane.b32.xlu0 %v399, 120
      %v402 = vpop.permute.xlu0 %401
      %v403 = vrot.slane %v402, 1
      %vm404 = vcmask 982016
      %v405 = vsel %vm404, %v402, %v403
      %s407 = scalar_lea.vmem [#allocation4], 24
      %408 = vst.msk [vmem:[%s407] ss:$8 sm:$0x7] %vm319, %v405
      %409 = vst.msk [vmem:[%s407] ss:$8 sm:$0x0] %vm319, %v405
      %v410 = vld [vmem:[%s298] sm:$0xf]
      %412 = vrot.lane.b32.xlu0 %v410, 104
      %v413 = vpop.permute.xlu0 %412
      %v414 = vrot.slane %v413, 1
      %vm415 = vcmask 850944
      %v416 = vsel %vm415, %v413, %v414
      %s418 = scalar_lea.vmem [#allocation4], 25
      %419 = vst.msk [vmem:[%s418] ss:$8 sm:$0x7] %vm319, %v416
      %420 = vst.msk [vmem:[%s418] ss:$8 sm:$0x0] %vm319, %v416
      %v421 = vld [vmem:[%s298] sm:$0xf]
      %423 = vrot.lane.b32.xlu0 %v421, 103
      %v424 = vpop.permute.xlu0 %423
      %v425 = vrot.slane %v424, 1
      %vm426 = vcmask 842752
      %v427 = vsel %vm426, %v424, %v425
      %s429 = scalar_lea.vmem [#allocation4], 26
      %430 = vst.msk [vmem:[%s429] ss:$8 sm:$0x7] %vm319, %v427
      %431 = vst.msk [vmem:[%s429] ss:$8 sm:$0x0] %vm319, %v427
      %v432 = vld [vmem:[%s298] sm:$0xf]
      %434 = vrot.lane.b32.xlu0 %v432, 102
      %v435 = vpop.permute.xlu0 %434
      %v436 = vrot.slane %v435, 1
      %vm437 = vcmask 834560
      %v438 = vsel %vm437, %v435, %v436
      %s440 = scalar_lea.vmem [#allocation4], 27
      %441 = vst.msk [vmem:[%s440] ss:$8 sm:$0x7] %vm319, %v438
      %442 = vst.msk [vmem:[%s440] ss:$8 sm:$0x0] %vm319, %v438
      %v443 = vld [vmem:[%s298] sm:$0xf]
      %445 = vrot.lane.b32.xlu0 %v443, 101
      %v446 = vpop.permute.xlu0 %445
      %v447 = vrot.slane %v446, 1
      %vm448 = vcmask 826368
      %v449 = vsel %vm448, %v446, %v447
      %s451 = scalar_lea.vmem [#allocation4], 28
      %452 = vst.msk [vmem:[%s451] ss:$8 sm:$0x7] %vm319, %v449
      %453 = vst.msk [vmem:[%s451] ss:$8 sm:$0x0] %vm319, %v449
      %v454 = vld [vmem:[%s298] sm:$0xf]
      %456 = vrot.lane.b32.xlu0 %v454, 100
      %v457 = vpop.permute.xlu0 %456
      %v458 = vrot.slane %v457, 1
      %vm459 = vcmask 818176
      %v460 = vsel %vm459, %v457, %v458
      %s462 = scalar_lea.vmem [#allocation4], 29
      %463 = vst.msk [vmem:[%s462] ss:$8 sm:$0x7] %vm319, %v460
      %464 = vst.msk [vmem:[%s462] ss:$8 sm:$0x0] %vm319, %v460
      %v465 = vld [vmem:[%s298] sm:$0xf]
      %467 = vrot.lane.b32.xlu0 %v465, 99
      %v468 = vpop.permute.xlu0 %467
      %v469 = vrot.slane %v468, 1
      %vm470 = vcmask 809984
      %v471 = vsel %vm470, %v468, %v469
      %s473 = scalar_lea.vmem [#allocation4], 30
      %474 = vst.msk [vmem:[%s473] ss:$8 sm:$0x7] %vm319, %v471
      %475 = vst.msk [vmem:[%s473] ss:$8 sm:$0x0] %vm319, %v471
      %v476 = vld [vmem:[%s298] sm:$0xf]
      %478 = vrot.lane.b32.xlu0 %v476, 98
      %v479 = vpop.permute.xlu0 %478
      %v480 = vrot.slane %v479, 1
      %vm481 = vcmask 801792
      %v482 = vsel %vm481, %v479, %v480
      %s484 = scalar_lea.vmem [#allocation4], 31
      %485 = vst.msk [vmem:[%s484] ss:$8 sm:$0x7] %vm319, %v482
      %486 = vst.msk [vmem:[%s484] ss:$8 sm:$0x0] %vm319, %v482
      %v487 = vld [vmem:[%s298] sm:$0xf]
      %489 = vrot.lane.b32.xlu0 %v487, 97
      %v490 = vpop.permute.xlu0 %489
      %v491 = vrot.slane %v490, 1
      %vm492 = vcmask 793600
      %v493 = vsel %vm492, %v490, %v491
      %s495 = scalar_lea.vmem [#allocation4], 48
      %496 = vst.msk [vmem:[%s495] ss:$8 sm:$0x7] %vm319, %v493
      %497 = vst.msk [vmem:[%s495] ss:$8 sm:$0x0] %vm319, %v493
      %v498 = vld [vmem:[%s298] sm:$0xf]
      %500 = vrot.lane.b32.xlu0 %v498, 96
      %v501 = vpop.permute.xlu0 %500
      %v502 = vrot.slane %v501, 1
      %vm503 = vcmask 785408
      %v504 = vsel %vm503, %v501, %v502
      %s506 = scalar_lea.vmem [#allocation4], 49
      %507 = vst.msk [vmem:[%s506] ss:$8 sm:$0x7] %vm319, %v504
      %508 = vst.msk [vmem:[%s506] ss:$8 sm:$0x0] %vm319, %v504
      %v509 = vld [vmem:[%s298] sm:$0xf]
      %511 = vrot.lane.b32.xlu0 %v509, 80
      %v512 = vpop.permute.xlu0 %511
      %v513 = vrot.slane %v512, 1
      %vm514 = vcmask 654336
      %v515 = vsel %vm514, %v512, %v513
      %s517 = scalar_lea.vmem [#allocation4], 50
      %518 = vst.msk [vmem:[%s517] ss:$8 sm:$0x7] %vm319, %v515
      %519 = vst.msk [vmem:[%s517] ss:$8 sm:$0x0] %vm319, %v515
      %v520 = vld [vmem:[%s298] sm:$0xf]
      %522 = vrot.lane.b32.xlu0 %v520, 79
      %v523 = vpop.permute.xlu0 %522
      %v524 = vrot.slane %v523, 1
      %vm525 = vcmask 646144
      %v526 = vsel %vm525, %v523, %v524
      %s528 = scalar_lea.vmem [#allocation4], 51
      %529 = vst.msk [vmem:[%s528] ss:$8 sm:$0x7] %vm319, %v526
      %530 = vst.msk [vmem:[%s528] ss:$8 sm:$0x0] %vm319, %v526
      %v531 = vld [vmem:[%s298] sm:$0xf]
      %533 = vrot.lane.b32.xlu0 %v531, 78
      %v534 = vpop.permute.xlu0 %533
      %v535 = vrot.slane %v534, 1
      %vm536 = vcmask 637952
      %v537 = vsel %vm536, %v534, %v535
      %s539 = scalar_lea.vmem [#allocation4], 52
      %540 = vst.msk [vmem:[%s539] ss:$8 sm:$0x7] %vm319, %v537
      %541 = vst.msk [vmem:[%s539] ss:$8 sm:$0x0] %vm319, %v537
      %v542 = vld [vmem:[%s298] sm:$0xf]
      %544 = vrot.lane.b32.xlu0 %v542, 77
      %v545 = vpop.permute.xlu0 %544
      %v546 = vrot.slane %v545, 1
      %vm547 = vcmask 629760
      %v548 = vsel %vm547, %v545, %v546
      %s550 = scalar_lea.vmem [#allocation4], 53
      %551 = vst.msk [vmem:[%s550] ss:$8 sm:$0x7] %vm319, %v548
      %552 = vst.msk [vmem:[%s550] ss:$8 sm:$0x0] %vm319, %v548
      %v553 = vld [vmem:[%s298] sm:$0xf]
      %555 = vrot.lane.b32.xlu0 %v553, 76
      %v556 = vpop.permute.xlu0 %555
      %v557 = vrot.slane %v556, 1
      %vm558 = vcmask 621568
      %v559 = vsel %vm558, %v556, %v557
      %s561 = scalar_lea.vmem [#allocation4], 54
      %562 = vst.msk [vmem:[%s561] ss:$8 sm:$0x7] %vm319, %v559
      %563 = vst.msk [vmem:[%s561] ss:$8 sm:$0x0] %vm319, %v559
      %v564 = vld [vmem:[%s298] sm:$0xf]
      %566 = vrot.lane.b32.xlu0 %v564, 75
      %v567 = vpop.permute.xlu0 %566
      %v568 = vrot.slane %v567, 1
      %vm569 = vcmask 613376
      %v570 = vsel %vm569, %v567, %v568
      %s572 = scalar_lea.vmem [#allocation4], 55
      %573 = vst.msk [vmem:[%s572] ss:$8 sm:$0x7] %vm319, %v570
      %574 = vst.msk [vmem:[%s572] ss:$8 sm:$0x0] %vm319, %v570
      %v575 = vld [vmem:[%s298] sm:$0xf]
      %577 = vrot.lane.b32.xlu0 %v575, 74
      %v578 = vpop.permute.xlu0 %577
      %v579 = vrot.slane %v578, 1
      %vm580 = vcmask 605184
      %v581 = vsel %vm580, %v578, %v579
      %s583 = scalar_lea.vmem [#allocation4], 72
      %584 = vst.msk [vmem:[%s583] ss:$8 sm:$0x7] %vm319, %v581
      %585 = vst.msk [vmem:[%s583] ss:$8 sm:$0x0] %vm319, %v581
      %v586 = vld [vmem:[%s298] sm:$0xf]
      %588 = vrot.lane.b32.xlu0 %v586, 73
      %v589 = vpop.permute.xlu0 %588
      %v590 = vrot.slane %v589, 1
      %vm591 = vcmask 596992
      %v592 = vsel %vm591, %v589, %v590
      %s594 = scalar_lea.vmem [#allocation4], 73
      %595 = vst.msk [vmem:[%s594] ss:$8 sm:$0x7] %vm319, %v592
      %596 = vst.msk [vmem:[%s594] ss:$8 sm:$0x0] %vm319, %v592
      %v597 = vld [vmem:[%s298] sm:$0xf]
      %599 = vrot.lane.b32.xlu0 %v597, 72
      %v600 = vpop.permute.xlu0 %599
      %v601 = vrot.slane %v600, 1
      %vm602 = vcmask 588800
      %v603 = vsel %vm602, %v600, %v601
      %s605 = scalar_lea.vmem [#allocation4], 74
      %606 = vst.msk [vmem:[%s605] ss:$8 sm:$0x7] %vm319, %v603
      %607 = vst.msk [vmem:[%s605] ss:$8 sm:$0x0] %vm319, %v603
      %v608 = vld [vmem:[%s298] sm:$0xf]
      %610 = vrot.lane.b32.xlu0 %v608, 56
      %v611 = vpop.permute.xlu0 %610
      %v612 = vrot.slane %v611, 1
      %vm613 = vcmask 457728
      %v614 = vsel %vm613, %v611, %v612
      %s616 = scalar_lea.vmem [#allocation4], 75
      %617 = vst.msk [vmem:[%s616] ss:$8 sm:$0x7] %vm319, %v614
      %618 = vst.msk [vmem:[%s616] ss:$8 sm:$0x0] %vm319, %v614
      %v619 = vld [vmem:[%s298] sm:$0xf]
      %621 = vrot.lane.b32.xlu0 %v619, 55
      %v622 = vpop.permute.xlu0 %621
      %v623 = vrot.slane %v622, 1
      %vm624 = vcmask 449536
      %v625 = vsel %vm624, %v622, %v623
      %s627 = scalar_lea.vmem [#allocation4], 76
      %628 = vst.msk [vmem:[%s627] ss:$8 sm:$0x7] %vm319, %v625
      %629 = vst.msk [vmem:[%s627] ss:$8 sm:$0x0] %vm319, %v625
      %v630 = vld [vmem:[%s298] sm:$0xf]
      %632 = vrot.lane.b32.xlu0 %v630, 54
      %v633 = vpop.permute.xlu0 %632
      %v634 = vrot.slane %v633, 1
      %vm635 = vcmask 441344
      %v636 = vsel %vm635, %v633, %v634
      %s638 = scalar_lea.vmem [#allocation4], 77
      %639 = vst.msk [vmem:[%s638] ss:$8 sm:$0x7] %vm319, %v636
      %640 = vst.msk [vmem:[%s638] ss:$8 sm:$0x0] %vm319, %v636
      %v641 = vld [vmem:[%s298] sm:$0xf]
      %643 = vrot.lane.b32.xlu0 %v641, 53
      %v644 = vpop.permute.xlu0 %643
      %v645 = vrot.slane %v644, 1
      %vm646 = vcmask 433152
      %v647 = vsel %vm646, %v644, %v645
      %s649 = scalar_lea.vmem [#allocation4], 78
      %650 = vst.msk [vmem:[%s649] ss:$8 sm:$0x7] %vm319, %v647
      %651 = vst.msk [vmem:[%s649] ss:$8 sm:$0x0] %vm319, %v647
      %v652 = vld [vmem:[%s298] sm:$0xf]
      %654 = vrot.lane.b32.xlu0 %v652, 52
      %v655 = vpop.permute.xlu0 %654
      %v656 = vrot.slane %v655, 1
      %vm657 = vcmask 424960
      %v658 = vsel %vm657, %v655, %v656
      %s660 = scalar_lea.vmem [#allocation4], 79
      %661 = vst.msk [vmem:[%s660] ss:$8 sm:$0x7] %vm319, %v658
      %662 = vst.msk [vmem:[%s660] ss:$8 sm:$0x0] %vm319, %v658
      %v663 = vld [vmem:[%s298] sm:$0xf]
      %665 = vrot.lane.b32.xlu0 %v663, 51
      %v666 = vpop.permute.xlu0 %665
      %v667 = vrot.slane %v666, 1
      %vm668 = vcmask 416768
      %v669 = vsel %vm668, %v666, %v667
      %s671 = scalar_lea.vmem [#allocation4], 96
      %672 = vst.msk [vmem:[%s671] ss:$8 sm:$0x7] %vm319, %v669
      %673 = vst.msk [vmem:[%s671] ss:$8 sm:$0x0] %vm319, %v669
      %v674 = vld [vmem:[%s298] sm:$0xf]
      %676 = vrot.lane.b32.xlu0 %v674, 50
      %v677 = vpop.permute.xlu0 %676
      %v678 = vrot.slane %v677, 1
      %vm679 = vcmask 408576
      %v680 = vsel %vm679, %v677, %v678
      %s682 = scalar_lea.vmem [#allocation4], 97
      %683 = vst.msk [vmem:[%s682] ss:$8 sm:$0x7] %vm319, %v680
      %684 = vst.msk [vmem:[%s682] ss:$8 sm:$0x0] %vm319, %v680
      %v685 = vld [vmem:[%s298] sm:$0xf]
      %687 = vrot.lane.b32.xlu0 %v685, 49
      %v688 = vpop.permute.xlu0 %687
      %v689 = vrot.slane %v688, 1
      %vm690 = vcmask 400384
      %v691 = vsel %vm690, %v688, %v689
      %s693 = scalar_lea.vmem [#allocation4], 98
      %694 = vst.msk [vmem:[%s693] ss:$8 sm:$0x7] %vm319, %v691
      %695 = vst.msk [vmem:[%s693] ss:$8 sm:$0x0] %vm319, %v691
      %v696 = vld [vmem:[%s298] sm:$0xf]
      %698 = vrot.lane.b32.xlu0 %v696, 48
      %v699 = vpop.permute.xlu0 %698
      %v700 = vrot.slane %v699, 1
      %vm701 = vcmask 392192
      %v702 = vsel %vm701, %v699, %v700
      %s704 = scalar_lea.vmem [#allocation4], 99
      %705 = vst.msk [vmem:[%s704] ss:$8 sm:$0x7] %vm319, %v702
      %706 = vst.msk [vmem:[%s704] ss:$8 sm:$0x0] %vm319, %v702
      %v707 = vld [vmem:[%s298] sm:$0xf]
      %709 = vrot.lane.b32.xlu0 %v707, 32
      %v710 = vpop.permute.xlu0 %709
      %v711 = vrot.slane %v710, 1
      %vm712 = vcmask 261120
      %v713 = vsel %vm712, %v710, %v711
      %s715 = scalar_lea.vmem [#allocation4], 100
      %716 = vst.msk [vmem:[%s715] ss:$8 sm:$0x7] %vm319, %v713
      %717 = vst.msk [vmem:[%s715] ss:$8 sm:$0x0] %vm319, %v713
      %v718 = vld [vmem:[%s298] sm:$0xf]
      %720 = vrot.lane.b32.xlu0 %v718, 31
      %v721 = vpop.permute.xlu0 %720
      %v722 = vrot.slane %v721, 1
      %vm723 = vcmask 252928
      %v724 = vsel %vm723, %v721, %v722
      %s726 = scalar_lea.vmem [#allocation4], 101
      %727 = vst.msk [vmem:[%s726] ss:$8 sm:$0x7] %vm319, %v724
      %728 = vst.msk [vmem:[%s726] ss:$8 sm:$0x0] %vm319, %v724
      %v729 = vld [vmem:[%s298] sm:$0xf]
      %731 = vrot.lane.b32.xlu0 %v729, 30
      %v732 = vpop.permute.xlu0 %731
      %v733 = vrot.slane %v732, 1
      %vm734 = vcmask 244736
      %v735 = vsel %vm734, %v732, %v733
      %s737 = scalar_lea.vmem [#allocation4], 102
      %738 = vst.msk [vmem:[%s737] ss:$8 sm:$0x7] %vm319, %v735
      %739 = vst.msk [vmem:[%s737] ss:$8 sm:$0x0] %vm319, %v735
      %v740 = vld [vmem:[%s298] sm:$0xf]
      %742 = vrot.lane.b32.xlu0 %v740, 29
      %v743 = vpop.permute.xlu0 %742
      %v744 = vrot.slane %v743, 1
      %vm745 = vcmask 236544
      %v746 = vsel %vm745, %v743, %v744
      %s748 = scalar_lea.vmem [#allocation4], 103
      %749 = vst.msk [vmem:[%s748] ss:$8 sm:$0x7] %vm319, %v746
      %750 = vst.msk [vmem:[%s748] ss:$8 sm:$0x0] %vm319, %v746
      %v751 = vld [vmem:[%s298] sm:$0xf]
      %753 = vrot.lane.b32.xlu0 %v751, 28
      %v754 = vpop.permute.xlu0 %753
      %v755 = vrot.slane %v754, 1
      %vm756 = vcmask 228352
      %v757 = vsel %vm756, %v754, %v755
      %s759 = scalar_lea.vmem [#allocation4], 120
      %760 = vst.msk [vmem:[%s759] ss:$8 sm:$0x7] %vm319, %v757
      %761 = vst.msk [vmem:[%s759] ss:$8 sm:$0x0] %vm319, %v757
      %v762 = vld [vmem:[%s298] sm:$0xf]
      %764 = vrot.lane.b32.xlu0 %v762, 27
      %v765 = vpop.permute.xlu0 %764
      %v766 = vrot.slane %v765, 1
      %vm767 = vcmask 220160
      %v768 = vsel %vm767, %v765, %v766
      %s770 = scalar_lea.vmem [#allocation4], 121
      %771 = vst.msk [vmem:[%s770] ss:$8 sm:$0x7] %vm319, %v768
      %772 = vst.msk [vmem:[%s770] ss:$8 sm:$0x0] %vm319, %v768
      %v773 = vld [vmem:[%s298] sm:$0xf]
      %775 = vrot.lane.b32.xlu0 %v773, 26
      %v776 = vpop.permute.xlu0 %775
      %v777 = vrot.slane %v776, 1
      %vm778 = vcmask 211968
      %v779 = vsel %vm778, %v776, %v777
      %s781 = scalar_lea.vmem [#allocation4], 122
      %782 = vst.msk [vmem:[%s781] ss:$8 sm:$0x7] %vm319, %v779
      %783 = vst.msk [vmem:[%s781] ss:$8 sm:$0x0] %vm319, %v779
      %v784 = vld [vmem:[%s298] sm:$0xf]
      %786 = vrot.lane.b32.xlu0 %v784, 25
      %v787 = vpop.permute.xlu0 %786
      %v788 = vrot.slane %v787, 1
      %vm789 = vcmask 203776
      %v790 = vsel %vm789, %v787, %v788
      %s792 = scalar_lea.vmem [#allocation4], 123
      %793 = vst.msk [vmem:[%s792] ss:$8 sm:$0x7] %vm319, %v790
      %794 = vst.msk [vmem:[%s792] ss:$8 sm:$0x0] %vm319, %v790
      %v795 = vld [vmem:[%s298] sm:$0xf]
      %797 = vrot.lane.b32.xlu0 %v795, 24
      %v798 = vpop.permute.xlu0 %797
      %v799 = vrot.slane %v798, 1
      %vm800 = vcmask 195584
      %v801 = vsel %vm800, %v798, %v799
      %s803 = scalar_lea.vmem [#allocation4], 124
      %804 = vst.msk [vmem:[%s803] ss:$8 sm:$0x7] %vm319, %v801
      %805 = vst.msk [vmem:[%s803] ss:$8 sm:$0x0] %vm319, %v801
      %v806 = vld [vmem:[%s298] sm:$0xf]
      %808 = vrot.lane.b32.xlu0 %v806, 8
      %v809 = vpop.permute.xlu0 %808
      %v810 = vrot.slane %v809, 1
      %vm811 = vcmask 64512
      %v812 = vsel %vm811, %v809, %v810
      %s814 = scalar_lea.vmem [#allocation4], 125
      %815 = vst.msk [vmem:[%s814] ss:$8 sm:$0x7] %vm319, %v812
      %816 = vst.msk [vmem:[%s814] ss:$8 sm:$0x0] %vm319, %v812
      %v817 = vld [vmem:[%s298] sm:$0xf]
      %819 = vrot.lane.b32.xlu0 %v817, 7
      %v820 = vpop.permute.xlu0 %819
      %v821 = vrot.slane %v820, 1
      %vm822 = vcmask 56320
      %v823 = vsel %vm822, %v820, %v821
      %s825 = scalar_lea.vmem [#allocation4], 126
      %826 = vst.msk [vmem:[%s825] ss:$8 sm:$0x7] %vm319, %v823
      %827 = vst.msk [vmem:[%s825] ss:$8 sm:$0x0] %vm319, %v823
      %v828 = vld [vmem:[%s298] sm:$0xf]
      %830 = vrot.lane.b32.xlu0 %v828, 6
      %v831 = vpop.permute.xlu0 %830
      %v832 = vrot.slane %v831, 1
      %vm833 = vcmask 48128
      %v834 = vsel %vm833, %v831, %v832
      %s836 = scalar_lea.vmem [#allocation4], 127
      %837 = vst.msk [vmem:[%s836] ss:$8 sm:$0x7] %vm319, %v834
      %838 = vst.msk [vmem:[%s836] ss:$8 sm:$0x0] %vm319, %v834
      %v839 = vld [vmem:[%s298] sm:$0xf]
      %841 = vrot.lane.b32.xlu0 %v839, 5
      %v842 = vpop.permute.xlu0 %841
      %v843 = vrot.slane %v842, 1
      %vm844 = vcmask 39936
      %v845 = vsel %vm844, %v842, %v843
      %s847 = scalar_lea.vmem [#allocation4], 144
      %848 = vst.msk [vmem:[%s847] ss:$8 sm:$0x7] %vm319, %v845
      %849 = vst.msk [vmem:[%s847] ss:$8 sm:$0x0] %vm319, %v845
      %v850 = vld [vmem:[%s298] sm:$0xf]
      %852 = vrot.lane.b32.xlu0 %v850, 4
      %v853 = vpop.permute.xlu0 %852
      %v854 = vrot.slane %v853, 1
      %vm855 = vcmask 31744
      %v856 = vsel %vm855, %v853, %v854
      %s858 = scalar_lea.vmem [#allocation4], 145
      %859 = vst.msk [vmem:[%s858] ss:$8 sm:$0x7] %vm319, %v856
      %860 = vst.msk [vmem:[%s858] ss:$8 sm:$0x0] %vm319, %v856
      %v861 = vld [vmem:[%s298] sm:$0xf]
      %863 = vrot.lane.b32.xlu0 %v861, 3
      %v864 = vpop.permute.xlu0 %863
      %v865 = vrot.slane %v864, 1
      %vm866 = vcmask 23552
      %v867 = vsel %vm866, %v864, %v865
      %s869 = scalar_lea.vmem [#allocation4], 146
      %870 = vst.msk [vmem:[%s869] ss:$8 sm:$0x7] %vm319, %v867
      %871 = vst.msk [vmem:[%s869] ss:$8 sm:$0x0] %vm319, %v867
      %v872 = vld [vmem:[%s298] sm:$0xf]
      %874 = vrot.lane.b32.xlu0 %v872, 2
      %v875 = vpop.permute.xlu0 %874
      %v876 = vrot.slane %v875, 1
      %vm877 = vcmask 15360
      %v878 = vsel %vm877, %v875, %v876
      %s880 = scalar_lea.vmem [#allocation4], 147
      %881 = vst.msk [vmem:[%s880] ss:$8 sm:$0x7] %vm319, %v878
      %882 = vst.msk [vmem:[%s880] ss:$8 sm:$0x0] %vm319, %v878
      %v883 = vld [vmem:[%s298] sm:$0xf]
      %885 = vrot.lane.b32.xlu0 %v883, 1
      %v886 = vpop.permute.xlu0 %885
      %v887 = vrot.slane %v886, 1
      %vm888 = vcmask 7168
      %v889 = vsel %vm888, %v886, %v887
      %s891 = scalar_lea.vmem [#allocation4], 148
      %892 = vst.msk [vmem:[%s891] ss:$8 sm:$0x7] %vm319, %v889
      %893 = vst.msk [vmem:[%s891] ss:$8 sm:$0x0] %vm319, %v889
      %v894 = vld [vmem:[%s298 + $0x1] sm:$0x7]
      %s895 = scalar_lea.vmem [#allocation4], 149
      %896 = vst.msk [vmem:[%s895] ss:$8 sm:$0x7] %vm319, %v894
      %897 = vst.msk [vmem:[%s895] ss:$8 sm:$0x0] %vm319, %v894
      %v898 = vld [vmem:[%s298 + $0x1] sm:$0xf]
      %900 = vrot.lane.b32.xlu0 %v898, 112
      %v901 = vpop.permute.xlu0 %900
      %v902 = vrot.slane %v901, 1
      %vm903 = vcmask 916480
      %v904 = vsel %vm903, %v901, %v902
      %s906 = scalar_lea.vmem [#allocation4], 150
      %907 = vst.msk [vmem:[%s906] ss:$8 sm:$0x7] %vm319, %v904
      %908 = vst.msk [vmem:[%s906] ss:$8 sm:$0x0] %vm319, %v904
      %v909 = vld [vmem:[%s298 + $0x1] sm:$0xf]
      %911 = vrot.lane.b32.xlu0 %v909, 111
      %v912 = vpop.permute.xlu0 %911
      %v913 = vrot.slane %v912, 1
      %vm914 = vcmask 908288
      %v915 = vsel %vm914, %v912, %v913
      %s917 = scalar_lea.vmem [#allocation4], 151
      %918 = vst.msk [vmem:[%s917] ss:$8 sm:$0x7] %vm319, %v915
      %919 = vst.msk [vmem:[%s917] ss:$8 sm:$0x0] %vm319, %v915
      %v920 = vld [vmem:[%s298 + $0x1] sm:$0xf]
      %922 = vrot.lane.b32.xlu0 %v920, 110
      %v923 = vpop.permute.xlu0 %922
      %v924 = vrot.slane %v923, 1
      %vm925 = vcmask 900096
      %v926 = vsel %vm925, %v923, %v924
      %s928 = scalar_lea.vmem [#allocation4], 168
      %929 = vst.msk [vmem:[%s928] ss:$8 sm:$0x7] %vm319, %v926
      %930 = vst.msk [vmem:[%s928] ss:$8 sm:$0x0] %vm319, %v926
      %v931 = vld [vmem:[%s298 + $0x1] sm:$0xf]
      %933 = vrot.lane.b32.xlu0 %v931, 109
      %v934 = vpop.permute.xlu0 %933
      %v935 = vrot.slane %v934, 1
      %vm936 = vcmask 891904
      %v937 = vsel %vm936, %v934, %v935
      %s939 = scalar_lea.vmem [#allocation4], 169
      %940 = vst.msk [vmem:[%s939] ss:$8 sm:$0x7] %vm319, %v937
      %941 = vst.msk [vmem:[%s939] ss:$8 sm:$0x0] %vm319, %v937
      %v942 = vld [vmem:[%s298 + $0x1] sm:$0xf]
      %944 = vrot.lane.b32.xlu0 %v942, 108
      %v945 = vpop.permute.xlu0 %944
      %v946 = vrot.slane %v945, 1
      %vm947 = vcmask 883712
      %v948 = vsel %vm947, %v945, %v946
      %s950 = scalar_lea.vmem [#allocation4], 170
      %951 = vst.msk [vmem:[%s950] ss:$8 sm:$0x7] %vm319, %v948
      %952 = vst.msk [vmem:[%s950] ss:$8 sm:$0x0] %vm319, %v948
      %v953 = vld [vmem:[%s298 + $0x1] sm:$0xf]
      %955 = vrot.lane.b32.xlu0 %v953, 107
      %v956 = vpop.permute.xlu0 %955
      %v957 = vrot.slane %v956, 1
      %vm958 = vcmask 875520
      %v959 = vsel %vm958, %v956, %v957
      %s961 = scalar_lea.vmem [#allocation4], 171
      %962 = vst.msk [vmem:[%s961] ss:$8 sm:$0x7] %vm319, %v959
      %963 = vst.msk [vmem:[%s961] ss:$8 sm:$0x0] %vm319, %v959
      %v964 = vld [vmem:[%s298 + $0x1] sm:$0xf]
      %966 = vrot.lane.b32.xlu0 %v964, 106
      %v967 = vpop.permute.xlu0 %966
      %v968 = vrot.slane %v967, 1
      %vm969 = vcmask 867328
      %v970 = vsel %vm969, %v967, %v968
      %s972 = scalar_lea.vmem [#allocation4], 172
      %973 = vst.msk [vmem:[%s972] ss:$8 sm:$0x7] %vm319, %v970
      %974 = vst.msk [vmem:[%s972] ss:$8 sm:$0x0] %vm319, %v970
      %v975 = vld [vmem:[%s298 + $0x1] sm:$0xf]
      %977 = vrot.lane.b32.xlu0 %v975, 105
      %v978 = vpop.permute.xlu0 %977
      %v979 = vrot.slane %v978, 1
      %vm980 = vcmask 859136
      %v981 = vsel %vm980, %v978, %v979
      %s983 = scalar_lea.vmem [#allocation4], 173
      %984 = vst.msk [vmem:[%s983] ss:$8 sm:$0x7] %vm319, %v981
      %985 = vst.msk [vmem:[%s983] ss:$8 sm:$0x0] %vm319, %v981
      %v986 = vld [vmem:[%s298 + $0x1] sm:$0xf]
      %988 = vrot.lane.b32.xlu0 %v986, 104
      %v989 = vpop.permute.xlu0 %988
      %v990 = vrot.slane %v989, 1
      %v991 = vsel %vm415, %v989, %v990
      %s993 = scalar_lea.vmem [#allocation4], 174
      %994 = vst.msk [vmem:[%s993] ss:$8 sm:$0x7] %vm319, %v991
      %995 = vst.msk [vmem:[%s993] ss:$8 sm:$0x0] %vm319, %v991
      %v996 = vld [vmem:[%s298 + $0x1] sm:$0xf]
      %998 = vrot.lane.b32.xlu0 %v996, 88
      %v999 = vpop.permute.xlu0 %998
      %v1000 = vrot.slane %v999, 1
      %v1001 = vsel %vm307, %v999, %v1000
      %s1003 = scalar_lea.vmem [#allocation4], 175
      %1004 = vst.msk [vmem:[%s1003] ss:$8 sm:$0x7] %vm319, %v1001
      %1005 = vst.msk [vmem:[%s1003] ss:$8 sm:$0x0] %vm319, %v1001
      %v1006 = vld [vmem:[%s298 + $0x1] sm:$0xf]
      %1008 = vrot.lane.b32.xlu0 %v1006, 87
      %v1009 = vpop.permute.xlu0 %1008
      %v1010 = vrot.slane %v1009, 1
      %vm1011 = vcmask 711680
      %v1012 = vsel %vm1011, %v1009, %v1010
      %s1014 = scalar_lea.vmem [#allocation4], 192
      %1015 = vst.msk [vmem:[%s1014] ss:$8 sm:$0x7] %vm319, %v1012
      %1016 = vst.msk [vmem:[%s1014] ss:$8 sm:$0x0] %vm319, %v1012
      %v1017 = vld [vmem:[%s298 + $0x1] sm:$0xf]
      %1019 = vrot.lane.b32.xlu0 %v1017, 86
      %v1020 = vpop.permute.xlu0 %1019
      %v1021 = vrot.slane %v1020, 1
      %vm1022 = vcmask 703488
      %v1023 = vsel %vm1022, %v1020, %v1021
      %s1025 = scalar_lea.vmem [#allocation4], 193
      %1026 = vst.msk [vmem:[%s1025] ss:$8 sm:$0x7] %vm319, %v1023
      %1027 = vst.msk [vmem:[%s1025] ss:$8 sm:$0x0] %vm319, %v1023
      %v1028 = vld [vmem:[%s298 + $0x1] sm:$0xf]
      %1030 = vrot.lane.b32.xlu0 %v1028, 85
      %v1031 = vpop.permute.xlu0 %1030
      %v1032 = vrot.slane %v1031, 1
      %vm1033 = vcmask 695296
      %v1034 = vsel %vm1033, %v1031, %v1032
      %s1036 = scalar_lea.vmem [#allocation4], 194
      %1037 = vst.msk [vmem:[%s1036] ss:$8 sm:$0x7] %vm319, %v1034
      %1038 = vst.msk [vmem:[%s1036] ss:$8 sm:$0x0] %vm319, %v1034
      %v1039 = vld [vmem:[%s298 + $0x1] sm:$0xf]
      %1041 = vrot.lane.b32.xlu0 %v1039, 84
      %v1042 = vpop.permute.xlu0 %1041
      %v1043 = vrot.slane %v1042, 1
      %vm1044 = vcmask 687104
      %v1045 = vsel %vm1044, %v1042, %v1043
      %s1047 = scalar_lea.vmem [#allocation4], 195
      %1048 = vst.msk [vmem:[%s1047] ss:$8 sm:$0x7] %vm319, %v1045
      %1049 = vst.msk [vmem:[%s1047] ss:$8 sm:$0x0] %vm319, %v1045
      %v1050 = vld [vmem:[%s298 + $0x1] sm:$0xf]
      %1052 = vrot.lane.b32.xlu0 %v1050, 83
      %v1053 = vpop.permute.xlu0 %1052
      %v1054 = vrot.slane %v1053, 1
      %vm1055 = vcmask 678912
      %v1056 = vsel %vm1055, %v1053, %v1054
      %s1058 = scalar_lea.vmem [#allocation4], 196
      %1059 = vst.msk [vmem:[%s1058] ss:$8 sm:$0x7] %vm319, %v1056
      %1060 = vst.msk [vmem:[%s1058] ss:$8 sm:$0x0] %vm319, %v1056
      %v1061 = vld [vmem:[%s298 + $0x1] sm:$0xf]
      %1063 = vrot.lane.b32.xlu0 %v1061, 82
      %v1064 = vpop.permute.xlu0 %1063
      %v1065 = vrot.slane %v1064, 1
      %vm1066 = vcmask 670720
      %v1067 = vsel %vm1066, %v1064, %v1065
      %s1069 = scalar_lea.vmem [#allocation4], 197
      %1070 = vst.msk [vmem:[%s1069] ss:$8 sm:$0x7] %vm319, %v1067
      %1071 = vst.msk [vmem:[%s1069] ss:$8 sm:$0x0] %vm319, %v1067
      %v1072 = vld [vmem:[%s298 + $0x1] sm:$0xf]
      %1074 = vrot.lane.b32.xlu0 %v1072, 81
      %v1075 = vpop.permute.xlu0 %1074
      %v1076 = vrot.slane %v1075, 1
      %vm1077 = vcmask 662528
      %v1078 = vsel %vm1077, %v1075, %v1076
      %s1080 = scalar_lea.vmem [#allocation4], 198
      %1081 = vst.msk [vmem:[%s1080] ss:$8 sm:$0x7] %vm319, %v1078
      %1082 = vst.msk [vmem:[%s1080] ss:$8 sm:$0x0] %vm319, %v1078
      %v1083 = vld [vmem:[%s298 + $0x1] sm:$0xf]
      %1085 = vrot.lane.b32.xlu0 %v1083, 80
      %v1086 = vpop.permute.xlu0 %1085
      %v1087 = vrot.slane %v1086, 1
      %v1088 = vsel %vm514, %v1086, %v1087
      %s1090 = scalar_lea.vmem [#allocation4], 199
      %1091 = vst.msk [vmem:[%s1090] ss:$8 sm:$0x7] %vm319, %v1088
      %1092 = vst.msk [vmem:[%s1090] ss:$8 sm:$0x0] %vm319, %v1088
      %v1093 = vld [vmem:[%s298 + $0x1] sm:$0xf]
      %1095 = vrot.lane.b32.xlu0 %v1093, 64
      %v1096 = vpop.permute.xlu0 %1095
      %v1097 = vrot.slane %v1096, 1
      %vm1098 = vcmask 523264
      %v1099 = vsel %vm1098, %v1096, %v1097
      %s1101 = scalar_lea.vmem [#allocation4], 216
      %1102 = vst.msk [vmem:[%s1101] ss:$8 sm:$0x7] %vm319, %v1099
      %1103 = vst.msk [vmem:[%s1101] ss:$8 sm:$0x0] %vm319, %v1099
      %v1104 = vld [vmem:[%s298 + $0x1] sm:$0xf]
      %1106 = vrot.lane.b32.xlu0 %v1104, 63
      %v1107 = vpop.permute.xlu0 %1106
      %v1108 = vrot.slane %v1107, 1
      %vm1109 = vcmask 515072
      %v1110 = vsel %vm1109, %v1107, %v1108
      %s1112 = scalar_lea.vmem [#allocation4], 217
      %1113 = vst.msk [vmem:[%s1112] ss:$8 sm:$0x7] %vm319, %v1110
      %1114 = vst.msk [vmem:[%s1112] ss:$8 sm:$0x0] %vm319, %v1110
      %v1115 = vld [vmem:[%s298 + $0x1] sm:$0xf]
      %1117 = vrot.lane.b32.xlu0 %v1115, 62
      %v1118 = vpop.permute.xlu0 %1117
      %v1119 = vrot.slane %v1118, 1
      %vm1120 = vcmask 506880
      %v1121 = vsel %vm1120, %v1118, %v1119
      %s1123 = scalar_lea.vmem [#allocation4], 218
      %1124 = vst.msk [vmem:[%s1123] ss:$8 sm:$0x7] %vm319, %v1121
      %1125 = vst.msk [vmem:[%s1123] ss:$8 sm:$0x0] %vm319, %v1121
      %v1126 = vld [vmem:[%s298 + $0x1] sm:$0xf]
      %1128 = vrot.lane.b32.xlu0 %v1126, 61
      %v1129 = vpop.permute.xlu0 %1128
      %v1130 = vrot.slane %v1129, 1
      %vm1131 = vcmask 498688
      %v1132 = vsel %vm1131, %v1129, %v1130
      %s1134 = scalar_lea.vmem [#allocation4], 219
      %1135 = vst.msk [vmem:[%s1134] ss:$8 sm:$0x7] %vm319, %v1132
      %1136 = vst.msk [vmem:[%s1134] ss:$8 sm:$0x0] %vm319, %v1132
      %v1137 = vld [vmem:[%s298 + $0x1] sm:$0xf]
      %1139 = vrot.lane.b32.xlu0 %v1137, 60
      %v1140 = vpop.permute.xlu0 %1139
      %v1141 = vrot.slane %v1140, 1
      %vm1142 = vcmask 490496
      %v1143 = vsel %vm1142, %v1140, %v1141
      %s1145 = scalar_lea.vmem [#allocation4], 220
      %1146 = vst.msk [vmem:[%s1145] ss:$8 sm:$0x7] %vm319, %v1143
      %1147 = vst.msk [vmem:[%s1145] ss:$8 sm:$0x0] %vm319, %v1143
      %v1148 = vld [vmem:[%s298 + $0x1] sm:$0xf]
      %1150 = vrot.lane.b32.xlu0 %v1148, 59
      %v1151 = vpop.permute.xlu0 %1150
      %v1152 = vrot.slane %v1151, 1
      %vm1153 = vcmask 482304
      %v1154 = vsel %vm1153, %v1151, %v1152
      %s1156 = scalar_lea.vmem [#allocation4], 221
      %1157 = vst.msk [vmem:[%s1156] ss:$8 sm:$0x7] %vm319, %v1154
      %1158 = vst.msk [vmem:[%s1156] ss:$8 sm:$0x0] %vm319, %v1154
      %v1159 = vld [vmem:[%s298 + $0x1] sm:$0xf]
      %1161 = vrot.lane.b32.xlu0 %v1159, 58
      %v1162 = vpop.permute.xlu0 %1161
      %v1163 = vrot.slane %v1162, 1
      %vm1164 = vcmask 474112
      %v1165 = vsel %vm1164, %v1162, %v1163
      %s1167 = scalar_lea.vmem [#allocation4], 222
      %1168 = vst.msk [vmem:[%s1167] ss:$8 sm:$0x7] %vm319, %v1165
      %1169 = vst.msk [vmem:[%s1167] ss:$8 sm:$0x0] %vm319, %v1165
      %v1170 = vld [vmem:[%s298 + $0x1] sm:$0xf]
      %1172 = vrot.lane.b32.xlu0 %v1170, 57
      %v1173 = vpop.permute.xlu0 %1172
      %v1174 = vrot.slane %v1173, 1
      %vm1175 = vcmask 465920
      %v1176 = vsel %vm1175, %v1173, %v1174
      %s1178 = scalar_lea.vmem [#allocation4], 223
      %1179 = vst.msk [vmem:[%s1178] ss:$8 sm:$0x7] %vm319, %v1176
      %1180 = vst.msk [vmem:[%s1178] ss:$8 sm:$0x0] %vm319, %v1176
      %v1181 = vld [vmem:[%s298 + $0x1] sm:$0xf]
      %1183 = vrot.lane.b32.xlu0 %v1181, 56
      %v1184 = vpop.permute.xlu0 %1183
      %v1185 = vrot.slane %v1184, 1
      %v1186 = vsel %vm613, %v1184, %v1185
      %s1188 = scalar_lea.vmem [#allocation4], 240
      %1189 = vst.msk [vmem:[%s1188] ss:$8 sm:$0x7] %vm319, %v1186
      %1190 = vst.msk [vmem:[%s1188] ss:$8 sm:$0x0] %vm319, %v1186
      %v1191 = vld [vmem:[#allocation4] sm:$0xff]
      %v1192 = vld [vmem:[#allocation4 + $0x8] sm:$0xff]
      %v1193 = vld [vmem:[#allocation4 + $0x10] sm:$0xff]
      %v1194 = vld [vmem:[#allocation4 + $0x18] sm:$0xff]
      %v1195 = vld [vmem:[#allocation4 + $0x20] sm:$0xff]
      %v1196 = vld [vmem:[#allocation4 + $0x28] sm:$0xff]
      %v1197 = vld [vmem:[#allocation4 + $0x30] sm:$0xff]
      %v1198 = vld [vmem:[#allocation4 + $0x38] sm:$0xff]
      %v1199 = vld [vmem:[#allocation4 + $0x40] sm:$0xff]
      %v1200 = vld [vmem:[#allocation4 + $0x48] sm:$0xff]
      %v1201 = vld [vmem:[#allocation4 + $0x50] sm:$0xff]
      %v1202 = vld [vmem:[#allocation4 + $0x58] sm:$0xff]
      %v1203 = vld [vmem:[#allocation4 + $0x60] sm:$0xff]
      %v1204 = vld [vmem:[#allocation4 + $0x68] sm:$0xff]
      %v1205 = vld [vmem:[#allocation4 + $0x70] sm:$0xff]
      %v1206 = vld [vmem:[#allocation4 + $0x78] sm:$0xff]
      %v1207 = vld [vmem:[#allocation4 + $0x80] sm:$0xff]
      %v1208 = vld [vmem:[#allocation4 + $0x88] sm:$0xff]
      %v1209 = vld [vmem:[#allocation4 + $0x90] sm:$0xff]
      %v1210 = vld [vmem:[#allocation4 + $0x98] sm:$0xff]
      %v1211 = vld [vmem:[#allocation4 + $0xa0] sm:$0xff]
      %v1212 = vld [vmem:[#allocation4 + $0xa8] sm:$0xff]
      %v1213 = vld [vmem:[#allocation4 + $0xb0] sm:$0xff]
      %v1214 = vld [vmem:[#allocation4 + $0xb8] sm:$0xff]
      %v1215 = vld [vmem:[#allocation4 + $0xc0] sm:$0xff]
      %v1216 = vld [vmem:[#allocation4 + $0xc8] sm:$0xff]
      %v1217 = vld [vmem:[#allocation4 + $0xd0] sm:$0xff]
      %v1218 = vld [vmem:[#allocation4 + $0xd8] sm:$0xff]
      %v1219 = vld [vmem:[#allocation4 + $0xe0] sm:$0xff]
      %v1220 = vld [vmem:[#allocation4 + $0xe8] sm:$0xff]
      %v1221 = vld [vmem:[#allocation4 + $0xf0] sm:$0x1]
      %v1222 = vld [vmem:[#allocation4 + $0xf8] sm:$0x1]
      %v1223 = vld [vmem:[#allocation4 + $0x100] sm:$0x1]
      %v1224 = vld [vmem:[%s1] sm:$0xff]
      %v1225 = vld [vmem:[%s2] sm:$0xff]
      %1227 = vset.pattern.permute.xlu0 0
      %1228 = vperm.xlu0 %1227, %v1225
      %v1229 = vpop.permute.xlu0 %1228
      %v1232 = vsel %vm1077, %v1224, 0
      %vm1234 = vcmask 1040384
      %v1236 = vsel %vm1234, %v1221, 0
      %v1239 = vsel %vm1234, %v1222, 0
      %v1242 = vsel %vm1234, %v1223, 0
      %1244 = vmatprep.subr.mxu0 %v1192
      %1245 = vmatpush1.msra.mxu0 %v1191
      %1246 = vmatprep.subr.mxu0 %v1195
      %1247 = vmatpush1.msra.mxu0 %v1194
      %1248 = vmatprep.subr.mxu0 %v1198
      %1249 = vmatpush1.msra.mxu0 %v1197
      %1250 = vmatprep.subr.mxu0 %v1201
      %1251 = vmatpush1.msra.mxu0 %v1200
      %1252 = vmatprep.subr.mxu0 %v1204
      %1253 = vmatpush1.msra.mxu0 %v1203
      %1254 = vmatprep.subr.mxu0 %v1207
      %1255 = vmatpush1.msra.mxu0 %v1206
      %1256 = vmatprep.subr.mxu0 %v1210
      %1257 = vmatpush1.msra.mxu0 %v1209
      %1258 = vmatprep.subr.mxu0 %v1213
      %1259 = vmatpush1.msra.mxu0 %v1212
      %1260 = vmatprep.subr.mxu0 %v1216
      %1261 = vmatpush1.msra.mxu0 %v1215
      %1262 = vmatprep.subr.mxu0 %v1219
      %1263 = vmatpush1.msra.mxu0 %v1218
      %1264 = vmatprep.subr.mxu0 %v1239
      %1265 = vmatpush1.msra.mxu0 %v1236
      %1266 = vmatprep.subr.mxu0 0.0
      %1267 = vmatpush1.msra.mxu0 0.0
      %1268 = vmatprep.subr.mxu0 0.0
      %1269 = vmatpush1.msra.mxu0 0.0
      %1270 = vmatprep.subr.mxu0 0.0
      %1271 = vmatpush1.msra.mxu0 0.0
      %1272 = vmatprep.subr.mxu0 0.0
      %1273 = vmatpush1.msra.mxu0 0.0
      %1274 = vmatprep.subr.mxu0 0.0
      %1275 = vmatpush1.msra.mxu0 0.0
      %1276 = vmatprep.subr.mxu0 0.0
      %1277 = vmatpush1.msra.mxu0 0.0
      %1278 = vmatprep.subr.mxu0 0.0
      %1279 = vmatpush1.msra.mxu0 0.0
      %1280 = vmatprep.subr.mxu0 0.0
      %1281 = vmatpush1.msra.mxu0 0.0
      %1282 = vmatprep.subr.mxu0 0.0
      %1283 = vmatpush1.msra.mxu0 0.0
      %1284 = vmatprep.subr.mxu0 0.0
      %1285 = vmatpush1.msra.mxu0 0.0
      %1286 = vmatprep.subr.mxu0 0.0
      %1287 = vmatpush1.msra.mxu0 0.0
      %1288 = vmatprep.subr.mxu0 0.0
      %1289 = vmatpush1.msra.mxu0 0.0
      %1290 = vmatprep.subr.mxu0 0.0
      %1291 = vmatpush1.msra.mxu0 0.0
      %1292 = vmatprep.subr.mxu0 0.0
      %1293 = vmatpush1.msra.mxu0 0.0
      %1294 = vmatprep.subr.mxu0 0.0
      %1295 = vmatpush1.msra.mxu0 0.0
      %1296 = vmatprep.subr.mxu0 0.0
      %1297 = vmatpush1.msra.mxu0 0.0
      %1298 = vmatprep.subr.mxu0 0.0
      %1299 = vmatpush1.msra.mxu0 0.0
      %1300 = vmatprep.subr.mxu0 0.0
      %1301 = vmatpush1.msra.mxu0 0.0
      %1302 = vmatprep.subr.mxu0 0.0
      %1303 = vmatpush1.msra.mxu0 0.0
      %1304 = vmatprep.subr.mxu0 0.0
      %1305 = vmatpush1.msra.mxu0 0.0
      %1306 = vmatprep.subr.mxu0 0.0
      %1307 = vmatpush1.msra.mxu0 0.0
      %1308 = vmatprep.mubr.f32.mxu0 0.0
      %1309 = vmatmul.mubr.f32.gmra.mrb[0].mxu0 %v1232
      %v1310 = vpop.f32.mrb[0].mxu0
      %v1311 = vadd.f32 %v1229, %v1310
      %v1312 = vpop.f32.mrb[0].mxu0
      %v1313 = vadd.f32 %v1229, %v1312
      %1314 = vdwg.mxu0
      %1315 = vmatprep.subr.mxu0 0.0
      %1316 = vmatpush1.msra.mxu0 %v1193
      %1317 = vmatprep.subr.mxu0 0.0
      %1318 = vmatpush1.msra.mxu0 %v1196
      %1319 = vmatprep.subr.mxu0 0.0
      %1320 = vmatpush1.msra.mxu0 %v1199
      %1321 = vmatprep.subr.mxu0 0.0
      %1322 = vmatpush1.msra.mxu0 %v1202
      %1323 = vmatprep.subr.mxu0 0.0
      %1324 = vmatpush1.msra.mxu0 %v1205
      %1325 = vmatprep.subr.mxu0 0.0
      %1326 = vmatpush1.msra.mxu0 %v1208
      %1327 = vmatprep.subr.mxu0 0.0
      %1328 = vmatpush1.msra.mxu0 %v1211
      %1329 = vmatprep.subr.mxu0 0.0
      %1330 = vmatpush1.msra.mxu0 %v1214
      %1331 = vmatprep.subr.mxu0 0.0
      %1332 = vmatpush1.msra.mxu0 %v1217
      %1333 = vmatprep.subr.mxu0 0.0
      %1334 = vmatpush1.msra.mxu0 %v1220
      %1335 = vmatprep.subr.mxu0 0.0
      %1336 = vmatpush1.msra.mxu0 %v1242
      %1337 = vmatprep.subr.mxu0 0.0
      %1338 = vmatpush1.msra.mxu0 0.0
      %1339 = vmatprep.subr.mxu0 0.0
      %1340 = vmatpush1.msra.mxu0 0.0
      %1341 = vmatprep.subr.mxu0 0.0
      %1342 = vmatpush1.msra.mxu0 0.0
      %1343 = vmatprep.subr.mxu0 0.0
      %1344 = vmatpush1.msra.mxu0 0.0
      %1345 = vmatprep.subr.mxu0 0.0
      %1346 = vmatpush1.msra.mxu0 0.0
      %1347 = vmatprep.subr.mxu0 0.0
      %1348 = vmatpush1.msra.mxu0 0.0
      %1349 = vmatprep.subr.mxu0 0.0
      %1350 = vmatpush1.msra.mxu0 0.0
      %1351 = vmatprep.subr.mxu0 0.0
      %1352 = vmatpush1.msra.mxu0 0.0
      %1353 = vmatprep.subr.mxu0 0.0
      %1354 = vmatpush1.msra.mxu0 0.0
      %1355 = vmatprep.subr.mxu0 0.0
      %1356 = vmatpush1.msra.mxu0 0.0
      %1357 = vmatprep.subr.mxu0 0.0
      %1358 = vmatpush1.msra.mxu0 0.0
      %1359 = vmatprep.subr.mxu0 0.0
      %1360 = vmatpush1.msra.mxu0 0.0
      %1361 = vmatprep.subr.mxu0 0.0
      %1362 = vmatpush1.msra.mxu0 0.0
      %1363 = vmatprep.subr.mxu0 0.0
      %1364 = vmatpush1.msra.mxu0 0.0
      %1365 = vmatprep.subr.mxu0 0.0
      %1366 = vmatpush1.msra.mxu0 0.0
      %1367 = vmatprep.subr.mxu0 0.0
      %1368 = vmatpush1.msra.mxu0 0.0
      %1369 = vmatprep.subr.mxu0 0.0
      %1370 = vmatpush1.msra.mxu0 0.0
      %1371 = vmatprep.subr.mxu0 0.0
      %1372 = vmatpush1.msra.mxu0 0.0
      %1373 = vmatprep.subr.mxu0 0.0
      %1374 = vmatpush1.msra.mxu0 0.0
      %1375 = vmatprep.subr.mxu0 0.0
      %1376 = vmatpush1.msra.mxu0 0.0
      %1377 = vmatprep.subr.mxu0 0.0
      %1378 = vmatpush1.msra.mxu0 0.0
      %1379 = vmatprep.mubr.f32.mxu0 0.0
      %1380 = vmatmul.mubr.f32.gmra.mrb[0].mxu0 %v1232
      %v1381 = vpop.f32.mrb[0].mxu0
      %v1382 = vadd.f32 %v1229, %v1381
      %v1383 = vpop.f32.mrb[0].mxu0
      %1384 = vdwg.mxu0
      %v1385 = vmax.f32 %v1311, 0.0
      %v1386 = vmax.f32 %v1313, 0.0
      %v1387 = vmax.f32 %v1382, 0.0
      %v1389 = vlaneseq
      %v1390 = vshrl.u32 %v1389, 7
      %v1391 = vsub.s32 0, %v1390
      %v1392 = vrot.slane %v314, %v1391
      %v1393 = vlaneseq
      %v1394 = vshrl.u32 %v1393, 7
      %v1395 = vsub.s32 1, %v1394
      %v1396 = vrot.slane %v314, %v1395
      %v1397 = vlaneseq
      %v1398 = vshrl.u32 %v1397, 7
      %v1399 = vsub.s32 2, %v1398
      %v1400 = vrot.slane %v314, %v1399
      %v1404 = vmul.f32 %v1385, %v1392
      %v1405 = vmul.f32 %v1386, %v1396
      %v1406 = vmul.f32 %v1387, %v1400
      %1410 = vrot.lane.b32.xlu0 %v1404, 100
      %v1411 = vpop.permute.xlu0 %1410
      %1412 = vrot.lane.b32.xlu0 %v1405, 100
      %v1413 = vpop.permute.xlu0 %1412
      %1414 = vrot.lane.b32.xlu0 %v1406, 100
      %v1415 = vpop.permute.xlu0 %1414
      %v1416 = vsel %vm459, %v1411, %v1413
      %v1417 = vsel %vm459, %v1413, %v1415
      %vm1422 = vcmask 1048352
      %1423 = vst.msk [vmem:[#allocation2] sm:$0xff] %vm1422, %v1411
      %1424 = vst [vmem:[#allocation2 + $0x8] sm:$0xff] %v1416
      %1425 = vst [vmem:[#allocation2 + $0x10] sm:$0xff] %v1417
      %1426 = vst.msk [vmem:[#allocation2 + $0x18] sm:$0xff] %vm459, %v1415
      %v1427 = vld [vmem:[#allocation2] sm:$0xff]
      %v1428 = vld [vmem:[#allocation2 + $0x8] sm:$0xff]
      %v1429 = vld [vmem:[#allocation2 + $0x10] sm:$0xff]
      %v1430 = vld [vmem:[#allocation2 + $0x18] sm:$0xff]
      %1435 = vrot.lane.b32.xlu0 %v1427, 78
      %v1436 = vpop.permute.xlu0 %1435
      %1437 = vrot.lane.b32.xlu0 %v1428, 78
      %v1438 = vpop.permute.xlu0 %1437
      %1439 = vrot.lane.b32.xlu0 %v1429, 78
      %v1440 = vpop.permute.xlu0 %1439
      %1441 = vrot.lane.b32.xlu0 %v1430, 78
      %v1442 = vpop.permute.xlu0 %1441
      %v1443 = vsel %vm536, %v1436, %v1438
      %v1444 = vsel %vm536, %v1438, %v1440
      %v1445 = vsel %vm536, %v1440, %v1442
      %1449 = vst [vmem:[#allocation4] sm:$0xff] %v1443
      %1450 = vst [vmem:[#allocation4 + $0x8] sm:$0xff] %v1444
      %1451 = vst [vmem:[#allocation4 + $0x10] sm:$0xff] %v1445
      %v1452 = vld [vmem:[#allocation2] sm:$0xff]
      %v1453 = vld [vmem:[#allocation2 + $0x8] sm:$0xff]
      %v1454 = vld [vmem:[#allocation2 + $0x10] sm:$0xff]
      %v1455 = vld [vmem:[#allocation2 + $0x18] sm:$0xff]
      %1460 = vrot.lane.b32.xlu0 %v1452, 77
      %v1461 = vpop.permute.xlu0 %1460
      %1462 = vrot.lane.b32.xlu0 %v1453, 77
      %v1463 = vpop.permute.xlu0 %1462
      %1464 = vrot.lane.b32.xlu0 %v1454, 77
      %v1465 = vpop.permute.xlu0 %1464
      %1466 = vrot.lane.b32.xlu0 %v1455, 77
      %v1467 = vpop.permute.xlu0 %1466
      %v1468 = vsel %vm547, %v1461, %v1463
      %v1469 = vsel %vm547, %v1463, %v1465
      %v1470 = vsel %vm547, %v1465, %v1467
      %1474 = vst [vmem:[#allocation4 + $0x18] sm:$0xff] %v1468
      %1475 = vst [vmem:[#allocation4 + $0x20] sm:$0xff] %v1469
      %1476 = vst [vmem:[#allocation4 + $0x28] sm:$0xff] %v1470
      %v1477 = vld [vmem:[#allocation2] sm:$0xff]
      %v1478 = vld [vmem:[#allocation2 + $0x8] sm:$0xff]
      %v1479 = vld [vmem:[#allocation2 + $0x10] sm:$0xff]
      %v1480 = vld [vmem:[#allocation2 + $0x18] sm:$0xff]
      %1485 = vrot.lane.b32.xlu0 %v1477, 76
      %v1486 = vpop.permute.xlu0 %1485
      %1487 = vrot.lane.b32.xlu0 %v1478, 76
      %v1488 = vpop.permute.xlu0 %1487
      %1489 = vrot.lane.b32.xlu0 %v1479, 76
      %v1490 = vpop.permute.xlu0 %1489
      %1491 = vrot.lane.b32.xlu0 %v1480, 76
      %v1492 = vpop.permute.xlu0 %1491
      %v1493 = vsel %vm558, %v1486, %v1488
      %v1494 = vsel %vm558, %v1488, %v1490
      %v1495 = vsel %vm558, %v1490, %v1492
      %1499 = vst [vmem:[#allocation4 + $0x30] sm:$0xff] %v1493
      %1500 = vst [vmem:[#allocation4 + $0x38] sm:$0xff] %v1494
      %1501 = vst [vmem:[#allocation4 + $0x40] sm:$0xff] %v1495
      %v1502 = vld [vmem:[#allocation2] sm:$0xff]
      %v1503 = vld [vmem:[#allocation2 + $0x8] sm:$0xff]
      %v1504 = vld [vmem:[#allocation2 + $0x10] sm:$0xff]
      %v1505 = vld [vmem:[#allocation2 + $0x18] sm:$0xff]
      %1510 = vrot.lane.b32.xlu0 %v1502, 75
      %v1511 = vpop.permute.xlu0 %1510
      %1512 = vrot.lane.b32.xlu0 %v1503, 75
      %v1513 = vpop.permute.xlu0 %1512
      %1514 = vrot.lane.b32.xlu0 %v1504, 75
      %v1515 = vpop.permute.xlu0 %1514
      %1516 = vrot.lane.b32.xlu0 %v1505, 75
      %v1517 = vpop.permute.xlu0 %1516
      %v1518 = vsel %vm569, %v1511, %v1513
      %v1519 = vsel %vm569, %v1513, %v1515
      %v1520 = vsel %vm569, %v1515, %v1517
      %1524 = vst [vmem:[#allocation4 + $0x48] sm:$0xff] %v1518
      %1525 = vst [vmem:[#allocation4 + $0x50] sm:$0xff] %v1519
      %1526 = vst [vmem:[#allocation4 + $0x58] sm:$0xff] %v1520
      %v1527 = vld [vmem:[#allocation2] sm:$0xff]
      %v1528 = vld [vmem:[#allocation2 + $0x8] sm:$0xff]
      %v1529 = vld [vmem:[#allocation2 + $0x10] sm:$0xff]
      %v1530 = vld [vmem:[#allocation2 + $0x18] sm:$0xff]
      %1535 = vrot.lane.b32.xlu0 %v1527, 74
      %v1536 = vpop.permute.xlu0 %1535
      %1537 = vrot.lane.b32.xlu0 %v1528, 74
      %v1538 = vpop.permute.xlu0 %1537
      %1539 = vrot.lane.b32.xlu0 %v1529, 74
      %v1540 = vpop.permute.xlu0 %1539
      %1541 = vrot.lane.b32.xlu0 %v1530, 74
      %v1542 = vpop.permute.xlu0 %1541
      %v1543 = vsel %vm580, %v1536, %v1538
      %v1544 = vsel %vm580, %v1538, %v1540
      %v1545 = vsel %vm580, %v1540, %v1542
      %1549 = vst [vmem:[#allocation4 + $0x60] sm:$0xff] %v1543
      %1550 = vst [vmem:[#allocation4 + $0x68] sm:$0xff] %v1544
      %1551 = vst [vmem:[#allocation4 + $0x70] sm:$0xff] %v1545
      %v1552 = vld [vmem:[#allocation2] sm:$0xff]
      %v1553 = vld [vmem:[#allocation2 + $0x8] sm:$0xff]
      %v1554 = vld [vmem:[#allocation2 + $0x10] sm:$0xff]
      %v1555 = vld [vmem:[#allocation2 + $0x18] sm:$0xff]
      %1560 = vrot.lane.b32.xlu0 %v1552, 54
      %v1561 = vpop.permute.xlu0 %1560
      %1562 = vrot.lane.b32.xlu0 %v1553, 54
      %v1563 = vpop.permute.xlu0 %1562
      %1564 = vrot.lane.b32.xlu0 %v1554, 54
      %v1565 = vpop.permute.xlu0 %1564
      %1566 = vrot.lane.b32.xlu0 %v1555, 54
      %v1567 = vpop.permute.xlu0 %1566
      %v1568 = vsel %vm635, %v1561, %v1563
      %v1569 = vsel %vm635, %v1563, %v1565
      %v1570 = vsel %vm635, %v1565, %v1567
      %1574 = vst [vmem:[#allocation4 + $0x78] sm:$0xff] %v1568
      %1575 = vst [vmem:[#allocation4 + $0x80] sm:$0xff] %v1569
      %1576 = vst [vmem:[#allocation4 + $0x88] sm:$0xff] %v1570
      %v1577 = vld [vmem:[#allocation2] sm:$0xff]
      %v1578 = vld [vmem:[#allocation2 + $0x8] sm:$0xff]
      %v1579 = vld [vmem:[#allocation2 + $0x10] sm:$0xff]
      %v1580 = vld [vmem:[#allocation2 + $0x18] sm:$0xff]
      %1585 = vrot.lane.b32.xlu0 %v1577, 53
      %v1586 = vpop.permute.xlu0 %1585
      %1587 = vrot.lane.b32.xlu0 %v1578, 53
      %v1588 = vpop.permute.xlu0 %1587
      %1589 = vrot.lane.b32.xlu0 %v1579, 53
      %v1590 = vpop.permute.xlu0 %1589
      %1591 = vrot.lane.b32.xlu0 %v1580, 53
      %v1592 = vpop.permute.xlu0 %1591
      %v1593 = vsel %vm646, %v1586, %v1588
      %v1594 = vsel %vm646, %v1588, %v1590
      %v1595 = vsel %vm646, %v1590, %v1592
      %1599 = vst [vmem:[#allocation4 + $0x90] sm:$0xff] %v1593
      %1600 = vst [vmem:[#allocation4 + $0x98] sm:$0xff] %v1594
      %1601 = vst [vmem:[#allocation4 + $0xa0] sm:$0xff] %v1595
      %v1602 = vld [vmem:[#allocation2] sm:$0xff]
      %v1603 = vld [vmem:[#allocation2 + $0x8] sm:$0xff]
      %v1604 = vld [vmem:[#allocation2 + $0x10] sm:$0xff]
      %v1605 = vld [vmem:[#allocation2 + $0x18] sm:$0xff]
      %1610 = vrot.lane.b32.xlu0 %v1602, 52
      %v1611 = vpop.permute.xlu0 %1610
      %1612 = vrot.lane.b32.xlu0 %v1603, 52
      %v1613 = vpop.permute.xlu0 %1612
      %1614 = vrot.lane.b32.xlu0 %v1604, 52
      %v1615 = vpop.permute.xlu0 %1614
      %1616 = vrot.lane.b32.xlu0 %v1605, 52
      %v1617 = vpop.permute.xlu0 %1616
      %v1618 = vsel %vm657, %v1611, %v1613
      %v1619 = vsel %vm657, %v1613, %v1615
      %v1620 = vsel %vm657, %v1615, %v1617
      %1624 = vst [vmem:[#allocation4 + $0xa8] sm:$0xff] %v1618
      %1625 = vst [vmem:[#allocation4 + $0xb0] sm:$0xff] %v1619
      %1626 = vst [vmem:[#allocation4 + $0xb8] sm:$0xff] %v1620
      %v1627 = vld [vmem:[#allocation2] sm:$0xff]
      %v1628 = vld [vmem:[#allocation2 + $0x8] sm:$0xff]
      %v1629 = vld [vmem:[#allocation2 + $0x10] sm:$0xff]
      %v1630 = vld [vmem:[#allocation2 + $0x18] sm:$0xff]
      %1635 = vrot.lane.b32.xlu0 %v1627, 51
      %v1636 = vpop.permute.xlu0 %1635
      %1637 = vrot.lane.b32.xlu0 %v1628, 51
      %v1638 = vpop.permute.xlu0 %1637
      %1639 = vrot.lane.b32.xlu0 %v1629, 51
      %v1640 = vpop.permute.xlu0 %1639
      %1641 = vrot.lane.b32.xlu0 %v1630, 51
      %v1642 = vpop.permute.xlu0 %1641
      %v1643 = vsel %vm668, %v1636, %v1638
      %v1644 = vsel %vm668, %v1638, %v1640
      %v1645 = vsel %vm668, %v1640, %v1642
      %1649 = vst [vmem:[#allocation4 + $0xc0] sm:$0xff] %v1643
      %1650 = vst [vmem:[#allocation4 + $0xc8] sm:$0xff] %v1644
      %1651 = vst [vmem:[#allocation4 + $0xd0] sm:$0xff] %v1645
      %v1652 = vld [vmem:[#allocation2] sm:$0xff]
      %v1653 = vld [vmem:[#allocation2 + $0x8] sm:$0xff]
      %v1654 = vld [vmem:[#allocation2 + $0x10] sm:$0xff]
      %v1655 = vld [vmem:[#allocation2 + $0x18] sm:$0xff]
      %1660 = vrot.lane.b32.xlu0 %v1652, 50
      %v1661 = vpop.permute.xlu0 %1660
      %1662 = vrot.lane.b32.xlu0 %v1653, 50
      %v1663 = vpop.permute.xlu0 %1662
      %1664 = vrot.lane.b32.xlu0 %v1654, 50
      %v1665 = vpop.permute.xlu0 %1664
      %1666 = vrot.lane.b32.xlu0 %v1655, 50
      %v1667 = vpop.permute.xlu0 %1666
      %v1668 = vsel %vm679, %v1661, %v1663
      %v1669 = vsel %vm679, %v1663, %v1665
      %v1670 = vsel %vm679, %v1665, %v1667
      %1674 = vst [vmem:[#allocation4 + $0xd8] sm:$0xff] %v1668
      %1675 = vst [vmem:[#allocation4 + $0xe0] sm:$0xff] %v1669
      %1676 = vst [vmem:[#allocation4 + $0xe8] sm:$0xff] %v1670
      %v1677 = vld [vmem:[#allocation2] sm:$0xff]
      %v1678 = vld [vmem:[#allocation2 + $0x8] sm:$0xff]
      %v1679 = vld [vmem:[#allocation2 + $0x10] sm:$0xff]
      %v1680 = vld [vmem:[#allocation2 + $0x18] sm:$0xff]
      %1685 = vrot.lane.b32.xlu0 %v1677, 30
      %v1686 = vpop.permute.xlu0 %1685
      %1687 = vrot.lane.b32.xlu0 %v1678, 30
      %v1688 = vpop.permute.xlu0 %1687
      %1689 = vrot.lane.b32.xlu0 %v1679, 30
      %v1690 = vpop.permute.xlu0 %1689
      %1691 = vrot.lane.b32.xlu0 %v1680, 30
      %v1692 = vpop.permute.xlu0 %1691
      %v1693 = vsel %vm734, %v1686, %v1688
      %v1694 = vsel %vm734, %v1688, %v1690
      %v1695 = vsel %vm734, %v1690, %v1692
      %1699 = vst [vmem:[#allocation4 + $0xf0] sm:$0xff] %v1693
      %1700 = vst [vmem:[#allocation4 + $0xf8] sm:$0xff] %v1694
      %1701 = vst [vmem:[#allocation4 + $0x100] sm:$0xff] %v1695
      %v1702 = vld [vmem:[#allocation2] sm:$0xff]
      %v1703 = vld [vmem:[#allocation2 + $0x8] sm:$0xff]
      %v1704 = vld [vmem:[#allocation2 + $0x10] sm:$0xff]
      %v1705 = vld [vmem:[#allocation2 + $0x18] sm:$0xff]
      %1710 = vrot.lane.b32.xlu0 %v1702, 29
      %v1711 = vpop.permute.xlu0 %1710
      %1712 = vrot.lane.b32.xlu0 %v1703, 29
      %v1713 = vpop.permute.xlu0 %1712
      %1714 = vrot.lane.b32.xlu0 %v1704, 29
      %v1715 = vpop.permute.xlu0 %1714
      %1716 = vrot.lane.b32.xlu0 %v1705, 29
      %v1717 = vpop.permute.xlu0 %1716
      %v1718 = vsel %vm745, %v1711, %v1713
      %v1719 = vsel %vm745, %v1713, %v1715
      %v1720 = vsel %vm745, %v1715, %v1717
      %1724 = vst [vmem:[#allocation4 + $0x108] sm:$0xff] %v1718
      %1725 = vst [vmem:[#allocation4 + $0x110] sm:$0xff] %v1719
      %1726 = vst [vmem:[#allocation4 + $0x118] sm:$0xff] %v1720
      %v1727 = vld [vmem:[#allocation2] sm:$0xff]
      %v1728 = vld [vmem:[#allocation2 + $0x8] sm:$0xff]
      %v1729 = vld [vmem:[#allocation2 + $0x10] sm:$0xff]
      %v1730 = vld [vmem:[#allocation2 + $0x18] sm:$0xff]
      %1735 = vrot.lane.b32.xlu0 %v1727, 28
      %v1736 = vpop.permute.xlu0 %1735
      %1737 = vrot.lane.b32.xlu0 %v1728, 28
      %v1738 = vpop.permute.xlu0 %1737
      %1739 = vrot.lane.b32.xlu0 %v1729, 28
      %v1740 = vpop.permute.xlu0 %1739
      %1741 = vrot.lane.b32.xlu0 %v1730, 28
      %v1742 = vpop.permute.xlu0 %1741
      %v1743 = vsel %vm756, %v1736, %v1738
      %v1744 = vsel %vm756, %v1738, %v1740
      %v1745 = vsel %vm756, %v1740, %v1742
      %1749 = vst [vmem:[#allocation4 + $0x120] sm:$0xff] %v1743
      %1750 = vst [vmem:[#allocation4 + $0x128] sm:$0xff] %v1744
      %1751 = vst [vmem:[#allocation4 + $0x130] sm:$0xff] %v1745
      %v1752 = vld [vmem:[#allocation2] sm:$0xff]
      %v1753 = vld [vmem:[#allocation2 + $0x8] sm:$0xff]
      %v1754 = vld [vmem:[#allocation2 + $0x10] sm:$0xff]
      %v1755 = vld [vmem:[#allocation2 + $0x18] sm:$0xff]
      %1760 = vrot.lane.b32.xlu0 %v1752, 27
      %v1761 = vpop.permute.xlu0 %1760
      %1762 = vrot.lane.b32.xlu0 %v1753, 27
      %v1763 = vpop.permute.xlu0 %1762
      %1764 = vrot.lane.b32.xlu0 %v1754, 27
      %v1765 = vpop.permute.xlu0 %1764
      %1766 = vrot.lane.b32.xlu0 %v1755, 27
      %v1767 = vpop.permute.xlu0 %1766
      %v1768 = vsel %vm767, %v1761, %v1763
      %v1769 = vsel %vm767, %v1763, %v1765
      %v1770 = vsel %vm767, %v1765, %v1767
      %1774 = vst [vmem:[#allocation4 + $0x138] sm:$0xff] %v1768
      %1775 = vst [vmem:[#allocation4 + $0x140] sm:$0xff] %v1769
      %1776 = vst [vmem:[#allocation4 + $0x148] sm:$0xff] %v1770
      %v1777 = vld [vmem:[#allocation2] sm:$0xff]
      %v1778 = vld [vmem:[#allocation2 + $0x8] sm:$0xff]
      %v1779 = vld [vmem:[#allocation2 + $0x10] sm:$0xff]
      %v1780 = vld [vmem:[#allocation2 + $0x18] sm:$0xff]
      %1785 = vrot.lane.b32.xlu0 %v1777, 26
      %v1786 = vpop.permute.xlu0 %1785
      %1787 = vrot.lane.b32.xlu0 %v1778, 26
      %v1788 = vpop.permute.xlu0 %1787
      %1789 = vrot.lane.b32.xlu0 %v1779, 26
      %v1790 = vpop.permute.xlu0 %1789
      %1791 = vrot.lane.b32.xlu0 %v1780, 26
      %v1792 = vpop.permute.xlu0 %1791
      %v1793 = vsel %vm778, %v1786, %v1788
      %v1794 = vsel %vm778, %v1788, %v1790
      %v1795 = vsel %vm778, %v1790, %v1792
      %1799 = vst [vmem:[#allocation4 + $0x150] sm:$0xff] %v1793
      %1800 = vst [vmem:[#allocation4 + $0x158] sm:$0xff] %v1794
      %1801 = vst [vmem:[#allocation4 + $0x160] sm:$0xff] %v1795
      %v1802 = vld [vmem:[#allocation2] sm:$0xff]
      %v1803 = vld [vmem:[#allocation2 + $0x8] sm:$0xff]
      %v1804 = vld [vmem:[#allocation2 + $0x10] sm:$0xff]
      %v1805 = vld [vmem:[#allocation2 + $0x18] sm:$0xff]
      %1810 = vrot.lane.b32.xlu0 %v1802, 6
      %v1811 = vpop.permute.xlu0 %1810
      %1812 = vrot.lane.b32.xlu0 %v1803, 6
      %v1813 = vpop.permute.xlu0 %1812
      %1814 = vrot.lane.b32.xlu0 %v1804, 6
      %v1815 = vpop.permute.xlu0 %1814
      %1816 = vrot.lane.b32.xlu0 %v1805, 6
      %v1817 = vpop.permute.xlu0 %1816
      %v1818 = vsel %vm833, %v1811, %v1813
      %v1819 = vsel %vm833, %v1813, %v1815
      %v1820 = vsel %vm833, %v1815, %v1817
      %1824 = vst [vmem:[#allocation4 + $0x168] sm:$0xff] %v1818
      %1825 = vst [vmem:[#allocation4 + $0x170] sm:$0xff] %v1819
      %1826 = vst [vmem:[#allocation4 + $0x178] sm:$0xff] %v1820
      %v1827 = vld [vmem:[#allocation2] sm:$0xff]
      %v1828 = vld [vmem:[#allocation2 + $0x8] sm:$0xff]
      %v1829 = vld [vmem:[#allocation2 + $0x10] sm:$0xff]
      %v1830 = vld [vmem:[#allocation2 + $0x18] sm:$0xff]
      %1835 = vrot.lane.b32.xlu0 %v1827, 5
      %v1836 = vpop.permute.xlu0 %1835
      %1837 = vrot.lane.b32.xlu0 %v1828, 5
      %v1838 = vpop.permute.xlu0 %1837
      %1839 = vrot.lane.b32.xlu0 %v1829, 5
      %v1840 = vpop.permute.xlu0 %1839
      %1841 = vrot.lane.b32.xlu0 %v1830, 5
      %v1842 = vpop.permute.xlu0 %1841
      %v1843 = vsel %vm844, %v1836, %v1838
      %v1844 = vsel %vm844, %v1838, %v1840
      %v1845 = vsel %vm844, %v1840, %v1842
      %1849 = vst [vmem:[#allocation4 + $0x180] sm:$0xff] %v1843
      %1850 = vst [vmem:[#allocation4 + $0x188] sm:$0xff] %v1844
      %1851 = vst [vmem:[#allocation4 + $0x190] sm:$0xff] %v1845
      %v1852 = vld [vmem:[#allocation2] sm:$0xff]
      %v1853 = vld [vmem:[#allocation2 + $0x8] sm:$0xff]
      %v1854 = vld [vmem:[#allocation2 + $0x10] sm:$0xff]
      %v1855 = vld [vmem:[#allocation2 + $0x18] sm:$0xff]
      %1860 = vrot.lane.b32.xlu0 %v1852, 4
      %v1861 = vpop.permute.xlu0 %1860
      %1862 = vrot.lane.b32.xlu0 %v1853, 4
      %v1863 = vpop.permute.xlu0 %1862
      %1864 = vrot.lane.b32.xlu0 %v1854, 4
      %v1865 = vpop.permute.xlu0 %1864
      %1866 = vrot.lane.b32.xlu0 %v1855, 4
      %v1867 = vpop.permute.xlu0 %1866
      %v1868 = vsel %vm855, %v1861, %v1863
      %v1869 = vsel %vm855, %v1863, %v1865
      %v1870 = vsel %vm855, %v1865, %v1867
      %1874 = vst [vmem:[#allocation4 + $0x198] sm:$0xff] %v1868
      %1875 = vst [vmem:[#allocation4 + $0x1a0] sm:$0xff] %v1869
      %1876 = vst [vmem:[#allocation4 + $0x1a8] sm:$0xff] %v1870
      %v1877 = vld [vmem:[#allocation2] sm:$0xff]
      %v1878 = vld [vmem:[#allocation2 + $0x8] sm:$0xff]
      %v1879 = vld [vmem:[#allocation2 + $0x10] sm:$0xff]
      %v1880 = vld [vmem:[#allocation2 + $0x18] sm:$0xff]
      %1885 = vrot.lane.b32.xlu0 %v1877, 3
      %v1886 = vpop.permute.xlu0 %1885
      %1887 = vrot.lane.b32.xlu0 %v1878, 3
      %v1888 = vpop.permute.xlu0 %1887
      %1889 = vrot.lane.b32.xlu0 %v1879, 3
      %v1890 = vpop.permute.xlu0 %1889
      %1891 = vrot.lane.b32.xlu0 %v1880, 3
      %v1892 = vpop.permute.xlu0 %1891
      %v1893 = vsel %vm866, %v1886, %v1888
      %v1894 = vsel %vm866, %v1888, %v1890
      %v1895 = vsel %vm866, %v1890, %v1892
      %1899 = vst [vmem:[#allocation4 + $0x1b0] sm:$0xff] %v1893
      %1900 = vst [vmem:[#allocation4 + $0x1b8] sm:$0xff] %v1894
      %1901 = vst [vmem:[#allocation4 + $0x1c0] sm:$0xff] %v1895
      %v1902 = vld [vmem:[#allocation2] sm:$0xff]
      %v1903 = vld [vmem:[#allocation2 + $0x8] sm:$0xff]
      %v1904 = vld [vmem:[#allocation2 + $0x10] sm:$0xff]
      %v1905 = vld [vmem:[#allocation2 + $0x18] sm:$0xff]
      %1910 = vrot.lane.b32.xlu0 %v1902, 2
      %v1911 = vpop.permute.xlu0 %1910
      %1912 = vrot.lane.b32.xlu0 %v1903, 2
      %v1913 = vpop.permute.xlu0 %1912
      %1914 = vrot.lane.b32.xlu0 %v1904, 2
      %v1915 = vpop.permute.xlu0 %1914
      %1916 = vrot.lane.b32.xlu0 %v1905, 2
      %v1917 = vpop.permute.xlu0 %1916
      %v1918 = vsel %vm877, %v1911, %v1913
      %v1919 = vsel %vm877, %v1913, %v1915
      %v1920 = vsel %vm877, %v1915, %v1917
      %1924 = vst [vmem:[#allocation4 + $0x1c8] sm:$0xff] %v1918
      %1925 = vst [vmem:[#allocation4 + $0x1d0] sm:$0xff] %v1919
      %1926 = vst [vmem:[#allocation4 + $0x1d8] sm:$0xff] %v1920
      %v1927 = vld [vmem:[#allocation2 + $0x8] sm:$0xff]
      %v1928 = vld [vmem:[#allocation2 + $0x10] sm:$0xff]
      %v1929 = vld [vmem:[#allocation2 + $0x18] sm:$0xff]
      %v1930 = vld [vmem:[#allocation2 + $0x20] sm:$0xff]
      %1935 = vrot.lane.b32.xlu0 %v1927, 110
      %v1936 = vpop.permute.xlu0 %1935
      %1937 = vrot.lane.b32.xlu0 %v1928, 110
      %v1938 = vpop.permute.xlu0 %1937
      %1939 = vrot.lane.b32.xlu0 %v1929, 110
      %v1940 = vpop.permute.xlu0 %1939
      %1941 = vrot.lane.b32.xlu0 %v1930, 110
      %v1942 = vpop.permute.xlu0 %1941
      %v1943 = vsel %vm925, %v1936, %v1938
      %v1944 = vsel %vm925, %v1938, %v1940
      %v1945 = vsel %vm925, %v1940, %v1942
      %1949 = vst [vmem:[#allocation4 + $0x1e0] sm:$0xff] %v1943
      %1950 = vst [vmem:[#allocation4 + $0x1e8] sm:$0xff] %v1944
      %1951 = vst [vmem:[#allocation4 + $0x1f0] sm:$0xff] %v1945
      %v1952 = vld [vmem:[#allocation2 + $0x8] sm:$0xff]
      %v1953 = vld [vmem:[#allocation2 + $0x10] sm:$0xff]
      %v1954 = vld [vmem:[#allocation2 + $0x18] sm:$0xff]
      %v1955 = vld [vmem:[#allocation2 + $0x20] sm:$0xff]
      %1960 = vrot.lane.b32.xlu0 %v1952, 109
      %v1961 = vpop.permute.xlu0 %1960
      %1962 = vrot.lane.b32.xlu0 %v1953, 109
      %v1963 = vpop.permute.xlu0 %1962
      %1964 = vrot.lane.b32.xlu0 %v1954, 109
      %v1965 = vpop.permute.xlu0 %1964
      %1966 = vrot.lane.b32.xlu0 %v1955, 109
      %v1967 = vpop.permute.xlu0 %1966
      %v1968 = vsel %vm936, %v1961, %v1963
      %v1969 = vsel %vm936, %v1963, %v1965
      %v1970 = vsel %vm936, %v1965, %v1967
      %1974 = vst [vmem:[#allocation4 + $0x1f8] sm:$0xff] %v1968
      %1975 = vst [vmem:[#allocation4 + $0x200] sm:$0xff] %v1969
      %1976 = vst [vmem:[#allocation4 + $0x208] sm:$0xff] %v1970
      %v1977 = vld [vmem:[#allocation2 + $0x8] sm:$0xff]
      %v1978 = vld [vmem:[#allocation2 + $0x10] sm:$0xff]
      %v1979 = vld [vmem:[#allocation2 + $0x18] sm:$0xff]
      %v1980 = vld [vmem:[#allocation2 + $0x20] sm:$0xff]
      %1985 = vrot.lane.b32.xlu0 %v1977, 108
      %v1986 = vpop.permute.xlu0 %1985
      %1987 = vrot.lane.b32.xlu0 %v1978, 108
      %v1988 = vpop.permute.xlu0 %1987
      %1989 = vrot.lane.b32.xlu0 %v1979, 108
      %v1990 = vpop.permute.xlu0 %1989
      %1991 = vrot.lane.b32.xlu0 %v1980, 108
      %v1992 = vpop.permute.xlu0 %1991
      %v1993 = vsel %vm947, %v1986, %v1988
      %v1994 = vsel %vm947, %v1988, %v1990
      %v1995 = vsel %vm947, %v1990, %v1992
      %1999 = vst [vmem:[#allocation4 + $0x210] sm:$0xff] %v1993
      %2000 = vst [vmem:[#allocation4 + $0x218] sm:$0xff] %v1994
      %2001 = vst [vmem:[#allocation4 + $0x220] sm:$0xff] %v1995
      %v2002 = vld [vmem:[#allocation2 + $0x8] sm:$0xff]
      %v2003 = vld [vmem:[#allocation2 + $0x10] sm:$0xff]
      %v2004 = vld [vmem:[#allocation2 + $0x18] sm:$0xff]
      %v2005 = vld [vmem:[#allocation2 + $0x20] sm:$0xff]
      %2010 = vrot.lane.b32.xlu0 %v2002, 107
      %v2011 = vpop.permute.xlu0 %2010
      %2012 = vrot.lane.b32.xlu0 %v2003, 107
      %v2013 = vpop.permute.xlu0 %2012
      %2014 = vrot.lane.b32.xlu0 %v2004, 107
      %v2015 = vpop.permute.xlu0 %2014
      %2016 = vrot.lane.b32.xlu0 %v2005, 107
      %v2017 = vpop.permute.xlu0 %2016
      %v2018 = vsel %vm958, %v2011, %v2013
      %v2019 = vsel %vm958, %v2013, %v2015
      %v2020 = vsel %vm958, %v2015, %v2017
      %2024 = vst [vmem:[#allocation4 + $0x228] sm:$0xff] %v2018
      %2025 = vst [vmem:[#allocation4 + $0x230] sm:$0xff] %v2019
      %2026 = vst [vmem:[#allocation4 + $0x238] sm:$0xff] %v2020
      %v2027 = vld [vmem:[#allocation2 + $0x8] sm:$0xff]
      %v2028 = vld [vmem:[#allocation2 + $0x10] sm:$0xff]
      %v2029 = vld [vmem:[#allocation2 + $0x18] sm:$0xff]
      %v2030 = vld [vmem:[#allocation2 + $0x20] sm:$0xff]
      %2035 = vrot.lane.b32.xlu0 %v2027, 106
      %v2036 = vpop.permute.xlu0 %2035
      %2037 = vrot.lane.b32.xlu0 %v2028, 106
      %v2038 = vpop.permute.xlu0 %2037
      %2039 = vrot.lane.b32.xlu0 %v2029, 106
      %v2040 = vpop.permute.xlu0 %2039
      %2041 = vrot.lane.b32.xlu0 %v2030, 106
      %v2042 = vpop.permute.xlu0 %2041
      %v2043 = vsel %vm969, %v2036, %v2038
      %v2044 = vsel %vm969, %v2038, %v2040
      %v2045 = vsel %vm969, %v2040, %v2042
      %2049 = vst [vmem:[#allocation4 + $0x240] sm:$0xff] %v2043
      %2050 = vst [vmem:[#allocation4 + $0x248] sm:$0xff] %v2044
      %2051 = vst [vmem:[#allocation4 + $0x250] sm:$0xff] %v2045
      %v2052 = vld [vmem:[#allocation4] sm:$0xff]
      %v2053 = vld [vmem:[#allocation4 + $0x8] sm:$0xff]
      %v2054 = vld [vmem:[#allocation4 + $0x10] sm:$0xff]
      %v2055 = vld [vmem:[#allocation4 + $0x18] sm:$0xff]
      %v2056 = vld [vmem:[#allocation4 + $0x20] sm:$0xff]
      %v2057 = vld [vmem:[#allocation4 + $0x28] sm:$0xff]
      %v2058 = vld [vmem:[#allocation4 + $0x30] sm:$0xff]
      %v2059 = vld [vmem:[#allocation4 + $0x38] sm:$0xff]
      %v2060 = vld [vmem:[#allocation4 + $0x40] sm:$0xff]
      %v2061 = vld [vmem:[#allocation4 + $0x48] sm:$0xff]
      %v2062 = vld [vmem:[#allocation4 + $0x50] sm:$0xff]
      %v2063 = vld [vmem:[#allocation4 + $0x58] sm:$0xff]
      %v2064 = vld [vmem:[#allocation4 + $0x60] sm:$0xff]
      %v2065 = vld [vmem:[#allocation4 + $0x68] sm:$0xff]
      %v2066 = vld [vmem:[#allocation4 + $0x70] sm:$0xff]
      %v2067 = vld [vmem:[#allocation4 + $0x78] sm:$0xff]
      %v2068 = vld [vmem:[#allocation4 + $0x80] sm:$0xff]
      %v2069 = vld [vmem:[#allocation4 + $0x88] sm:$0xff]
      %v2070 = vld [vmem:[#allocation4 + $0x90] sm:$0xff]
      %v2071 = vld [vmem:[#allocation4 + $0x98] sm:$0xff]
      %v2072 = vld [vmem:[#allocation4 + $0xa0] sm:$0xff]
      %v2073 = vld [vmem:[#allocation4 + $0xa8] sm:$0xff]
      %v2074 = vld [vmem:[#allocation4 + $0xb0] sm:$0xff]
      %v2075 = vld [vmem:[#allocation4 + $0xb8] sm:$0xff]
      %v2076 = vld [vmem:[#allocation4 + $0xc0] sm:$0xff]
      %v2077 = vld [vmem:[#allocation4 + $0xc8] sm:$0xff]
      %v2078 = vld [vmem:[#allocation4 + $0xd0] sm:$0xff]
      %v2079 = vld [vmem:[#allocation4 + $0xd8] sm:$0xff]
      %v2080 = vld [vmem:[#allocation4 + $0xe0] sm:$0xff]
      %v2081 = vld [vmem:[#allocation4 + $0xe8] sm:$0xff]
      %v2082 = vld [vmem:[#allocation4 + $0xf0] sm:$0xff]
      %v2083 = vld [vmem:[#allocation4 + $0xf8] sm:$0xff]
      %v2084 = vld [vmem:[#allocation4 + $0x100] sm:$0xff]
      %v2085 = vld [vmem:[#allocation4 + $0x108] sm:$0xff]
      %v2086 = vld [vmem:[#allocation4 + $0x110] sm:$0xff]
      %v2087 = vld [vmem:[#allocation4 + $0x118] sm:$0xff]
      %v2088 = vld [vmem:[#allocation4 + $0x120] sm:$0xff]
      %v2089 = vld [vmem:[#allocation4 + $0x128] sm:$0xff]
      %v2090 = vld [vmem:[#allocation4 + $0x130] sm:$0xff]
      %v2091 = vld [vmem:[#allocation4 + $0x138] sm:$0xff]
      %v2092 = vld [vmem:[#allocation4 + $0x140] sm:$0xff]
      %v2093 = vld [vmem:[#allocation4 + $0x148] sm:$0xff]
      %v2094 = vld [vmem:[#allocation4 + $0x150] sm:$0xff]
      %v2095 = vld [vmem:[#allocation4 + $0x158] sm:$0xff]
      %v2096 = vld [vmem:[#allocation4 + $0x160] sm:$0xff]
      %v2097 = vld [vmem:[#allocation4 + $0x168] sm:$0xff]
      %v2098 = vld [vmem:[#allocation4 + $0x170] sm:$0xff]
      %v2099 = vld [vmem:[#allocation4 + $0x178] sm:$0xff]
      %v2100 = vld [vmem:[#allocation4 + $0x180] sm:$0xff]
      %v2101 = vld [vmem:[#allocation4 + $0x188] sm:$0xff]
      %v2102 = vld [vmem:[#allocation4 + $0x190] sm:$0xff]
      %v2103 = vld [vmem:[#allocation4 + $0x198] sm:$0xff]
      %v2104 = vld [vmem:[#allocation4 + $0x1a0] sm:$0xff]
      %v2105 = vld [vmem:[#allocation4 + $0x1a8] sm:$0xff]
      %v2106 = vld [vmem:[#allocation4 + $0x1b0] sm:$0xff]
      %v2107 = vld [vmem:[#allocation4 + $0x1b8] sm:$0xff]
      %v2108 = vld [vmem:[#allocation4 + $0x1c0] sm:$0xff]
      %v2109 = vld [vmem:[#allocation4 + $0x1c8] sm:$0xff]
      %v2110 = vld [vmem:[#allocation4 + $0x1d0] sm:$0xff]
      %v2111 = vld [vmem:[#allocation4 + $0x1d8] sm:$0xff]
      %v2112 = vld [vmem:[#allocation4 + $0x1e0] sm:$0xff]
      %v2113 = vld [vmem:[#allocation4 + $0x1e8] sm:$0xff]
      %v2114 = vld [vmem:[#allocation4 + $0x1f0] sm:$0xff]
      %v2115 = vld [vmem:[#allocation4 + $0x1f8] sm:$0xff]
      %v2116 = vld [vmem:[#allocation4 + $0x200] sm:$0xff]
      %v2117 = vld [vmem:[#allocation4 + $0x208] sm:$0xff]
      %v2118 = vld [vmem:[#allocation4 + $0x210] sm:$0xff]
      %v2119 = vld [vmem:[#allocation4 + $0x218] sm:$0xff]
      %v2120 = vld [vmem:[#allocation4 + $0x220] sm:$0xff]
      %v2121 = vld [vmem:[#allocation4 + $0x228] sm:$0xff]
      %v2122 = vld [vmem:[#allocation4 + $0x230] sm:$0xff]
      %v2123 = vld [vmem:[#allocation4 + $0x238] sm:$0xff]
      %v2124 = vld [vmem:[#allocation4 + $0x240] sm:$0xff]
      %v2125 = vld [vmem:[#allocation4 + $0x248] sm:$0xff]
      %v2126 = vld [vmem:[#allocation4 + $0x250] sm:$0xff]
      %v2127 = vld [vmem:[%s3] sm:$0xff]
      %v2128 = vld [vmem:[%s3 + $0x8] sm:$0xff]
      %v2129 = vld [vmem:[%s4] sm:$0xff]
      %2131 = vset.pattern.permute.xlu0 0
      %2132 = vperm.xlu0 %2131, %v2129
      %v2133 = vpop.permute.xlu0 %2132
      %v2136 = vsel %vm602, %v2128, 0
      %2138 = vmatprep.subr.mxu0 %v2053
      %2139 = vmatpush1.msra.mxu0 %v2052
      %2140 = vmatprep.subr.mxu0 %v2056
      %2141 = vmatpush1.msra.mxu0 %v2055
      %2142 = vmatprep.subr.mxu0 %v2059
      %2143 = vmatpush1.msra.mxu0 %v2058
      %2144 = vmatprep.subr.mxu0 %v2062
      %2145 = vmatpush1.msra.mxu0 %v2061
      %2146 = vmatprep.subr.mxu0 %v2065
      %2147 = vmatpush1.msra.mxu0 %v2064
      %2148 = vmatprep.subr.mxu0 %v2068
      %2149 = vmatpush1.msra.mxu0 %v2067
      %2150 = vmatprep.subr.mxu0 %v2071
      %2151 = vmatpush1.msra.mxu0 %v2070
      %2152 = vmatprep.subr.mxu0 %v2074
      %2153 = vmatpush1.msra.mxu0 %v2073
      %2154 = vmatprep.subr.mxu0 %v2077
      %2155 = vmatpush1.msra.mxu0 %v2076
      %2156 = vmatprep.subr.mxu0 %v2080
      %2157 = vmatpush1.msra.mxu0 %v2079
      %2158 = vmatprep.subr.mxu0 %v2083
      %2159 = vmatpush1.msra.mxu0 %v2082
      %2160 = vmatprep.subr.mxu0 %v2086
      %2161 = vmatpush1.msra.mxu0 %v2085
      %2162 = vmatprep.subr.mxu0 %v2089
      %2163 = vmatpush1.msra.mxu0 %v2088
      %2164 = vmatprep.subr.mxu0 %v2092
      %2165 = vmatpush1.msra.mxu0 %v2091
      %2166 = vmatprep.subr.mxu0 %v2095
      %2167 = vmatpush1.msra.mxu0 %v2094
      %2168 = vmatprep.subr.mxu0 %v2098
      %2169 = vmatpush1.msra.mxu0 %v2097
      %2170 = vmatprep.subr.mxu0 %v2101
      %2171 = vmatpush1.msra.mxu0 %v2100
      %2172 = vmatprep.subr.mxu0 %v2104
      %2173 = vmatpush1.msra.mxu0 %v2103
      %2174 = vmatprep.subr.mxu0 %v2107
      %2175 = vmatpush1.msra.mxu0 %v2106
      %2176 = vmatprep.subr.mxu0 %v2110
      %2177 = vmatpush1.msra.mxu0 %v2109
      %2178 = vmatprep.subr.mxu0 %v2113
      %2179 = vmatpush1.msra.mxu0 %v2112
      %2180 = vmatprep.subr.mxu0 %v2116
      %2181 = vmatpush1.msra.mxu0 %v2115
      %2182 = vmatprep.subr.mxu0 %v2119
      %2183 = vmatpush1.msra.mxu0 %v2118
      %2184 = vmatprep.subr.mxu0 %v2122
      %2185 = vmatpush1.msra.mxu0 %v2121
      %2186 = vmatprep.subr.mxu0 %v2125
      %2187 = vmatpush1.msra.mxu0 %v2124
      %2188 = vmatprep.subr.mxu0 0.0
      %2189 = vmatpush1.msra.mxu0 0.0
      %2190 = vmatprep.subr.mxu0 0.0
      %2191 = vmatpush1.msra.mxu0 0.0
      %2192 = vmatprep.subr.mxu0 0.0
      %2193 = vmatpush1.msra.mxu0 0.0
      %2194 = vmatprep.subr.mxu0 0.0
      %2195 = vmatpush1.msra.mxu0 0.0
      %2196 = vmatprep.subr.mxu0 0.0
      %2197 = vmatpush1.msra.mxu0 0.0
      %2198 = vmatprep.subr.mxu0 0.0
      %2199 = vmatpush1.msra.mxu0 0.0
      %2200 = vmatprep.subr.mxu0 0.0
      %2201 = vmatpush1.msra.mxu0 0.0
      %2202 = vmatprep.mubr.f32.mxu0 %v2136
      %2203 = vmatmul.mubr.f32.gmra.mrb[0].mxu0 %v2127
      %v2204 = vpop.f32.mrb[0].mxu0
      %v2205 = vadd.f32 %v2133, %v2204
      %v2206 = vpop.f32.mrb[0].mxu0
      %v2207 = vadd.f32 %v2133, %v2206
      %2208 = vdwg.mxu0
      %2209 = vmatprep.subr.mxu0 0.0
      %2210 = vmatpush1.msra.mxu0 %v2054
      %2211 = vmatprep.subr.mxu0 0.0
      %2212 = vmatpush1.msra.mxu0 %v2057
      %2213 = vmatprep.subr.mxu0 0.0
      %2214 = vmatpush1.msra.mxu0 %v2060
      %2215 = vmatprep.subr.mxu0 0.0
      %2216 = vmatpush1.msra.mxu0 %v2063
      %2217 = vmatprep.subr.mxu0 0.0
      %2218 = vmatpush1.msra.mxu0 %v2066
      %2219 = vmatprep.subr.mxu0 0.0
      %2220 = vmatpush1.msra.mxu0 %v2069
      %2221 = vmatprep.subr.mxu0 0.0
      %2222 = vmatpush1.msra.mxu0 %v2072
      %2223 = vmatprep.subr.mxu0 0.0
      %2224 = vmatpush1.msra.mxu0 %v2075
      %2225 = vmatprep.subr.mxu0 0.0
      %2226 = vmatpush1.msra.mxu0 %v2078
      %2227 = vmatprep.subr.mxu0 0.0
      %2228 = vmatpush1.msra.mxu0 %v2081
      %2229 = vmatprep.subr.mxu0 0.0
      %2230 = vmatpush1.msra.mxu0 %v2084
      %2231 = vmatprep.subr.mxu0 0.0
      %2232 = vmatpush1.msra.mxu0 %v2087
      %2233 = vmatprep.subr.mxu0 0.0
      %2234 = vmatpush1.msra.mxu0 %v2090
      %2235 = vmatprep.subr.mxu0 0.0
      %2236 = vmatpush1.msra.mxu0 %v2093
      %2237 = vmatprep.subr.mxu0 0.0
      %2238 = vmatpush1.msra.mxu0 %v2096
      %2239 = vmatprep.subr.mxu0 0.0
      %2240 = vmatpush1.msra.mxu0 %v2099
      %2241 = vmatprep.subr.mxu0 0.0
      %2242 = vmatpush1.msra.mxu0 %v2102
      %2243 = vmatprep.subr.mxu0 0.0
      %2244 = vmatpush1.msra.mxu0 %v2105
      %2245 = vmatprep.subr.mxu0 0.0
      %2246 = vmatpush1.msra.mxu0 %v2108
      %2247 = vmatprep.subr.mxu0 0.0
      %2248 = vmatpush1.msra.mxu0 %v2111
      %2249 = vmatprep.subr.mxu0 0.0
      %2250 = vmatpush1.msra.mxu0 %v2114
      %2251 = vmatprep.subr.mxu0 0.0
      %2252 = vmatpush1.msra.mxu0 %v2117
      %2253 = vmatprep.subr.mxu0 0.0
      %2254 = vmatpush1.msra.mxu0 %v2120
      %2255 = vmatprep.subr.mxu0 0.0
      %2256 = vmatpush1.msra.mxu0 %v2123
      %2257 = vmatprep.subr.mxu0 0.0
      %2258 = vmatpush1.msra.mxu0 %v2126
      %2259 = vmatprep.subr.mxu0 0.0
      %2260 = vmatpush1.msra.mxu0 0.0
      %2261 = vmatprep.subr.mxu0 0.0
      %2262 = vmatpush1.msra.mxu0 0.0
      %2263 = vmatprep.subr.mxu0 0.0
      %2264 = vmatpush1.msra.mxu0 0.0
      %2265 = vmatprep.subr.mxu0 0.0
      %2266 = vmatpush1.msra.mxu0 0.0
      %2267 = vmatprep.subr.mxu0 0.0
      %2268 = vmatpush1.msra.mxu0 0.0
      %2269 = vmatprep.subr.mxu0 0.0
      %2270 = vmatpush1.msra.mxu0 0.0
      %2271 = vmatprep.subr.mxu0 0.0
      %2272 = vmatpush1.msra.mxu0 0.0
      %2273 = vmatprep.mubr.f32.mxu0 %v2136
      %2274 = vmatmul.mubr.f32.gmra.mrb[0].mxu0 %v2127
      %v2275 = vpop.f32.mrb[0].mxu0
      %v2276 = vadd.f32 %v2133, %v2275
      %v2277 = vpop.f32.mrb[0].mxu0
      %2278 = vdwg.mxu0
      %v2279 = vmax.f32 %v2205, 0.0
      %v2280 = vmax.f32 %v2207, 0.0
      %v2281 = vmax.f32 %v2276, 0.0
      %v2282 = vmul.f32 %v2279, %v1392
      %v2283 = vmul.f32 %v2280, %v1396
      %v2284 = vmul.f32 %v2281, %v1400
      %2288 = vrot.lane.b32.xlu0 %v2282, 100
      %v2289 = vpop.permute.xlu0 %2288
      %2290 = vrot.lane.b32.xlu0 %v2283, 100
      %v2291 = vpop.permute.xlu0 %2290
      %2292 = vrot.lane.b32.xlu0 %v2284, 100
      %v2293 = vpop.permute.xlu0 %2292
      %v2294 = vsel %vm459, %v2289, %v2291
      %v2295 = vsel %vm459, %v2291, %v2293
      %2300 = vst.msk [vmem:[#allocation3] sm:$0xff] %vm1422, %v2289
      %2301 = vst [vmem:[#allocation3 + $0x8] sm:$0xff] %v2294
      %2302 = vst [vmem:[#allocation3 + $0x10] sm:$0xff] %v2295
      %2303 = vst.msk [vmem:[#allocation3 + $0x18] sm:$0xff] %vm459, %v2293
      %v2304 = vld [vmem:[#allocation3] sm:$0xff]
      %v2305 = vld [vmem:[#allocation3 + $0x8] sm:$0xff]
      %v2306 = vld [vmem:[#allocation3 + $0x10] sm:$0xff]
      %v2307 = vld [vmem:[#allocation3 + $0x18] sm:$0xff]
      %2312 = vrot.lane.b32.xlu0 %v2304, 78
      %v2313 = vpop.permute.xlu0 %2312
      %2314 = vrot.lane.b32.xlu0 %v2305, 78
      %v2315 = vpop.permute.xlu0 %2314
      %2316 = vrot.lane.b32.xlu0 %v2306, 78
      %v2317 = vpop.permute.xlu0 %2316
      %2318 = vrot.lane.b32.xlu0 %v2307, 78
      %v2319 = vpop.permute.xlu0 %2318
      %v2320 = vsel %vm536, %v2313, %v2315
      %v2321 = vsel %vm536, %v2315, %v2317
      %v2322 = vsel %vm536, %v2317, %v2319
      %2326 = vst [vmem:[#allocation4] sm:$0xff] %v2320
      %2327 = vst [vmem:[#allocation4 + $0x8] sm:$0xff] %v2321
      %2328 = vst [vmem:[#allocation4 + $0x10] sm:$0xff] %v2322
      %v2329 = vld [vmem:[#allocation3] sm:$0xff]
      %v2330 = vld [vmem:[#allocation3 + $0x8] sm:$0xff]
      %v2331 = vld [vmem:[#allocation3 + $0x10] sm:$0xff]
      %v2332 = vld [vmem:[#allocation3 + $0x18] sm:$0xff]
      %2337 = vrot.lane.b32.xlu0 %v2329, 77
      %v2338 = vpop.permute.xlu0 %2337
      %2339 = vrot.lane.b32.xlu0 %v2330, 77
      %v2340 = vpop.permute.xlu0 %2339
      %2341 = vrot.lane.b32.xlu0 %v2331, 77
      %v2342 = vpop.permute.xlu0 %2341
      %2343 = vrot.lane.b32.xlu0 %v2332, 77
      %v2344 = vpop.permute.xlu0 %2343
      %v2345 = vsel %vm547, %v2338, %v2340
      %v2346 = vsel %vm547, %v2340, %v2342
      %v2347 = vsel %vm547, %v2342, %v2344
      %2351 = vst [vmem:[#allocation4 + $0x18] sm:$0xff] %v2345
      %2352 = vst [vmem:[#allocation4 + $0x20] sm:$0xff] %v2346
      %2353 = vst [vmem:[#allocation4 + $0x28] sm:$0xff] %v2347
      %v2354 = vld [vmem:[#allocation3] sm:$0xff]
      %v2355 = vld [vmem:[#allocation3 + $0x8] sm:$0xff]
      %v2356 = vld [vmem:[#allocation3 + $0x10] sm:$0xff]
      %v2357 = vld [vmem:[#allocation3 + $0x18] sm:$0xff]
      %2362 = vrot.lane.b32.xlu0 %v2354, 76
      %v2363 = vpop.permute.xlu0 %2362
      %2364 = vrot.lane.b32.xlu0 %v2355, 76
      %v2365 = vpop.permute.xlu0 %2364
      %2366 = vrot.lane.b32.xlu0 %v2356, 76
      %v2367 = vpop.permute.xlu0 %2366
      %2368 = vrot.lane.b32.xlu0 %v2357, 76
      %v2369 = vpop.permute.xlu0 %2368
      %v2370 = vsel %vm558, %v2363, %v2365
      %v2371 = vsel %vm558, %v2365, %v2367
      %v2372 = vsel %vm558, %v2367, %v2369
      %2376 = vst [vmem:[#allocation4 + $0x30] sm:$0xff] %v2370
      %2377 = vst [vmem:[#allocation4 + $0x38] sm:$0xff] %v2371
      %2378 = vst [vmem:[#allocation4 + $0x40] sm:$0xff] %v2372
      %v2379 = vld [vmem:[#allocation3] sm:$0xff]
      %v2380 = vld [vmem:[#allocation3 + $0x8] sm:$0xff]
      %v2381 = vld [vmem:[#allocation3 + $0x10] sm:$0xff]
      %v2382 = vld [vmem:[#allocation3 + $0x18] sm:$0xff]
      %2387 = vrot.lane.b32.xlu0 %v2379, 75
      %v2388 = vpop.permute.xlu0 %2387
      %2389 = vrot.lane.b32.xlu0 %v2380, 75
      %v2390 = vpop.permute.xlu0 %2389
      %2391 = vrot.lane.b32.xlu0 %v2381, 75
      %v2392 = vpop.permute.xlu0 %2391
      %2393 = vrot.lane.b32.xlu0 %v2382, 75
      %v2394 = vpop.permute.xlu0 %2393
      %v2395 = vsel %vm569, %v2388, %v2390
      %v2396 = vsel %vm569, %v2390, %v2392
      %v2397 = vsel %vm569, %v2392, %v2394
      %2401 = vst [vmem:[#allocation4 + $0x48] sm:$0xff] %v2395
      %2402 = vst [vmem:[#allocation4 + $0x50] sm:$0xff] %v2396
      %2403 = vst [vmem:[#allocation4 + $0x58] sm:$0xff] %v2397
      %v2404 = vld [vmem:[#allocation3] sm:$0xff]
      %v2405 = vld [vmem:[#allocation3 + $0x8] sm:$0xff]
      %v2406 = vld [vmem:[#allocation3 + $0x10] sm:$0xff]
      %v2407 = vld [vmem:[#allocation3 + $0x18] sm:$0xff]
      %2412 = vrot.lane.b32.xlu0 %v2404, 74
      %v2413 = vpop.permute.xlu0 %2412
      %2414 = vrot.lane.b32.xlu0 %v2405, 74
      %v2415 = vpop.permute.xlu0 %2414
      %2416 = vrot.lane.b32.xlu0 %v2406, 74
      %v2417 = vpop.permute.xlu0 %2416
      %2418 = vrot.lane.b32.xlu0 %v2407, 74
      %v2419 = vpop.permute.xlu0 %2418
      %v2420 = vsel %vm580, %v2413, %v2415
      %v2421 = vsel %vm580, %v2415, %v2417
      %v2422 = vsel %vm580, %v2417, %v2419
      %2426 = vst [vmem:[#allocation4 + $0x60] sm:$0xff] %v2420
      %2427 = vst [vmem:[#allocation4 + $0x68] sm:$0xff] %v2421
      %2428 = vst [vmem:[#allocation4 + $0x70] sm:$0xff] %v2422
      %v2429 = vld [vmem:[#allocation3] sm:$0xff]
      %v2430 = vld [vmem:[#allocation3 + $0x8] sm:$0xff]
      %v2431 = vld [vmem:[#allocation3 + $0x10] sm:$0xff]
      %v2432 = vld [vmem:[#allocation3 + $0x18] sm:$0xff]
      %2437 = vrot.lane.b32.xlu0 %v2429, 54
      %v2438 = vpop.permute.xlu0 %2437
      %2439 = vrot.lane.b32.xlu0 %v2430, 54
      %v2440 = vpop.permute.xlu0 %2439
      %2441 = vrot.lane.b32.xlu0 %v2431, 54
      %v2442 = vpop.permute.xlu0 %2441
      %2443 = vrot.lane.b32.xlu0 %v2432, 54
      %v2444 = vpop.permute.xlu0 %2443
      %v2445 = vsel %vm635, %v2438, %v2440
      %v2446 = vsel %vm635, %v2440, %v2442
      %v2447 = vsel %vm635, %v2442, %v2444
      %2451 = vst [vmem:[#allocation4 + $0x78] sm:$0xff] %v2445
      %2452 = vst [vmem:[#allocation4 + $0x80] sm:$0xff] %v2446
      %2453 = vst [vmem:[#allocation4 + $0x88] sm:$0xff] %v2447
      %v2454 = vld [vmem:[#allocation3] sm:$0xff]
      %v2455 = vld [vmem:[#allocation3 + $0x8] sm:$0xff]
      %v2456 = vld [vmem:[#allocation3 + $0x10] sm:$0xff]
      %v2457 = vld [vmem:[#allocation3 + $0x18] sm:$0xff]
      %2462 = vrot.lane.b32.xlu0 %v2454, 53
      %v2463 = vpop.permute.xlu0 %2462
      %2464 = vrot.lane.b32.xlu0 %v2455, 53
      %v2465 = vpop.permute.xlu0 %2464
      %2466 = vrot.lane.b32.xlu0 %v2456, 53
      %v2467 = vpop.permute.xlu0 %2466
      %2468 = vrot.lane.b32.xlu0 %v2457, 53
      %v2469 = vpop.permute.xlu0 %2468
      %v2470 = vsel %vm646, %v2463, %v2465
      %v2471 = vsel %vm646, %v2465, %v2467
      %v2472 = vsel %vm646, %v2467, %v2469
      %2476 = vst [vmem:[#allocation4 + $0x90] sm:$0xff] %v2470
      %2477 = vst [vmem:[#allocation4 + $0x98] sm:$0xff] %v2471
      %2478 = vst [vmem:[#allocation4 + $0xa0] sm:$0xff] %v2472
      %v2479 = vld [vmem:[#allocation3] sm:$0xff]
      %v2480 = vld [vmem:[#allocation3 + $0x8] sm:$0xff]
      %v2481 = vld [vmem:[#allocation3 + $0x10] sm:$0xff]
      %v2482 = vld [vmem:[#allocation3 + $0x18] sm:$0xff]
      %2487 = vrot.lane.b32.xlu0 %v2479, 52
      %v2488 = vpop.permute.xlu0 %2487
      %2489 = vrot.lane.b32.xlu0 %v2480, 52
      %v2490 = vpop.permute.xlu0 %2489
      %2491 = vrot.lane.b32.xlu0 %v2481, 52
      %v2492 = vpop.permute.xlu0 %2491
      %2493 = vrot.lane.b32.xlu0 %v2482, 52
      %v2494 = vpop.permute.xlu0 %2493
      %v2495 = vsel %vm657, %v2488, %v2490
      %v2496 = vsel %vm657, %v2490, %v2492
      %v2497 = vsel %vm657, %v2492, %v2494
      %2501 = vst [vmem:[#allocation4 + $0xa8] sm:$0xff] %v2495
      %2502 = vst [vmem:[#allocation4 + $0xb0] sm:$0xff] %v2496
      %2503 = vst [vmem:[#allocation4 + $0xb8] sm:$0xff] %v2497
      %v2504 = vld [vmem:[#allocation3] sm:$0xff]
      %v2505 = vld [vmem:[#allocation3 + $0x8] sm:$0xff]
      %v2506 = vld [vmem:[#allocation3 + $0x10] sm:$0xff]
      %v2507 = vld [vmem:[#allocation3 + $0x18] sm:$0xff]
      %2512 = vrot.lane.b32.xlu0 %v2504, 51
      %v2513 = vpop.permute.xlu0 %2512
      %2514 = vrot.lane.b32.xlu0 %v2505, 51
      %v2515 = vpop.permute.xlu0 %2514
      %2516 = vrot.lane.b32.xlu0 %v2506, 51
      %v2517 = vpop.permute.xlu0 %2516
      %2518 = vrot.lane.b32.xlu0 %v2507, 51
      %v2519 = vpop.permute.xlu0 %2518
      %v2520 = vsel %vm668, %v2513, %v2515
      %v2521 = vsel %vm668, %v2515, %v2517
      %v2522 = vsel %vm668, %v2517, %v2519
      %2526 = vst [vmem:[#allocation4 + $0xc0] sm:$0xff] %v2520
      %2527 = vst [vmem:[#allocation4 + $0xc8] sm:$0xff] %v2521
      %2528 = vst [vmem:[#allocation4 + $0xd0] sm:$0xff] %v2522
      %v2529 = vld [vmem:[#allocation3] sm:$0xff]
      %v2530 = vld [vmem:[#allocation3 + $0x8] sm:$0xff]
      %v2531 = vld [vmem:[#allocation3 + $0x10] sm:$0xff]
      %v2532 = vld [vmem:[#allocation3 + $0x18] sm:$0xff]
      %2537 = vrot.lane.b32.xlu0 %v2529, 50
      %v2538 = vpop.permute.xlu0 %2537
      %2539 = vrot.lane.b32.xlu0 %v2530, 50
      %v2540 = vpop.permute.xlu0 %2539
      %2541 = vrot.lane.b32.xlu0 %v2531, 50
      %v2542 = vpop.permute.xlu0 %2541
      %2543 = vrot.lane.b32.xlu0 %v2532, 50
      %v2544 = vpop.permute.xlu0 %2543
      %v2545 = vsel %vm679, %v2538, %v2540
      %v2546 = vsel %vm679, %v2540, %v2542
      %v2547 = vsel %vm679, %v2542, %v2544
      %2551 = vst [vmem:[#allocation4 + $0xd8] sm:$0xff] %v2545
      %2552 = vst [vmem:[#allocation4 + $0xe0] sm:$0xff] %v2546
      %2553 = vst [vmem:[#allocation4 + $0xe8] sm:$0xff] %v2547
      %v2554 = vld [vmem:[#allocation3] sm:$0xff]
      %v2555 = vld [vmem:[#allocation3 + $0x8] sm:$0xff]
      %v2556 = vld [vmem:[#allocation3 + $0x10] sm:$0xff]
      %v2557 = vld [vmem:[#allocation3 + $0x18] sm:$0xff]
      %2562 = vrot.lane.b32.xlu0 %v2554, 30
      %v2563 = vpop.permute.xlu0 %2562
      %2564 = vrot.lane.b32.xlu0 %v2555, 30
      %v2565 = vpop.permute.xlu0 %2564
      %2566 = vrot.lane.b32.xlu0 %v2556, 30
      %v2567 = vpop.permute.xlu0 %2566
      %2568 = vrot.lane.b32.xlu0 %v2557, 30
      %v2569 = vpop.permute.xlu0 %2568
      %v2570 = vsel %vm734, %v2563, %v2565
      %v2571 = vsel %vm734, %v2565, %v2567
      %v2572 = vsel %vm734, %v2567, %v2569
      %2576 = vst [vmem:[#allocation4 + $0xf0] sm:$0xff] %v2570
      %2577 = vst [vmem:[#allocation4 + $0xf8] sm:$0xff] %v2571
      %2578 = vst [vmem:[#allocation4 + $0x100] sm:$0xff] %v2572
      %v2579 = vld [vmem:[#allocation3] sm:$0xff]
      %v2580 = vld [vmem:[#allocation3 + $0x8] sm:$0xff]
      %v2581 = vld [vmem:[#allocation3 + $0x10] sm:$0xff]
      %v2582 = vld [vmem:[#allocation3 + $0x18] sm:$0xff]
      %2587 = vrot.lane.b32.xlu0 %v2579, 29
      %v2588 = vpop.permute.xlu0 %2587
      %2589 = vrot.lane.b32.xlu0 %v2580, 29
      %v2590 = vpop.permute.xlu0 %2589
      %2591 = vrot.lane.b32.xlu0 %v2581, 29
      %v2592 = vpop.permute.xlu0 %2591
      %2593 = vrot.lane.b32.xlu0 %v2582, 29
      %v2594 = vpop.permute.xlu0 %2593
      %v2595 = vsel %vm745, %v2588, %v2590
      %v2596 = vsel %vm745, %v2590, %v2592
      %v2597 = vsel %vm745, %v2592, %v2594
      %2601 = vst [vmem:[#allocation4 + $0x108] sm:$0xff] %v2595
      %2602 = vst [vmem:[#allocation4 + $0x110] sm:$0xff] %v2596
      %2603 = vst [vmem:[#allocation4 + $0x118] sm:$0xff] %v2597
      %v2604 = vld [vmem:[#allocation3] sm:$0xff]
      %v2605 = vld [vmem:[#allocation3 + $0x8] sm:$0xff]
      %v2606 = vld [vmem:[#allocation3 + $0x10] sm:$0xff]
      %v2607 = vld [vmem:[#allocation3 + $0x18] sm:$0xff]
      %2612 = vrot.lane.b32.xlu0 %v2604, 28
      %v2613 = vpop.permute.xlu0 %2612
      %2614 = vrot.lane.b32.xlu0 %v2605, 28
      %v2615 = vpop.permute.xlu0 %2614
      %2616 = vrot.lane.b32.xlu0 %v2606, 28
      %v2617 = vpop.permute.xlu0 %2616
      %2618 = vrot.lane.b32.xlu0 %v2607, 28
      %v2619 = vpop.permute.xlu0 %2618
      %v2620 = vsel %vm756, %v2613, %v2615
      %v2621 = vsel %vm756, %v2615, %v2617
      %v2622 = vsel %vm756, %v2617, %v2619
      %2626 = vst [vmem:[#allocation4 + $0x120] sm:$0xff] %v2620
      %2627 = vst [vmem:[#allocation4 + $0x128] sm:$0xff] %v2621
      %2628 = vst [vmem:[#allocation4 + $0x130] sm:$0xff] %v2622
      %v2629 = vld [vmem:[#allocation3] sm:$0xff]
      %v2630 = vld [vmem:[#allocation3 + $0x8] sm:$0xff]
      %v2631 = vld [vmem:[#allocation3 + $0x10] sm:$0xff]
      %v2632 = vld [vmem:[#allocation3 + $0x18] sm:$0xff]
      %2637 = vrot.lane.b32.xlu0 %v2629, 27
      %v2638 = vpop.permute.xlu0 %2637
      %2639 = vrot.lane.b32.xlu0 %v2630, 27
      %v2640 = vpop.permute.xlu0 %2639
      %2641 = vrot.lane.b32.xlu0 %v2631, 27
      %v2642 = vpop.permute.xlu0 %2641
      %2643 = vrot.lane.b32.xlu0 %v2632, 27
      %v2644 = vpop.permute.xlu0 %2643
      %v2645 = vsel %vm767, %v2638, %v2640
      %v2646 = vsel %vm767, %v2640, %v2642
      %v2647 = vsel %vm767, %v2642, %v2644
      %2651 = vst [vmem:[#allocation4 + $0x138] sm:$0xff] %v2645
      %2652 = vst [vmem:[#allocation4 + $0x140] sm:$0xff] %v2646
      %2653 = vst [vmem:[#allocation4 + $0x148] sm:$0xff] %v2647
      %v2654 = vld [vmem:[#allocation3] sm:$0xff]
      %v2655 = vld [vmem:[#allocation3 + $0x8] sm:$0xff]
      %v2656 = vld [vmem:[#allocation3 + $0x10] sm:$0xff]
      %v2657 = vld [vmem:[#allocation3 + $0x18] sm:$0xff]
      %2662 = vrot.lane.b32.xlu0 %v2654, 26
      %v2663 = vpop.permute.xlu0 %2662
      %2664 = vrot.lane.b32.xlu0 %v2655, 26
      %v2665 = vpop.permute.xlu0 %2664
      %2666 = vrot.lane.b32.xlu0 %v2656, 26
      %v2667 = vpop.permute.xlu0 %2666
      %2668 = vrot.lane.b32.xlu0 %v2657, 26
      %v2669 = vpop.permute.xlu0 %2668
      %v2670 = vsel %vm778, %v2663, %v2665
      %v2671 = vsel %vm778, %v2665, %v2667
      %v2672 = vsel %vm778, %v2667, %v2669
      %2676 = vst [vmem:[#allocation4 + $0x150] sm:$0xff] %v2670
      %2677 = vst [vmem:[#allocation4 + $0x158] sm:$0xff] %v2671
      %2678 = vst [vmem:[#allocation4 + $0x160] sm:$0xff] %v2672
      %v2679 = vld [vmem:[#allocation3] sm:$0xff]
      %v2680 = vld [vmem:[#allocation3 + $0x8] sm:$0xff]
      %v2681 = vld [vmem:[#allocation3 + $0x10] sm:$0xff]
      %v2682 = vld [vmem:[#allocation3 + $0x18] sm:$0xff]
      %2687 = vrot.lane.b32.xlu0 %v2679, 6
      %v2688 = vpop.permute.xlu0 %2687
      %2689 = vrot.lane.b32.xlu0 %v2680, 6
      %v2690 = vpop.permute.xlu0 %2689
      %2691 = vrot.lane.b32.xlu0 %v2681, 6
      %v2692 = vpop.permute.xlu0 %2691
      %2693 = vrot.lane.b32.xlu0 %v2682, 6
      %v2694 = vpop.permute.xlu0 %2693
      %v2695 = vsel %vm833, %v2688, %v2690
      %v2696 = vsel %vm833, %v2690, %v2692
      %v2697 = vsel %vm833, %v2692, %v2694
      %2701 = vst [vmem:[#allocation4 + $0x168] sm:$0xff] %v2695
      %2702 = vst [vmem:[#allocation4 + $0x170] sm:$0xff] %v2696
      %2703 = vst [vmem:[#allocation4 + $0x178] sm:$0xff] %v2697
      %v2704 = vld [vmem:[#allocation3] sm:$0xff]
      %v2705 = vld [vmem:[#allocation3 + $0x8] sm:$0xff]
      %v2706 = vld [vmem:[#allocation3 + $0x10] sm:$0xff]
      %v2707 = vld [vmem:[#allocation3 + $0x18] sm:$0xff]
      %2712 = vrot.lane.b32.xlu0 %v2704, 5
      %v2713 = vpop.permute.xlu0 %2712
      %2714 = vrot.lane.b32.xlu0 %v2705, 5
      %v2715 = vpop.permute.xlu0 %2714
      %2716 = vrot.lane.b32.xlu0 %v2706, 5
      %v2717 = vpop.permute.xlu0 %2716
      %2718 = vrot.lane.b32.xlu0 %v2707, 5
      %v2719 = vpop.permute.xlu0 %2718
      %v2720 = vsel %vm844, %v2713, %v2715
      %v2721 = vsel %vm844, %v2715, %v2717
      %v2722 = vsel %vm844, %v2717, %v2719
      %2726 = vst [vmem:[#allocation4 + $0x180] sm:$0xff] %v2720
      %2727 = vst [vmem:[#allocation4 + $0x188] sm:$0xff] %v2721
      %2728 = vst [vmem:[#allocation4 + $0x190] sm:$0xff] %v2722
      %v2729 = vld [vmem:[#allocation3] sm:$0xff]
      %v2730 = vld [vmem:[#allocation3 + $0x8] sm:$0xff]
      %v2731 = vld [vmem:[#allocation3 + $0x10] sm:$0xff]
      %v2732 = vld [vmem:[#allocation3 + $0x18] sm:$0xff]
      %2737 = vrot.lane.b32.xlu0 %v2729, 4
      %v2738 = vpop.permute.xlu0 %2737
      %2739 = vrot.lane.b32.xlu0 %v2730, 4
      %v2740 = vpop.permute.xlu0 %2739
      %2741 = vrot.lane.b32.xlu0 %v2731, 4
      %v2742 = vpop.permute.xlu0 %2741
      %2743 = vrot.lane.b32.xlu0 %v2732, 4
      %v2744 = vpop.permute.xlu0 %2743
      %v2745 = vsel %vm855, %v2738, %v2740
      %v2746 = vsel %vm855, %v2740, %v2742
      %v2747 = vsel %vm855, %v2742, %v2744
      %2751 = vst [vmem:[#allocation4 + $0x198] sm:$0xff] %v2745
      %2752 = vst [vmem:[#allocation4 + $0x1a0] sm:$0xff] %v2746
      %2753 = vst [vmem:[#allocation4 + $0x1a8] sm:$0xff] %v2747
      %v2754 = vld [vmem:[#allocation3] sm:$0xff]
      %v2755 = vld [vmem:[#allocation3 + $0x8] sm:$0xff]
      %v2756 = vld [vmem:[#allocation3 + $0x10] sm:$0xff]
      %v2757 = vld [vmem:[#allocation3 + $0x18] sm:$0xff]
      %2762 = vrot.lane.b32.xlu0 %v2754, 3
      %v2763 = vpop.permute.xlu0 %2762
      %2764 = vrot.lane.b32.xlu0 %v2755, 3
      %v2765 = vpop.permute.xlu0 %2764
      %2766 = vrot.lane.b32.xlu0 %v2756, 3
      %v2767 = vpop.permute.xlu0 %2766
      %2768 = vrot.lane.b32.xlu0 %v2757, 3
      %v2769 = vpop.permute.xlu0 %2768
      %v2770 = vsel %vm866, %v2763, %v2765
      %v2771 = vsel %vm866, %v2765, %v2767
      %v2772 = vsel %vm866, %v2767, %v2769
      %2776 = vst [vmem:[#allocation4 + $0x1b0] sm:$0xff] %v2770
      %2777 = vst [vmem:[#allocation4 + $0x1b8] sm:$0xff] %v2771
      %2778 = vst [vmem:[#allocation4 + $0x1c0] sm:$0xff] %v2772
      %v2779 = vld [vmem:[#allocation3] sm:$0xff]
      %v2780 = vld [vmem:[#allocation3 + $0x8] sm:$0xff]
      %v2781 = vld [vmem:[#allocation3 + $0x10] sm:$0xff]
      %v2782 = vld [vmem:[#allocation3 + $0x18] sm:$0xff]
      %2787 = vrot.lane.b32.xlu0 %v2779, 2
      %v2788 = vpop.permute.xlu0 %2787
      %2789 = vrot.lane.b32.xlu0 %v2780, 2
      %v2790 = vpop.permute.xlu0 %2789
      %2791 = vrot.lane.b32.xlu0 %v2781, 2
      %v2792 = vpop.permute.xlu0 %2791
      %2793 = vrot.lane.b32.xlu0 %v2782, 2
      %v2794 = vpop.permute.xlu0 %2793
      %v2795 = vsel %vm877, %v2788, %v2790
      %v2796 = vsel %vm877, %v2790, %v2792
      %v2797 = vsel %vm877, %v2792, %v2794
      %2801 = vst [vmem:[#allocation4 + $0x1c8] sm:$0xff] %v2795
      %2802 = vst [vmem:[#allocation4 + $0x1d0] sm:$0xff] %v2796
      %2803 = vst [vmem:[#allocation4 + $0x1d8] sm:$0xff] %v2797
      %v2804 = vld [vmem:[#allocation3 + $0x8] sm:$0xff]
      %v2805 = vld [vmem:[#allocation3 + $0x10] sm:$0xff]
      %v2806 = vld [vmem:[#allocation3 + $0x18] sm:$0xff]
      %v2807 = vld [vmem:[#allocation3 + $0x20] sm:$0xff]
      %2812 = vrot.lane.b32.xlu0 %v2804, 110
      %v2813 = vpop.permute.xlu0 %2812
      %2814 = vrot.lane.b32.xlu0 %v2805, 110
      %v2815 = vpop.permute.xlu0 %2814
      %2816 = vrot.lane.b32.xlu0 %v2806, 110
      %v2817 = vpop.permute.xlu0 %2816
      %2818 = vrot.lane.b32.xlu0 %v2807, 110
      %v2819 = vpop.permute.xlu0 %2818
      %v2820 = vsel %vm925, %v2813, %v2815
      %v2821 = vsel %vm925, %v2815, %v2817
      %v2822 = vsel %vm925, %v2817, %v2819
      %2826 = vst [vmem:[#allocation4 + $0x1e0] sm:$0xff] %v2820
      %2827 = vst [vmem:[#allocation4 + $0x1e8] sm:$0xff] %v2821
      %2828 = vst [vmem:[#allocation4 + $0x1f0] sm:$0xff] %v2822
      %v2829 = vld [vmem:[#allocation3 + $0x8] sm:$0xff]
      %v2830 = vld [vmem:[#allocation3 + $0x10] sm:$0xff]
      %v2831 = vld [vmem:[#allocation3 + $0x18] sm:$0xff]
      %v2832 = vld [vmem:[#allocation3 + $0x20] sm:$0xff]
      %2837 = vrot.lane.b32.xlu0 %v2829, 109
      %v2838 = vpop.permute.xlu0 %2837
      %2839 = vrot.lane.b32.xlu0 %v2830, 109
      %v2840 = vpop.permute.xlu0 %2839
      %2841 = vrot.lane.b32.xlu0 %v2831, 109
      %v2842 = vpop.permute.xlu0 %2841
      %2843 = vrot.lane.b32.xlu0 %v2832, 109
      %v2844 = vpop.permute.xlu0 %2843
      %v2845 = vsel %vm936, %v2838, %v2840
      %v2846 = vsel %vm936, %v2840, %v2842
      %v2847 = vsel %vm936, %v2842, %v2844
      %2851 = vst [vmem:[#allocation4 + $0x1f8] sm:$0xff] %v2845
      %2852 = vst [vmem:[#allocation4 + $0x200] sm:$0xff] %v2846
      %2853 = vst [vmem:[#allocation4 + $0x208] sm:$0xff] %v2847
      %v2854 = vld [vmem:[#allocation3 + $0x8] sm:$0xff]
      %v2855 = vld [vmem:[#allocation3 + $0x10] sm:$0xff]
      %v2856 = vld [vmem:[#allocation3 + $0x18] sm:$0xff]
      %v2857 = vld [vmem:[#allocation3 + $0x20] sm:$0xff]
      %2862 = vrot.lane.b32.xlu0 %v2854, 108
      %v2863 = vpop.permute.xlu0 %2862
      %2864 = vrot.lane.b32.xlu0 %v2855, 108
      %v2865 = vpop.permute.xlu0 %2864
      %2866 = vrot.lane.b32.xlu0 %v2856, 108
      %v2867 = vpop.permute.xlu0 %2866
      %2868 = vrot.lane.b32.xlu0 %v2857, 108
      %v2869 = vpop.permute.xlu0 %2868
      %v2870 = vsel %vm947, %v2863, %v2865
      %v2871 = vsel %vm947, %v2865, %v2867
      %v2872 = vsel %vm947, %v2867, %v2869
      %2876 = vst [vmem:[#allocation4 + $0x210] sm:$0xff] %v2870
      %2877 = vst [vmem:[#allocation4 + $0x218] sm:$0xff] %v2871
      %2878 = vst [vmem:[#allocation4 + $0x220] sm:$0xff] %v2872
      %v2879 = vld [vmem:[#allocation3 + $0x8] sm:$0xff]
      %v2880 = vld [vmem:[#allocation3 + $0x10] sm:$0xff]
      %v2881 = vld [vmem:[#allocation3 + $0x18] sm:$0xff]
      %v2882 = vld [vmem:[#allocation3 + $0x20] sm:$0xff]
      %2887 = vrot.lane.b32.xlu0 %v2879, 107
      %v2888 = vpop.permute.xlu0 %2887
      %2889 = vrot.lane.b32.xlu0 %v2880, 107
      %v2890 = vpop.permute.xlu0 %2889
      %2891 = vrot.lane.b32.xlu0 %v2881, 107
      %v2892 = vpop.permute.xlu0 %2891
      %2893 = vrot.lane.b32.xlu0 %v2882, 107
      %v2894 = vpop.permute.xlu0 %2893
      %v2895 = vsel %vm958, %v2888, %v2890
      %v2896 = vsel %vm958, %v2890, %v2892
      %v2897 = vsel %vm958, %v2892, %v2894
      %2901 = vst [vmem:[#allocation4 + $0x228] sm:$0xff] %v2895
      %2902 = vst [vmem:[#allocation4 + $0x230] sm:$0xff] %v2896
      %2903 = vst [vmem:[#allocation4 + $0x238] sm:$0xff] %v2897
      %v2904 = vld [vmem:[#allocation3 + $0x8] sm:$0xff]
      %v2905 = vld [vmem:[#allocation3 + $0x10] sm:$0xff]
      %v2906 = vld [vmem:[#allocation3 + $0x18] sm:$0xff]
      %v2907 = vld [vmem:[#allocation3 + $0x20] sm:$0xff]
      %2912 = vrot.lane.b32.xlu0 %v2904, 106
      %v2913 = vpop.permute.xlu0 %2912
      %2914 = vrot.lane.b32.xlu0 %v2905, 106
      %v2915 = vpop.permute.xlu0 %2914
      %2916 = vrot.lane.b32.xlu0 %v2906, 106
      %v2917 = vpop.permute.xlu0 %2916
      %2918 = vrot.lane.b32.xlu0 %v2907, 106
      %v2919 = vpop.permute.xlu0 %2918
      %v2920 = vsel %vm969, %v2913, %v2915
      %v2921 = vsel %vm969, %v2915, %v2917
      %v2922 = vsel %vm969, %v2917, %v2919
      %2926 = vst [vmem:[#allocation4 + $0x240] sm:$0xff] %v2920
      %2927 = vst [vmem:[#allocation4 + $0x248] sm:$0xff] %v2921
      %2928 = vst [vmem:[#allocation4 + $0x250] sm:$0xff] %v2922
      %v2929 = vld [vmem:[#allocation4] sm:$0xff]
      %v2930 = vld [vmem:[#allocation4 + $0x8] sm:$0xff]
      %v2931 = vld [vmem:[#allocation4 + $0x10] sm:$0xff]
      %v2932 = vld [vmem:[#allocation4 + $0x18] sm:$0xff]
      %v2933 = vld [vmem:[#allocation4 + $0x20] sm:$0xff]
      %v2934 = vld [vmem:[#allocation4 + $0x28] sm:$0xff]
      %v2935 = vld [vmem:[#allocation4 + $0x30] sm:$0xff]
      %v2936 = vld [vmem:[#allocation4 + $0x38] sm:$0xff]
      %v2937 = vld [vmem:[#allocation4 + $0x40] sm:$0xff]
      %v2938 = vld [vmem:[#allocation4 + $0x48] sm:$0xff]
      %v2939 = vld [vmem:[#allocation4 + $0x50] sm:$0xff]
      %v2940 = vld [vmem:[#allocation4 + $0x58] sm:$0xff]
      %v2941 = vld [vmem:[#allocation4 + $0x60] sm:$0xff]
      %v2942 = vld [vmem:[#allocation4 + $0x68] sm:$0xff]
      %v2943 = vld [vmem:[#allocation4 + $0x70] sm:$0xff]
      %v2944 = vld [vmem:[#allocation4 + $0x78] sm:$0xff]
      %v2945 = vld [vmem:[#allocation4 + $0x80] sm:$0xff]
      %v2946 = vld [vmem:[#allocation4 + $0x88] sm:$0xff]
      %v2947 = vld [vmem:[#allocation4 + $0x90] sm:$0xff]
      %v2948 = vld [vmem:[#allocation4 + $0x98] sm:$0xff]
      %v2949 = vld [vmem:[#allocation4 + $0xa0] sm:$0xff]
      %v2950 = vld [vmem:[#allocation4 + $0xa8] sm:$0xff]
      %v2951 = vld [vmem:[#allocation4 + $0xb0] sm:$0xff]
      %v2952 = vld [vmem:[#allocation4 + $0xb8] sm:$0xff]
      %v2953 = vld [vmem:[#allocation4 + $0xc0] sm:$0xff]
      %v2954 = vld [vmem:[#allocation4 + $0xc8] sm:$0xff]
      %v2955 = vld [vmem:[#allocation4 + $0xd0] sm:$0xff]
      %v2956 = vld [vmem:[#allocation4 + $0xd8] sm:$0xff]
      %v2957 = vld [vmem:[#allocation4 + $0xe0] sm:$0xff]
      %v2958 = vld [vmem:[#allocation4 + $0xe8] sm:$0xff]
      %v2959 = vld [vmem:[#allocation4 + $0xf0] sm:$0xff]
      %v2960 = vld [vmem:[#allocation4 + $0xf8] sm:$0xff]
      %v2961 = vld [vmem:[#allocation4 + $0x100] sm:$0xff]
      %v2962 = vld [vmem:[#allocation4 + $0x108] sm:$0xff]
      %v2963 = vld [vmem:[#allocation4 + $0x110] sm:$0xff]
      %v2964 = vld [vmem:[#allocation4 + $0x118] sm:$0xff]
      %v2965 = vld [vmem:[#allocation4 + $0x120] sm:$0xff]
      %v2966 = vld [vmem:[#allocation4 + $0x128] sm:$0xff]
      %v2967 = vld [vmem:[#allocation4 + $0x130] sm:$0xff]
      %v2968 = vld [vmem:[#allocation4 + $0x138] sm:$0xff]
      %v2969 = vld [vmem:[#allocation4 + $0x140] sm:$0xff]
      %v2970 = vld [vmem:[#allocation4 + $0x148] sm:$0xff]
      %v2971 = vld [vmem:[#allocation4 + $0x150] sm:$0xff]
      %v2972 = vld [vmem:[#allocation4 + $0x158] sm:$0xff]
      %v2973 = vld [vmem:[#allocation4 + $0x160] sm:$0xff]
      %v2974 = vld [vmem:[#allocation4 + $0x168] sm:$0xff]
      %v2975 = vld [vmem:[#allocation4 + $0x170] sm:$0xff]
      %v2976 = vld [vmem:[#allocation4 + $0x178] sm:$0xff]
      %v2977 = vld [vmem:[#allocation4 + $0x180] sm:$0xff]
      %v2978 = vld [vmem:[#allocation4 + $0x188] sm:$0xff]
      %v2979 = vld [vmem:[#allocation4 + $0x190] sm:$0xff]
      %v2980 = vld [vmem:[#allocation4 + $0x198] sm:$0xff]
      %v2981 = vld [vmem:[#allocation4 + $0x1a0] sm:$0xff]
      %v2982 = vld [vmem:[#allocation4 + $0x1a8] sm:$0xff]
      %v2983 = vld [vmem:[#allocation4 + $0x1b0] sm:$0xff]
      %v2984 = vld [vmem:[#allocation4 + $0x1b8] sm:$0xff]
      %v2985 = vld [vmem:[#allocation4 + $0x1c0] sm:$0xff]
      %v2986 = vld [vmem:[#allocation4 + $0x1c8] sm:$0xff]
      %v2987 = vld [vmem:[#allocation4 + $0x1d0] sm:$0xff]
      %v2988 = vld [vmem:[#allocation4 + $0x1d8] sm:$0xff]
      %v2989 = vld [vmem:[#allocation4 + $0x1e0] sm:$0xff]
      %v2990 = vld [vmem:[#allocation4 + $0x1e8] sm:$0xff]
      %v2991 = vld [vmem:[#allocation4 + $0x1f0] sm:$0xff]
      %v2992 = vld [vmem:[#allocation4 + $0x1f8] sm:$0xff]
      %v2993 = vld [vmem:[#allocation4 + $0x200] sm:$0xff]
      %v2994 = vld [vmem:[#allocation4 + $0x208] sm:$0xff]
      %v2995 = vld [vmem:[#allocation4 + $0x210] sm:$0xff]
      %v2996 = vld [vmem:[#allocation4 + $0x218] sm:$0xff]
      %v2997 = vld [vmem:[#allocation4 + $0x220] sm:$0xff]
      %v2998 = vld [vmem:[#allocation4 + $0x228] sm:$0xff]
      %v2999 = vld [vmem:[#allocation4 + $0x230] sm:$0xff]
      %v3000 = vld [vmem:[#allocation4 + $0x238] sm:$0xff]
      %v3001 = vld [vmem:[#allocation4 + $0x240] sm:$0xff]
      %v3002 = vld [vmem:[#allocation4 + $0x248] sm:$0xff]
      %v3003 = vld [vmem:[#allocation4 + $0x250] sm:$0xff]
      %v3004 = vld [vmem:[%s5] sm:$0x3]
      %v3005 = vld [vmem:[#allocation5] sm:$0x1]
      %3007 = vset.pattern.permute.xlu0 0
      %3008 = vperm.xlu0 %3007, %v3005
      %v3009 = vpop.permute.xlu0 %3008
      %v3011 = vlaneseq
      %v3012 = vshrl.u32 %v3011, 7
      %v3013 = vsub.s32 0, %v3012
      %v3014 = vrot.slane %v3009, %v3013
      %v3016 = vlaneseq
      %v3017 = vshrl.u32 %v3016, 7
      %v3018 = vsub.s32 0, %v3017
      %v3019 = vrot.slane %v3004, %v3018
      %v3020 = vlaneseq
      %v3021 = vshrl.u32 %v3020, 7
      %v3022 = vsub.s32 1, %v3021
      %v3023 = vrot.slane %v3004, %v3022
      %v3025 = vsel %vm602, %v3023, 0
      %3027 = vmatprep.subr.mxu0 %v2930
      %3028 = vmatpush1.msra.mxu0 %v2929
      %3029 = vmatprep.subr.mxu0 %v2933
      %3030 = vmatpush1.msra.mxu0 %v2932
      %3031 = vmatprep.subr.mxu0 %v2936
      %3032 = vmatpush1.msra.mxu0 %v2935
      %3033 = vmatprep.subr.mxu0 %v2939
      %3034 = vmatpush1.msra.mxu0 %v2938
      %3035 = vmatprep.subr.mxu0 %v2942
      %3036 = vmatpush1.msra.mxu0 %v2941
      %3037 = vmatprep.subr.mxu0 %v2945
      %3038 = vmatpush1.msra.mxu0 %v2944
      %3039 = vmatprep.subr.mxu0 %v2948
      %3040 = vmatpush1.msra.mxu0 %v2947
      %3041 = vmatprep.subr.mxu0 %v2951
      %3042 = vmatpush1.msra.mxu0 %v2950
      %3043 = vmatprep.subr.mxu0 %v2954
      %3044 = vmatpush1.msra.mxu0 %v2953
      %3045 = vmatprep.subr.mxu0 %v2957
      %3046 = vmatpush1.msra.mxu0 %v2956
      %3047 = vmatprep.subr.mxu0 %v2960
      %3048 = vmatpush1.msra.mxu0 %v2959
      %3049 = vmatprep.subr.mxu0 %v2963
      %3050 = vmatpush1.msra.mxu0 %v2962
      %3051 = vmatprep.subr.mxu0 %v2966
      %3052 = vmatpush1.msra.mxu0 %v2965
      %3053 = vmatprep.subr.mxu0 %v2969
      %3054 = vmatpush1.msra.mxu0 %v2968
      %3055 = vmatprep.subr.mxu0 %v2972
      %3056 = vmatpush1.msra.mxu0 %v2971
      %3057 = vmatprep.subr.mxu0 %v2975
      %3058 = vmatpush1.msra.mxu0 %v2974
      %3059 = vmatprep.subr.mxu0 %v2978
      %3060 = vmatpush1.msra.mxu0 %v2977
      %3061 = vmatprep.subr.mxu0 %v2981
      %3062 = vmatpush1.msra.mxu0 %v2980
      %3063 = vmatprep.subr.mxu0 %v2984
      %3064 = vmatpush1.msra.mxu0 %v2983
      %3065 = vmatprep.subr.mxu0 %v2987
      %3066 = vmatpush1.msra.mxu0 %v2986
      %3067 = vmatprep.subr.mxu0 %v2990
      %3068 = vmatpush1.msra.mxu0 %v2989
      %3069 = vmatprep.subr.mxu0 %v2993
      %3070 = vmatpush1.msra.mxu0 %v2992
      %3071 = vmatprep.subr.mxu0 %v2996
      %3072 = vmatpush1.msra.mxu0 %v2995
      %3073 = vmatprep.subr.mxu0 %v2999
      %3074 = vmatpush1.msra.mxu0 %v2998
      %3075 = vmatprep.subr.mxu0 %v3002
      %3076 = vmatpush1.msra.mxu0 %v3001
      %3077 = vmatprep.subr.mxu0 0.0
      %3078 = vmatpush1.msra.mxu0 0.0
      %3079 = vmatprep.subr.mxu0 0.0
      %3080 = vmatpush1.msra.mxu0 0.0
      %3081 = vmatprep.subr.mxu0 0.0
      %3082 = vmatpush1.msra.mxu0 0.0
      %3083 = vmatprep.subr.mxu0 0.0
      %3084 = vmatpush1.msra.mxu0 0.0
      %3085 = vmatprep.subr.mxu0 0.0
      %3086 = vmatpush1.msra.mxu0 0.0
      %3087 = vmatprep.subr.mxu0 0.0
      %3088 = vmatpush1.msra.mxu0 0.0
      %3089 = vmatprep.subr.mxu0 0.0
      %3090 = vmatpush1.msra.mxu0 0.0
      %3091 = vmatprep.mubr.f32.mxu0 %v3025
      %3092 = vmatmul.mubr.f32.gmra.mrb[0].mxu0 %v3019
      %v3093 = vpop.f32.mrb[0].mxu0
      %v3094 = vadd.f32 %v3014, %v3093
      %v3095 = vpop.f32.mrb[0].mxu0
      %v3096 = vadd.f32 %v3014, %v3095
      %3097 = vdwg.mxu0
      %3098 = vmatprep.subr.mxu0 0.0
      %3099 = vmatpush1.msra.mxu0 %v2931
      %3100 = vmatprep.subr.mxu0 0.0
      %3101 = vmatpush1.msra.mxu0 %v2934
      %3102 = vmatprep.subr.mxu0 0.0
      %3103 = vmatpush1.msra.mxu0 %v2937
      %3104 = vmatprep.subr.mxu0 0.0
      %3105 = vmatpush1.msra.mxu0 %v2940
      %3106 = vmatprep.subr.mxu0 0.0
      %3107 = vmatpush1.msra.mxu0 %v2943
      %3108 = vmatprep.subr.mxu0 0.0
      %3109 = vmatpush1.msra.mxu0 %v2946
      %3110 = vmatprep.subr.mxu0 0.0
      %3111 = vmatpush1.msra.mxu0 %v2949
      %3112 = vmatprep.subr.mxu0 0.0
      %3113 = vmatpush1.msra.mxu0 %v2952
      %3114 = vmatprep.subr.mxu0 0.0
      %3115 = vmatpush1.msra.mxu0 %v2955
      %3116 = vmatprep.subr.mxu0 0.0
      %3117 = vmatpush1.msra.mxu0 %v2958
      %3118 = vmatprep.subr.mxu0 0.0
      %3119 = vmatpush1.msra.mxu0 %v2961
      %3120 = vmatprep.subr.mxu0 0.0
      %3121 = vmatpush1.msra.mxu0 %v2964
      %3122 = vmatprep.subr.mxu0 0.0
      %3123 = vmatpush1.msra.mxu0 %v2967
      %3124 = vmatprep.subr.mxu0 0.0
      %3125 = vmatpush1.msra.mxu0 %v2970
      %3126 = vmatprep.subr.mxu0 0.0
      %3127 = vmatpush1.msra.mxu0 %v2973
      %3128 = vmatprep.subr.mxu0 0.0
      %3129 = vmatpush1.msra.mxu0 %v2976
      %3130 = vmatprep.subr.mxu0 0.0
      %3131 = vmatpush1.msra.mxu0 %v2979
      %3132 = vmatprep.subr.mxu0 0.0
      %3133 = vmatpush1.msra.mxu0 %v2982
      %3134 = vmatprep.subr.mxu0 0.0
      %3135 = vmatpush1.msra.mxu0 %v2985
      %3136 = vmatprep.subr.mxu0 0.0
      %3137 = vmatpush1.msra.mxu0 %v2988
      %3138 = vmatprep.subr.mxu0 0.0
      %3139 = vmatpush1.msra.mxu0 %v2991
      %3140 = vmatprep.subr.mxu0 0.0
      %3141 = vmatpush1.msra.mxu0 %v2994
      %3142 = vmatprep.subr.mxu0 0.0
      %3143 = vmatpush1.msra.mxu0 %v2997
      %3144 = vmatprep.subr.mxu0 0.0
      %3145 = vmatpush1.msra.mxu0 %v3000
      %3146 = vmatprep.subr.mxu0 0.0
      %3147 = vmatpush1.msra.mxu0 %v3003
      %3148 = vmatprep.subr.mxu0 0.0
      %3149 = vmatpush1.msra.mxu0 0.0
      %3150 = vmatprep.subr.mxu0 0.0
      %3151 = vmatpush1.msra.mxu0 0.0
      %3152 = vmatprep.subr.mxu0 0.0
      %3153 = vmatpush1.msra.mxu0 0.0
      %3154 = vmatprep.subr.mxu0 0.0
      %3155 = vmatpush1.msra.mxu0 0.0
      %3156 = vmatprep.subr.mxu0 0.0
      %3157 = vmatpush1.msra.mxu0 0.0
      %3158 = vmatprep.subr.mxu0 0.0
      %3159 = vmatpush1.msra.mxu0 0.0
      %3160 = vmatprep.subr.mxu0 0.0
      %3161 = vmatpush1.msra.mxu0 0.0
      %3162 = vmatprep.mubr.f32.mxu0 %v3025
      %3163 = vmatmul.mubr.f32.gmra.mrb[0].mxu0 %v3019
      %v3164 = vpop.f32.mrb[0].mxu0
      %v3165 = vadd.f32 %v3014, %v3164
      %v3166 = vpop.f32.mrb[0].mxu0
      %3167 = vdwg.mxu0
      %v3171 = vcombine.low %v3094, %v3096
      %v3173 = vunpack.c.l.s4 1966171168
      %v3174 = vunpack.c.0.s8 %v3173
      %v3175 = vlaneseq
      %v3176 = vshrl.u32 %v3175, 7
      %v3177 = vsub.s32 %v3174, %v3176
      %v3178 = vrot.slane %v3171, %v3177
      %v3180 = vunpack.c.l.s4 1966171168
      %v3181 = vunpack.c.0.s8 %v3180
      %v3182 = vlaneseq
      %v3183 = vshrl.u32 %v3182, 7
      %v3184 = vsub.s32 %v3181, %v3183
      %v3185 = vrot.slane %v3165, %v3184
      %v3186 = vcombine.low %v3178, %v3185
      %v3188 = vunpack.c.l.s4 1966171168
      %v3189 = vunpack.c.0.s8 %v3188
      %v3190 = vlaneseq
      %v3191 = vshrl.u32 %v3190, 7
      %v3192 = vsub.s32 %v3189, %v3191
      %v3193 = vrot.slane %v3186, %v3192
      %3195 = vst.msk [vmem:[%s302] sm:$0x7] %vm319, %v3193
      %p3196 = scmp.lt.s32.totalorder %s21, 1
      %s3197 = scalar_select %p3196, %s21, 1
      %s3198 = smul.addr %s3197, 3
      %s3199 = scalar_lea.vmem %s8, %s3198
      // Predicated region
      $region53: #{srcnn_forward.1} parent=51 // pred_check
        %p3200 = pneg %p212
      $region54: #{srcnn_forward.1} parent=51 // pred_check_branch
        %3202 = sbr.rel (%p3200) target = $region56
      $region55: #{srcnn_forward.1} parent=51 // pred_region
        _
      $region56: #{srcnn_forward.1} parent=51 // pred_fallthru
        _
    $region52: #{srcnn_forward.1} parent=5 // pred_fallthru
      _
    %p3203 = scmp.le.s32.totalorder 2, %s16
    // Predicated region
    $region57: #{srcnn_forward.1} parent=5 // pred_check
      %p3204 = pneg %p3203
    $region58: #{srcnn_forward.1} parent=5 // pred_check_branch
      %3206 = sbr.rel (%p3204) target = $region60
    $region59: #{srcnn_forward.1} parent=5 // pred_region
      %s3207 = ssub.s32 %s16, 2
      // Predicated region
      $region61: #{srcnn_forward.1} parent=59 // pred_check
        %p3208 = pneg %p218
      $region62: #{srcnn_forward.1} parent=59 // pred_check_branch
        %3210 = sbr.rel (%p3208) target = $region64
      $region63: #{srcnn_forward.1} parent=59 // pred_region
        %p3211 = scmp.lt.s32.totalorder %s22, 1
        %s3212 = scalar_select %p3211, %s22, 1
        %s3213 = smul.addr %s3212, 3
        %s3214 = scalar_lea.vmem %s8, %s3213
      $region64: #{srcnn_forward.1} parent=59 // pred_fallthru
        _
    $region60: #{srcnn_forward.1} parent=5 // pred_fallthru
      _
  $region6: #{srcnn_forward.1} parent=0 // loop_footer
    %s20 = sadd.s32 1, %s16
  $region7: #{srcnn_forward.1} parent=0 // loop_footer_branch
    %15 = sbr.rel target = $region3
  $region8: #{srcnn_forward.1} parent=0 // loop_exit
    _

</llo_original>
